<compile_context>
chip_gen: v7x
topology: tpu7x:2x2x1
jax: 0.10.0
libtpu: 0.0.40
codegen_flags: <defaults>
</compile_context>

<pallas_src>
import functools

import jax
import jax.numpy as jnp
from jax import lax
from jax.experimental import pallas as pl
from jax.experimental.pallas import tpu as pltpu

_UNROLL = 8  # partial unroll of the in-kernel time loop (review: 4-8 sweet spot)


def _sigmoid(x):
    # sigmoid(x) == 0.5 * tanh(0.5 * x) + 0.5 : one EUP op instead of exp+recip
    return 0.5 * jnp.tanh(0.5 * x) + 0.5


# ----------------------------------------------------------------------------
# Pallas kernel: one time-chunk, both LSTM directions interleaved.
# ----------------------------------------------------------------------------
def _lstm_chunk_kernel(len_pref, lens_ref, whh_ref, *refs, unroll):
    """len_pref : (B,)  int32 lengths (sorted desc) in SMEM (scalar prefetch)
       lens_ref : (B,1) int32 lengths in VMEM (for the vector mask)
       whh_ref  : (nd, H, 4H)  W_hh^T per direction (bf16 for the MXU)
       refs     : gx refs (nd)  each (ct, B, 4H)   forward: chunk c,
                                                   backward: chunk n-1-c
                  y refs  (nd)  each (ct, B, H)    per-step hidden outputs
                  h_ref, c_ref  (nd, B, H) f32     final state; the blocks are
                  resident across the chunk axis and double as the recurrent
                  carry (no extra scratch)."""
    nd, H, _ = whh_ref.shape
    gx_refs = refs[:nd]
    y_refs = refs[nd:2 * nd]
    h_ref, c_ref = refs[2 * nd], refs[2 * nd + 1]
    ct = gx_refs[0].shape[0]

    c_idx = pl.program_id(0)
    n_chunks = pl.num_programs(0)
    max_len = len_pref[0]                 # lengths sorted descending
    lens = lens_ref[...]                  # (B, 1) int32

    @pl.when(c_idx == 0)
    def _():
        # hidden=None in the PyTorch forward -> zero initial state
        h_ref[...] = jnp.zeros_like(h_ref)
        c_ref[...] = jnp.zeros_like(c_ref)

    # Global start time of each direction's chunk at this grid step: forward
    # walks chunks 0..n-1, backward walks n-1..0 (must match the index_maps).
    t_base = [c_idx * ct, (n_chunks - 1 - c_idx) * ct][:nd]

    # Skip chunks that are fully past the longest sequence (serial matmuls
    # there are entirely masked away); per-direction masking handles the rest.
    active = t_base[0] < max_len
    for d in range(1, nd):
        active = jnp.logical_or(active, t_base[d] < max_len)

    @pl.when(active)
    def _():
        def step(s, carry):
            # within-chunk position: forward scans 0..ct-1, backward ct-1..0
            s_loc = [s if d == 0 else ct - 1 - s for d in range(nd)]
            h_prev = [h_ref[d] for d in range(nd)]
            c_prev = [c_ref[d] for d in range(nd)]
            # Both directions' recurrence matmuls are issued back-to-back so
            # the second hides the first's MXU drain (single-TC v5e/v6e).
            # W_hh is streamed from VMEM per matmul (no whole-weight hoist),
            # bf16 operands with f32 accumulation.
            gates = [
                gx_refs[d][s_loc[d]].astype(jnp.float32)
                + jnp.dot(h_prev[d].astype(whh_ref.dtype), whh_ref[d],
                          preferred_element_type=jnp.float32)
                for d in range(nd)
            ]
            for d in range(nd):
                g = gates[d]
                # PyTorch gate order: i, f, g, o (lane-aligned when H%128==0).
                i_g = _sigmoid(g[:, 0 * H:1 * H])
                f_g = _sigmoid(g[:, 1 * H:2 * H])
                g_g = jnp.tanh(g[:, 2 * H:3 * H])
                o_g = _sigmoid(g[:, 3 * H:4 * H])
                c_new = f_g * c_prev[d] + i_g * g_g
                h_new = o_g * jnp.tanh(c_new)
                # packed-sequence semantics: freeze state / zero output past
                # this batch element's length.
                valid = (t_base[d] + s_loc[d]) < lens       # (B, 1) bool
                h_ref[d] = jnp.where(valid, h_new, h_prev[d])
                c_ref[d] = jnp.where(valid, c_new, c_prev[d])
                y_refs[d][s_loc[d]] = jnp.where(valid, h_new, 0.0)
            return carry

        lax.fori_loop(0, ct, step, 0, unroll=unroll)

    @pl.when(jnp.logical_not(active))
    def _():
        for d in range(nd):
            y_refs[d][...] = jnp.zeros_like(y_refs[d])


# ----------------------------------------------------------------------------
# Hoisted input projection (concat folded into per-stream GEMMs).
# ----------------------------------------------------------------------------
def _gates_x(xs, w_ih, bias, mxu_dtype):
    """concat(xs, -1) @ w_ih.T + bias without materializing the concat."""
    T, B = xs[0].shape[:2]
    h4 = w_ih.shape[0]
    acc = None
    off = 0
    for xi in xs:
        fi = xi.shape[-1]
        w_part = w_ih[:, off:off + fi].T.astype(mxu_dtype)       # (fi, 4H)
        term = jnp.dot(xi.reshape(T * B, fi).astype(mxu_dtype), w_part,
                       precision=lax.Precision.HIGHEST,
                       preferred_element_type=jnp.float32)
        acc = term if acc is None else acc + term
        off += fi
    return (acc + bias.astype(jnp.float32)).reshape(T, B, h4)


# ----------------------------------------------------------------------------
# VMEM budgeting.
# ----------------------------------------------------------------------------
def _vmem_budget_bytes():
    """~70% of physical VMEM: raises the 16/32 MiB scoped defaults on
    v5e/v6e while staying inside v7x's 64 MiB."""
    try:
        cap = pltpu.get_tpu_info().vmem_capacity_bytes
    except Exception:
        cap = 64 * 1024 * 1024
    return int(cap * 0.7)


def _pick_time_chunk(requested, T, B, H, nd, mxu_bytes, budget):
    """Largest time chunk whose double-buffered blocks fit the VMEM budget."""
    # double-buffered gx (mxu dtype) + y (f32) blocks per direction, plus the
    # (nd,H,4H) weight block (x2 buffers) and the resident (nd,B,H) states.
    fixed = 2 * nd * H * 4 * H * mxu_bytes + 4 * nd * B * H * 4 + 4 * B
    per_t = nd * (2 * B * 4 * H * mxu_bytes + 2 * B * H * 4)
    ct_cap = max(_UNROLL, (budget - fixed) // max(per_t, 1))
    tc = ct_cap if requested is None else min(requested, ct_cap)
    return max(_UNROLL, min(int(tc), max(T, _UNROLL)))


# ----------------------------------------------------------------------------
# Layer wrapper: hoisted GEMMs + one interleaved-direction pallas_call.
# ----------------------------------------------------------------------------
def lstm_layer(xs, lengths, lens2d, dir_weights, *, time_chunk=None,
               mxu_dtype=jnp.bfloat16):
    """xs: list of input streams (T, B, F_i) f32 (1 stream, or 2 when the
       previous layer was bidirectional -- the concat is folded in here).
       dir_weights: list (len 1 or 2) of (w_ih (4H,F), w_hh (4H,H), b_ih, b_hh)
       returns ys (list of (T,B,H) per direction), h_last, c_last (nd,B,H)."""
    T, B = xs[0].shape[:2]
    H = dir_weights[0][1].shape[1]
    nd = len(dir_weights)
    mxu_bytes = jnp.dtype(mxu_dtype).itemsize

    # Hoisted input projection, one GEMM per (direction, input stream); gx is
    # stored in the MXU dtype (bf16) to halve the dominant HBM/DMA stream.
    gx = [_gates_x(xs, w_ih, b_ih + b_hh, mxu_dtype).astype(mxu_dtype)
          for (w_ih, _, b_ih, b_hh) in dir_weights]                # (T,B,4H)
    whh = jnp.stack([w_hh.T for (_, w_hh, _, _) in dir_weights],
                    axis=0).astype(mxu_dtype)                      # (nd,H,4H)

    vmem_budget = _vmem_budget_bytes()
    tc = _pick_time_chunk(time_chunk, T, B, H, nd, mxu_bytes, vmem_budget)
    n_chunks = pl.cdiv(T, tc)
    ct = pl.cdiv(T, n_chunks)
    ct = ((ct + _UNROLL - 1) // _UNROLL) * _UNROLL   # multiple of the unroll
    n_chunks = pl.cdiv(T, ct)
    t_pad = n_chunks * ct
    if t_pad != T:
        gx = [jnp.pad(g, ((0, t_pad - T), (0, 0), (0, 0))) for g in gx]

    in_specs = [
        pl.BlockSpec((B, 1), lambda c, lp: (0, 0)),                 # lengths
        pl.BlockSpec((nd, H, 4 * H), lambda c, lp: (0, 0, 0)),      # W_hh^T
        pl.BlockSpec((ct, B, 4 * H), lambda c, lp: (c, 0, 0)),      # gx fwd
    ]
    out_specs = [pl.BlockSpec((ct, B, H), lambda c, lp: (c, 0, 0))]  # y fwd
    if nd == 2:
        in_specs.append(pl.BlockSpec((ct, B, 4 * H),
                                     lambda c, lp: (n_chunks - 1 - c, 0, 0)))
        out_specs.append(pl.BlockSpec((ct, B, H),
                                      lambda c, lp: (n_chunks - 1 - c, 0, 0)))
    out_specs += [pl.BlockSpec((nd, B, H), lambda c, lp: (0, 0, 0)),  # h
                  pl.BlockSpec((nd, B, H), lambda c, lp: (0, 0, 0))]  # c

    out_shape = tuple([jax.ShapeDtypeStruct((t_pad, B, H), jnp.float32)] * nd
                      + [jax.ShapeDtypeStruct((nd, B, H), jnp.float32)] * 2)

    grid_spec = pltpu.PrefetchScalarGridSpec(
        num_scalar_prefetch=1,              # lengths -> SMEM (chunk skipping)
        grid=(n_chunks,),
        in_specs=in_specs,
        out_specs=tuple(out_specs),
    )

    outs = pl.pallas_call(
        functools.partial(_lstm_chunk_kernel, unroll=_UNROLL),
        grid_spec=grid_spec,
        out_shape=out_shape,
        compiler_params=pltpu.CompilerParams(
            # single grid axis carries the recurrent state -> "arbitrary"
            dimension_semantics=("arbitrary",),
            vmem_limit_bytes=vmem_budget),
    )(lengths, lens2d, whh, *gx)

    ys = [o[:T] if t_pad != T else o for o in outs[:nd]]
    return ys, outs[nd], outs[nd + 1]


# ----------------------------------------------------------------------------
# Encoder forward (eval mode).
# ----------------------------------------------------------------------------
def encoder_forward(params, x, lengths, *, num_layers, bidirectional,
                    time_chunk=None, mxu_dtype=jnp.bfloat16):
    """x: (T, B) int32 token ids; lengths: (B,) int32 sorted descending.
    returns (output, (h, c)):
      output: (T, B, num_directions * H)
      h, c:   (num_layers, B, H) (forward direction only when bidirectional,
                                  matching get_forward_op)."""
    embed_x = params["embed"][x].astype(jnp.float32)              # (T, B, E)
    T, B, _ = embed_x.shape
    lengths = lengths.astype(jnp.int32)
    lens2d = lengths.reshape(B, 1)

    xs = [embed_x]
    h_list, c_list = [], []
    for l in range(num_layers):
        lp = params["lstm"][l]
        dir_w = [lp["fwd"]] + ([lp["bwd"]] if bidirectional else [])
        ys, h_last, c_last = lstm_layer(xs, lengths, lens2d, dir_w,
                                        time_chunk=time_chunk,
                                        mxu_dtype=mxu_dtype)
        h_list.append(h_last[0])            # forward direction (get_forward_op)
        c_list.append(c_last[0])
        # Keep the direction streams separate: the bidirectional concat is
        # folded into the next layer's input GEMM instead of being
        # materialized in HBM.
        xs = ys
    output = jnp.concatenate(xs, axis=-1) if len(xs) == 2 else xs[0]
    hidden = (jnp.stack(h_list, axis=0), jnp.stack(c_list, axis=0))
    return output, hidden


# ----------------------------------------------------------------------------
# Deterministic parameter construction (shapes per nn.Embedding / nn.LSTM).
# ----------------------------------------------------------------------------
def init_params(key, *, num_embeddings, embed_size, hidden_size,
                num_layers, bidirectional):
    num_dir = 2 if bidirectional else 1
    k_embed, key = jax.random.split(key)
    params = {
        "embed": jax.random.normal(
            k_embed, (num_embeddings, embed_size), jnp.float32),
        "lstm": [],
    }
    bound = 1.0 / jnp.sqrt(hidden_size)
    for l in range(num_layers):
        in_size = embed_size if l == 0 else num_dir * hidden_size
        layer = {}
        for d, name in enumerate(["fwd", "bwd"][:num_dir]):
            ks = jax.random.split(jax.random.fold_in(key, l * 2 + d), 4)
            w_ih = jax.random.uniform(ks[0], (4 * hidden_size, in_size),
                                      jnp.float32, -bound, bound)
            w_hh = jax.random.uniform(ks[1], (4 * hidden_size, hidden_size),
                                      jnp.float32, -bound, bound)
            b_ih = jax.random.uniform(ks[2], (4 * hidden_size,),
                                      jnp.float32, -bound, bound)
            b_hh = jax.random.uniform(ks[3], (4 * hidden_size,),
                                      jnp.float32, -bound, bound)
            layer[name] = (w_ih, w_hh, b_ih, b_hh)
        params["lstm"].append(layer)
    return params


# ----------------------------------------------------------------------------
# Pure-JAX reference (independent reverse-gather formulation) for validation.
# ----------------------------------------------------------------------------
def _reverse_padded(x, lengths):
    T = x.shape[0]
    t = jnp.arange(T)[:, None]
    idx = jnp.clip(lengths[None, :] - 1 - t, 0, T - 1)
    return jnp.take_along_axis(x, idx[:, :, None], axis=0)


def _ref_lstm_dir(x_seq, mask, w_ih, w_hh, b_ih, b_hh):
    B = x_seq.shape[1]
    H = w_hh.shape[1]
    hi = lax.Precision.HIGHEST

    def step(carry, inp):
        h, c = carry
        x_t, m_t = inp
        gates = (jnp.dot(x_t, w_ih.T, precision=hi)
                 + jnp.dot(h, w_hh.T, precision=hi) + (b_ih + b_hh))
        i = jax.nn.sigmoid(gates[:, :H])
        f = jax.nn.sigmoid(gates[:, H:2 * H])
        g = jnp.tanh(gates[:, 2 * H:3 * H])
        o = jax.nn.sigmoid(gates[:, 3 * H:])
        c_new = f * c + i * g
        h_new = o * jnp.tanh(c_new)
        h2 = m_t * h_new + (1.0 - m_t) * h
        c2 = m_t * c_new + (1.0 - m_t) * c
        return (h2, c2), m_t * h_new

    init = (jnp.zeros((B, H), jnp.float32), jnp.zeros((B, H), jnp.float32))
    (h_f, c_f), ys = lax.scan(step, init, (x_seq, mask))
    return ys, h_f, c_f


def encoder_reference(params, x, lengths, *, num_layers, bidirectional):
    embed_x = params["embed"][x]
    T = embed_x.shape[0]
    mask = (jnp.arange(T)[:, None] < lengths[None, :]).astype(jnp.float32)
    mask = mask[:, :, None]
    layer_in = embed_x
    h_list, c_list = [], []
    for l in range(num_layers):
        lp = params["lstm"][l]
        y_f, h_f, c_f = _ref_lstm_dir(layer_in, mask, *lp["fwd"])
        if bidirectional:
            x_rev = _reverse_padded(layer_in, lengths)
            y_r, _, _ = _ref_lstm_dir(x_rev, mask, *lp["bwd"])
            y_b = _reverse_padded(y_r, lengths) * mask
            layer_out = jnp.concatenate([y_f, y_b], axis=-1)
        else:
            layer_out = y_f
        h_list.append(h_f)
        c_list.append(c_f)
        layer_in = layer_out
    return layer_in, (jnp.stack(h_list, 0), jnp.stack(c_list, 0))


if __name__ == "__main__":
    opt = dict(num_embeddings=50, embed_size=32, hidden_size=32,
               num_layers=2, dropout_rate=0.0, bidirectional=True)

    key = jax.random.PRNGKey(0)
    k_params, k_tok_a, k_tok_b = jax.random.split(key, 3)
    params = init_params(
        k_params,
        num_embeddings=opt["num_embeddings"],
        embed_size=opt["embed_size"],
        hidden_size=opt["hidden_size"],
        num_layers=opt["num_layers"],
        bidirectional=opt["bidirectional"],
    )

    def run_case(tokens, lengths, *, time_chunk, mxu_dtype, tol):
        fwd = functools.partial(encoder_forward,
                                num_layers=opt["num_layers"],
                                bidirectional=opt["bidirectional"],
                                time_chunk=time_chunk, mxu_dtype=mxu_dtype)
        out, (h, c) = jax.jit(fwd)(params, tokens, lengths)
        jax.block_until_ready((out, h, c))
        T, B = tokens.shape
        assert out.shape == (T, B, 2 * opt["hidden_size"])
        assert h.shape == (opt["num_layers"], B, opt["hidden_size"])
        assert c.shape == (opt["num_layers"], B, opt["hidden_size"])

        ref = functools.partial(encoder_reference,
                                num_layers=opt["num_layers"],
                                bidirectional=opt["bidirectional"])
        r_out, (r_h, r_c) = jax.jit(ref)(params, tokens, lengths)
        err = float(jnp.max(jnp.abs(out - r_out)))
        assert jnp.allclose(out, r_out, atol=tol, rtol=tol), err
        assert jnp.allclose(h, r_h, atol=tol, rtol=tol)
        assert jnp.allclose(c, r_c, atol=tol, rtol=tol)

    # Case A: single time chunk, ragged lengths.  Checked once with f32 MXU
    # operands (tight) and once with the bf16 fast path (looser tolerance:
    # bf16 operand rounding vs the HIGHEST-precision f32 reference).
    T, B = 8, 2
    x_a = jax.random.randint(k_tok_a, (T, B), 0, opt["num_embeddings"],
                             dtype=jnp.int32)
    len_a = jnp.array([T, 5], dtype=jnp.int32)   # sorted descending
    run_case(x_a, len_a, time_chunk=None, mxu_dtype=jnp.float32, tol=1e-2)
    run_case(x_a, len_a, time_chunk=None, mxu_dtype=jnp.bfloat16, tol=5e-2)

    # Case B: multiple time chunks (forward 0..n-1 / backward n-1..0),
    # T padded to the chunk multiple, and fully-padded-chunk skipping
    # (lengths << T so middle chunks are skipped for both directions).
    T, B = 20, 2
    x_b = jax.random.randint(k_tok_b, (T, B), 0, opt["num_embeddings"],
                             dtype=jnp.int32)
    len_b = jnp.array([7, 3], dtype=jnp.int32)
    run_case(x_b, len_b, time_chunk=8, mxu_dtype=jnp.bfloat16, tol=5e-2)

    print("KERNEL_OK")
</pallas_src>

<mosaic_0001>
module attributes {stable_mosaic.version = 11 : i64} {
  func.func @_lstm_chunk_kernel(%arg0: i32, %arg1: memref<2xi32, #tpu.memory_space<smem>>, %arg2: memref<2x1xi32, #tpu.memory_space<vmem>>, %arg3: memref<2x32x128xf32, #tpu.memory_space<vmem>>, %arg4: memref<8x2x128xf32, #tpu.memory_space<vmem>>, %arg5: memref<8x2x128xf32, #tpu.memory_space<vmem>>, %arg6: memref<8x2x32xf32, #tpu.memory_space<vmem>>, %arg7: memref<8x2x32xf32, #tpu.memory_space<vmem>>, %arg8: memref<2x2x32xf32, #tpu.memory_space<vmem>>, %arg9: memref<2x2x32xf32, #tpu.memory_space<vmem>>) attributes {dimension_semantics = [#tpu.dimension_semantics<arbitrary>], iteration_bounds = array<i64: 1>, scalar_prefetch = 1 : i64, scratch_operands = 0 : i64, tpu.core_type = #tpu.core_type<tc>, window_params = [{pipeline_mode = #tpu.pipeline_mode<synchronous>, transform_indices = @transform_0, window_bounds = array<i64: 2, 1>}, {pipeline_mode = #tpu.pipeline_mode<synchronous>, transform_indices = @transform_1, window_bounds = array<i64: 2, 32, 128>}, {transform_indices = @transform_2, window_bounds = array<i64: 8, 2, 128>}, {transform_indices = @transform_3, window_bounds = array<i64: 8, 2, 128>}, {transform_indices = @transform_4, window_bounds = array<i64: 8, 2, 32>}, {transform_indices = @transform_5, window_bounds = array<i64: 8, 2, 32>}, {pipeline_mode = #tpu.pipeline_mode<synchronous>, transform_indices = @transform_6, window_bounds = array<i64: 2, 2, 32>}, {pipeline_mode = #tpu.pipeline_mode<synchronous>, transform_indices = @transform_7, window_bounds = array<i64: 2, 2, 32>}]} {
    %c0 = arith.constant 0 : index
    %0 = memref.load %arg1[%c0] : memref<2xi32, #tpu.memory_space<smem>>
    %c0_0 = arith.constant 0 : index
    %c0_1 = arith.constant 0 : index
    %1 = vector.load %arg2[%c0_0, %c0_1] : memref<2x1xi32, #tpu.memory_space<vmem>>, vector<2x1xi32>
    %c0_i32 = arith.constant 0 : i32
    %2 = arith.cmpi eq, %arg0, %c0_i32 : i32
    %3 = arith.extui %2 : i1 to i32
    %c0_i32_2 = arith.constant 0 : i32
    %4 = arith.cmpi ne, %3, %c0_i32_2 : i32
    scf.if %4 {
      %cst = arith.constant 0.000000e+00 : f32
      %16 = vector.broadcast %cst : f32 to vector<2x2x32xf32>
      %c0_7 = arith.constant 0 : index
      %c0_8 = arith.constant 0 : index
      %c0_9 = arith.constant 0 : index
      %17 = vector.load %arg8[%c0_7, %c0_8, %c0_9] : memref<2x2x32xf32, #tpu.memory_space<vmem>>, vector<2x2x32xf32>
      tpu.vector_store %arg8[%c0_7, %c0_8, %c0_9], %16 {strides = array<i32>} : memref<2x2x32xf32, #tpu.memory_space<vmem>>, vector<2x2x32xf32>,
      %cst_10 = arith.constant 0.000000e+00 : f32
      %18 = vector.broadcast %cst_10 : f32 to vector<2x2x32xf32>
      %c0_11 = arith.constant 0 : index
      %c0_12 = arith.constant 0 : index
      %c0_13 = arith.constant 0 : index
      %19 = vector.load %arg9[%c0_11, %c0_12, %c0_13] : memref<2x2x32xf32, #tpu.memory_space<vmem>>, vector<2x2x32xf32>
      tpu.vector_store %arg9[%c0_11, %c0_12, %c0_13], %18 {strides = array<i32>} : memref<2x2x32xf32, #tpu.memory_space<vmem>>, vector<2x2x32xf32>,
    } else {
    }
    %c8_i32 = arith.constant 8 : i32
    %5 = arith.muli %arg0, %c8_i32 : i32
    %c0_i32_3 = arith.constant 0 : i32
    %6 = arith.subi %c0_i32_3, %arg0 : i32
    %c8_i32_4 = arith.constant 8 : i32
    %7 = arith.muli %6, %c8_i32_4 : i32
    %8 = arith.cmpi slt, %5, %0 : i32
    %9 = arith.cmpi slt, %7, %0 : i32
    %10 = arith.ori %8, %9 : i1
    %11 = arith.extui %10 : i1 to i32
    %c0_i32_5 = arith.constant 0 : i32
    %12 = arith.cmpi ne, %11, %c0_i32_5 : i32
    scf.if %12 {
      %c0_i32_7 = arith.constant 0 : i32
      %c7_i32 = arith.constant 7 : i32
      %16 = arith.subi %c7_i32, %c0_i32_7 : i32
      %c0_8 = arith.constant 0 : index
      %c0_9 = arith.constant 0 : index
      %c0_10 = arith.constant 0 : index
      %17 = vector.load %arg8[%c0_8, %c0_9, %c0_10] : memref<2x2x32xf32, #tpu.memory_space<vmem>>, vector<1x2x32xf32>
      %18 = vector.shape_cast %17 : vector<1x2x32xf32> to vector<2x32xf32>
      %c1 = arith.constant 1 : index
      %c0_11 = arith.constant 0 : index
      %c0_12 = arith.constant 0 : index
      %19 = vector.load %arg8[%c1, %c0_11, %c0_12] : memref<2x2x32xf32, #tpu.memory_space<vmem>>, vector<1x2x32xf32>
      %20 = vector.shape_cast %19 : vector<1x2x32xf32> to vector<2x32xf32>
      %c0_13 = arith.constant 0 : index
      %c0_14 = arith.constant 0 : index
      %c0_15 = arith.constant 0 : index
      %21 = vector.load %arg9[%c0_13, %c0_14, %c0_15] : memref<2x2x32xf32, #tpu.memory_space<vmem>>, vector<1x2x32xf32>
      %22 = vector.shape_cast %21 : vector<1x2x32xf32> to vector<2x32xf32>
      %c1_16 = arith.constant 1 : index
      %c0_17 = arith.constant 0 : index
      %c0_18 = arith.constant 0 : index
      %23 = vector.load %arg9[%c1_16, %c0_17, %c0_18] : memref<2x2x32xf32, #tpu.memory_space<vmem>>, vector<1x2x32xf32>
      %24 = vector.shape_cast %23 : vector<1x2x32xf32> to vector<2x32xf32>
      %25 = arith.index_cast %c0_i32_7 : i32 to index
      %c0_19 = arith.constant 0 : index
      %c0_20 = arith.constant 0 : index
      %26 = vector.load %arg4[%25, %c0_19, %c0_20] : memref<8x2x128xf32, #tpu.memory_space<vmem>>, vector<1x2x128xf32>
      %27 = vector.shape_cast %26 : vector<1x2x128xf32> to vector<2x128xf32>
      %c0_21 = arith.constant 0 : index
      %c0_22 = arith.constant 0 : index
      %c0_23 = arith.constant 0 : index
      %28 = vector.load %arg3[%c0_21, %c0_22, %c0_23] : memref<2x32x128xf32, #tpu.memory_space<vmem>>, vector<1x32x128xf32>
      %29 = vector.shape_cast %28 : vector<1x32x128xf32> to vector<32x128xf32>
      %cst = arith.constant dense<0.000000e+00> : vector<2x128xf32>
      %30 = tpu.matmul %18, %29, %cst {dimension_numbers = #tpu.dot_dimension_numbers<[1], [0], [0], [1], [0, 0, 1, 1], [], []>} : vector<2x32xf32>, vector<32x128xf32>, vector<2x128xf32> -> vector<2x128xf32>
      %31 = arith.addf %27, %30 : vector<2x128xf32>
      %32 = arith.index_cast %16 : i32 to index
      %c0_24 = arith.constant 0 : index
      %c0_25 = arith.constant 0 : index
      %33 = vector.load %arg5[%32, %c0_24, %c0_25] : memref<8x2x128xf32, #tpu.memory_space<vmem>>, vector<1x2x128xf32>
      %34 = vector.shape_cast %33 : vector<1x2x128xf32> to vector<2x128xf32>
      %c1_26 = arith.constant 1 : index
      %c0_27 = arith.constant 0 : index
      %c0_28 = arith.constant 0 : index
      %35 = vector.load %arg3[%c1_26, %c0_27, %c0_28] : memref<2x32x128xf32, #tpu.memory_space<vmem>>, vector<1x32x128xf32>
      %36 = vector.shape_cast %35 : vector<1x32x128xf32> to vector<32x128xf32>
      %cst_29 = arith.constant dense<0.000000e+00> : vector<2x128xf32>
      %37 = tpu.matmul %20, %36, %cst_29 {dimension_numbers = #tpu.dot_dimension_numbers<[1], [0], [0], [1], [0, 0, 1, 1], [], []>} : vector<2x32xf32>, vector<32x128xf32>, vector<2x128xf32> -> vector<2x128xf32>
      %38 = arith.addf %34, %37 : vector<2x128xf32>
      %39 = vector.extract_strided_slice %31 {offsets = [0, 0], sizes = [2, 32], strides = [1, 1]} : vector<2x128xf32> to vector<2x32xf32>
      %cst_30 = arith.constant 5.000000e-01 : f32
      %40 = vector.broadcast %cst_30 : f32 to vector<2x32xf32>
      %41 = arith.mulf %40, %39 : vector<2x32xf32>
      %42 = math.tanh %41 : vector<2x32xf32>
      %cst_31 = arith.constant 5.000000e-01 : f32
      %43 = vector.broadcast %cst_31 : f32 to vector<2x32xf32>
      %44 = arith.mulf %43, %42 : vector<2x32xf32>
      %cst_32 = arith.constant 5.000000e-01 : f32
      %45 = vector.broadcast %cst_32 : f32 to vector<2x32xf32>
      %46 = arith.addf %44, %45 : vector<2x32xf32>
      %47 = vector.extract_strided_slice %31 {offsets = [0, 32], sizes = [2, 32], strides = [1, 1]} : vector<2x128xf32> to vector<2x32xf32>
      %cst_33 = arith.constant 5.000000e-01 : f32
      %48 = vector.broadcast %cst_33 : f32 to vector<2x32xf32>
      %49 = arith.mulf %48, %47 : vector<2x32xf32>
      %50 = math.tanh %49 : vector<2x32xf32>
      %cst_34 = arith.constant 5.000000e-01 : f32
      %51 = vector.broadcast %cst_34 : f32 to vector<2x32xf32>
      %52 = arith.mulf %51, %50 : vector<2x32xf32>
      %cst_35 = arith.constant 5.000000e-01 : f32
      %53 = vector.broadcast %cst_35 : f32 to vector<2x32xf32>
      %54 = arith.addf %52, %53 : vector<2x32xf32>
      %55 = vector.extract_strided_slice %31 {offsets = [0, 64], sizes = [2, 32], strides = [1, 1]} : vector<2x128xf32> to vector<2x32xf32>
      %56 = math.tanh %55 : vector<2x32xf32>
      %57 = vector.extract_strided_slice %31 {offsets = [0, 96], sizes = [2, 32], strides = [1, 1]} : vector<2x128xf32> to vector<2x32xf32>
      %cst_36 = arith.constant 5.000000e-01 : f32
      %58 = vector.broadcast %cst_36 : f32 to vector<2x32xf32>
      %59 = arith.mulf %58, %57 : vector<2x32xf32>
      %60 = math.tanh %59 : vector<2x32xf32>
      %cst_37 = arith.constant 5.000000e-01 : f32
      %61 = vector.broadcast %cst_37 : f32 to vector<2x32xf32>
      %62 = arith.mulf %61, %60 : vector<2x32xf32>
      %cst_38 = arith.constant 5.000000e-01 : f32
      %63 = vector.broadcast %cst_38 : f32 to vector<2x32xf32>
      %64 = arith.addf %62, %63 : vector<2x32xf32>
      %65 = arith.mulf %54, %22 : vector<2x32xf32>
      %66 = arith.mulf %46, %56 : vector<2x32xf32>
      %67 = arith.addf %65, %66 : vector<2x32xf32>
      %68 = math.tanh %67 : vector<2x32xf32>
      %69 = arith.mulf %64, %68 : vector<2x32xf32>
      %70 = arith.addi %5, %c0_i32_7 : i32
      %71 = vector.broadcast %70 : i32 to vector<2x1xi32>
      %72 = arith.cmpi slt, %71, %1 : vector<2x1xi32>
      %73 = vector.shape_cast %72 : vector<2x1xi1> to vector<2x1xi1>
      %74 = vector.broadcast %73 : vector<2x1xi1> to vector<2x32xi1>
      %75 = arith.select %74, %69, %18 : vector<2x32xi1>, vector<2x32xf32>
      %c0_39 = arith.constant 0 : index
      %c0_40 = arith.constant 0 : index
      %c0_41 = arith.constant 0 : index
      %76 = vector.load %arg8[%c0_39, %c0_40, %c0_41] : memref<2x2x32xf32, #tpu.memory_space<vmem>>, vector<1x2x32xf32>
      %77 = vector.shape_cast %76 : vector<1x2x32xf32> to vector<2x32xf32>
      %78 = vector.shape_cast %75 : vector<2x32xf32> to vector<1x2x32xf32>
      tpu.vector_store %arg8[%c0_39, %c0_40, %c0_41], %78 {strides = array<i32>} : memref<2x2x32xf32, #tpu.memory_space<vmem>>, vector<1x2x32xf32>,
      %79 = vector.shape_cast %72 : vector<2x1xi1> to vector<2x1xi1>
      %80 = vector.broadcast %79 : vector<2x1xi1> to vector<2x32xi1>
      %81 = arith.select %80, %67, %22 : vector<2x32xi1>, vector<2x32xf32>
      %c0_42 = arith.constant 0 : index
      %c0_43 = arith.constant 0 : index
      %c0_44 = arith.constant 0 : index
      %82 = vector.load %arg9[%c0_42, %c0_43, %c0_44] : memref<2x2x32xf32, #tpu.memory_space<vmem>>, vector<1x2x32xf32>
      %83 = vector.shape_cast %82 : vector<1x2x32xf32> to vector<2x32xf32>
      %84 = vector.shape_cast %81 : vector<2x32xf32> to vector<1x2x32xf32>
      tpu.vector_store %arg9[%c0_42, %c0_43, %c0_44], %84 {strides = array<i32>} : memref<2x2x32xf32, #tpu.memory_space<vmem>>, vector<1x2x32xf32>,
      %cst_45 = arith.constant 0.000000e+00 : f32
      %85 = vector.shape_cast %72 : vector<2x1xi1> to vector<2x1xi1>
      %86 = vector.broadcast %85 : vector<2x1xi1> to vector<2x32xi1>
      %87 = vector.broadcast %cst_45 : f32 to vector<2x32xf32>
      %88 = arith.select %86, %69, %87 : vector<2x32xi1>, vector<2x32xf32>
      %89 = arith.index_cast %c0_i32_7 : i32 to index
      %c0_46 = arith.constant 0 : index
      %c0_47 = arith.constant 0 : index
      %90 = vector.load %arg6[%89, %c0_46, %c0_47] : memref<8x2x32xf32, #tpu.memory_space<vmem>>, vector<1x2x32xf32>
      %91 = vector.shape_cast %90 : vector<1x2x32xf32> to vector<2x32xf32>
      %92 = vector.shape_cast %88 : vector<2x32xf32> to vector<1x2x32xf32>
      tpu.vector_store %arg6[%89, %c0_46, %c0_47], %92 {strides = array<i32>} : memref<8x2x32xf32, #tpu.memory_space<vmem>>, vector<1x2x32xf32>,
      %93 = vector.extract_strided_slice %38 {offsets = [0, 0], sizes = [2, 32], strides = [1, 1]} : vector<2x128xf32> to vector<2x32xf32>
      %cst_48 = arith.constant 5.000000e-01 : f32
      %94 = vector.broadcast %cst_48 : f32 to vector<2x32xf32>
      %95 = arith.mulf %94, %93 : vector<2x32xf32>
      %96 = math.tanh %95 : vector<2x32xf32>
      %cst_49 = arith.constant 5.000000e-01 : f32
      %97 = vector.broadcast %cst_49 : f32 to vector<2x32xf32>
      %98 = arith.mulf %97, %96 : vector<2x32xf32>
      %cst_50 = arith.constant 5.000000e-01 : f32
      %99 = vector.broadcast %cst_50 : f32 to vector<2x32xf32>
      %100 = arith.addf %98, %99 : vector<2x32xf32>
      %101 = vector.extract_strided_slice %38 {offsets = [0, 32], sizes = [2, 32], strides = [1, 1]} : vector<2x128xf32> to vector<2x32xf32>
      %cst_51 = arith.constant 5.000000e-01 : f32
      %102 = vector.broadcast %cst_51 : f32 to vector<2x32xf32>
      %103 = arith.mulf %102, %101 : vector<2x32xf32>
      %104 = math.tanh %103 : vector<2x32xf32>
      %cst_52 = arith.constant 5.000000e-01 : f32
      %105 = vector.broadcast %cst_52 : f32 to vector<2x32xf32>
      %106 = arith.mulf %105, %104 : vector<2x32xf32>
      %cst_53 = arith.constant 5.000000e-01 : f32
      %107 = vector.broadcast %cst_53 : f32 to vector<2x32xf32>
      %108 = arith.addf %106, %107 : vector<2x32xf32>
      %109 = vector.extract_strided_slice %38 {offsets = [0, 64], sizes = [2, 32], strides = [1, 1]} : vector<2x128xf32> to vector<2x32xf32>
      %110 = math.tanh %109 : vector<2x32xf32>
      %111 = vector.extract_strided_slice %38 {offsets = [0, 96], sizes = [2, 32], strides = [1, 1]} : vector<2x128xf32> to vector<2x32xf32>
      %cst_54 = arith.constant 5.000000e-01 : f32
      %112 = vector.broadcast %cst_54 : f32 to vector<2x32xf32>
      %113 = arith.mulf %112, %111 : vector<2x32xf32>
      %114 = math.tanh %113 : vector<2x32xf32>
      %cst_55 = arith.constant 5.000000e-01 : f32
      %115 = vector.broadcast %cst_55 : f32 to vector<2x32xf32>
      %116 = arith.mulf %115, %114 : vector<2x32xf32>
      %cst_56 = arith.constant 5.000000e-01 : f32
      %117 = vector.broadcast %cst_56 : f32 to vector<2x32xf32>
      %118 = arith.addf %116, %117 : vector<2x32xf32>
      %119 = arith.mulf %108, %24 : vector<2x32xf32>
      %120 = arith.mulf %100, %110 : vector<2x32xf32>
      %121 = arith.addf %119, %120 : vector<2x32xf32>
      %122 = math.tanh %121 : vector<2x32xf32>
      %123 = arith.mulf %118, %122 : vector<2x32xf32>
      %124 = arith.addi %7, %16 : i32
      %125 = vector.broadcast %124 : i32 to vector<2x1xi32>
      %126 = arith.cmpi slt, %125, %1 : vector<2x1xi32>
      %127 = vector.shape_cast %126 : vector<2x1xi1> to vector<2x1xi1>
      %128 = vector.broadcast %127 : vector<2x1xi1> to vector<2x32xi1>
      %129 = arith.select %128, %123, %20 : vector<2x32xi1>, vector<2x32xf32>
      %c1_57 = arith.constant 1 : index
      %c0_58 = arith.constant 0 : index
      %c0_59 = arith.constant 0 : index
      %130 = vector.load %arg8[%c1_57, %c0_58, %c0_59] : memref<2x2x32xf32, #tpu.memory_space<vmem>>, vector<1x2x32xf32>
      %131 = vector.shape_cast %130 : vector<1x2x32xf32> to vector<2x32xf32>
      %132 = vector.shape_cast %129 : vector<2x32xf32> to vector<1x2x32xf32>
      tpu.vector_store %arg8[%c1_57, %c0_58, %c0_59], %132 {strides = array<i32>} : memref<2x2x32xf32, #tpu.memory_space<vmem>>, vector<1x2x32xf32>,
      %133 = vector.shape_cast %126 : vector<2x1xi1> to vector<2x1xi1>
      %134 = vector.broadcast %133 : vector<2x1xi1> to vector<2x32xi1>
      %135 = arith.select %134, %121, %24 : vector<2x32xi1>, vector<2x32xf32>
      %c1_60 = arith.constant 1 : index
      %c0_61 = arith.constant 0 : index
      %c0_62 = arith.constant 0 : index
      %136 = vector.load %arg9[%c1_60, %c0_61, %c0_62] : memref<2x2x32xf32, #tpu.memory_space<vmem>>, vector<1x2x32xf32>
      %137 = vector.shape_cast %136 : vector<1x2x32xf32> to vector<2x32xf32>
      %138 = vector.shape_cast %135 : vector<2x32xf32> to vector<1x2x32xf32>
      tpu.vector_store %arg9[%c1_60, %c0_61, %c0_62], %138 {strides = array<i32>} : memref<2x2x32xf32, #tpu.memory_space<vmem>>, vector<1x2x32xf32>,
      %cst_63 = arith.constant 0.000000e+00 : f32
      %139 = vector.shape_cast %126 : vector<2x1xi1> to vector<2x1xi1>
      %140 = vector.broadcast %139 : vector<2x1xi1> to vector<2x32xi1>
      %141 = vector.broadcast %cst_63 : f32 to vector<2x32xf32>
      %142 = arith.select %140, %123, %141 : vector<2x32xi1>, vector<2x32xf32>
      %143 = arith.index_cast %16 : i32 to index
      %c0_64 = arith.constant 0 : index
      %c0_65 = arith.constant 0 : index
      %144 = vector.load %arg7[%143, %c0_64, %c0_65] : memref<8x2x32xf32, #tpu.memory_space<vmem>>, vector<1x2x32xf32>
      %145 = vector.shape_cast %144 : vector<1x2x32xf32> to vector<2x32xf32>
      %146 = vector.shape_cast %142 : vector<2x32xf32> to vector<1x2x32xf32>
      tpu.vector_store %arg7[%143, %c0_64, %c0_65], %146 {strides = array<i32>} : memref<8x2x32xf32, #tpu.memory_space<vmem>>, vector<1x2x32xf32>,
      %c1_i32 = arith.constant 1 : i32
      %c7_i32_66 = arith.constant 7 : i32
      %147 = arith.subi %c7_i32_66, %c1_i32 : i32
      %c0_67 = arith.constant 0 : index
      %c0_68 = arith.constant 0 : index
      %c0_69 = arith.constant 0 : index
      %148 = vector.load %arg8[%c0_67, %c0_68, %c0_69] : memref<2x2x32xf32, #tpu.memory_space<vmem>>, vector<1x2x32xf32>
      %149 = vector.shape_cast %148 : vector<1x2x32xf32> to vector<2x32xf32>
      %c1_70 = arith.constant 1 : index
      %c0_71 = arith.constant 0 : index
      %c0_72 = arith.constant 0 : index
      %150 = vector.load %arg8[%c1_70, %c0_71, %c0_72] : memref<2x2x32xf32, #tpu.memory_space<vmem>>, vector<1x2x32xf32>
      %151 = vector.shape_cast %150 : vector<1x2x32xf32> to vector<2x32xf32>
      %c0_73 = arith.constant 0 : index
      %c0_74 = arith.constant 0 : index
      %c0_75 = arith.constant 0 : index
      %152 = vector.load %arg9[%c0_73, %c0_74, %c0_75] : memref<2x2x32xf32, #tpu.memory_space<vmem>>, vector<1x2x32xf32>
      %153 = vector.shape_cast %152 : vector<1x2x32xf32> to vector<2x32xf32>
      %c1_76 = arith.constant 1 : index
      %c0_77 = arith.constant 0 : index
      %c0_78 = arith.constant 0 : index
      %154 = vector.load %arg9[%c1_76, %c0_77, %c0_78] : memref<2x2x32xf32, #tpu.memory_space<vmem>>, vector<1x2x32xf32>
      %155 = vector.shape_cast %154 : vector<1x2x32xf32> to vector<2x32xf32>
      %156 = arith.index_cast %c1_i32 : i32 to index
      %c0_79 = arith.constant 0 : index
      %c0_80 = arith.constant 0 : index
      %157 = vector.load %arg4[%156, %c0_79, %c0_80] : memref<8x2x128xf32, #tpu.memory_space<vmem>>, vector<1x2x128xf32>
      %158 = vector.shape_cast %157 : vector<1x2x128xf32> to vector<2x128xf32>
      %c0_81 = arith.constant 0 : index
      %c0_82 = arith.constant 0 : index
      %c0_83 = arith.constant 0 : index
      %159 = vector.load %arg3[%c0_81, %c0_82, %c0_83] : memref<2x32x128xf32, #tpu.memory_space<vmem>>, vector<1x32x128xf32>
      %160 = vector.shape_cast %159 : vector<1x32x128xf32> to vector<32x128xf32>
      %cst_84 = arith.constant dense<0.000000e+00> : vector<2x128xf32>
      %161 = tpu.matmul %149, %160, %cst_84 {dimension_numbers = #tpu.dot_dimension_numbers<[1], [0], [0], [1], [0, 0, 1, 1], [], []>} : vector<2x32xf32>, vector<32x128xf32>, vector<2x128xf32> -> vector<2x128xf32>
      %162 = arith.addf %158, %161 : vector<2x128xf32>
      %163 = arith.index_cast %147 : i32 to index
      %c0_85 = arith.constant 0 : index
      %c0_86 = arith.constant 0 : index
      %164 = vector.load %arg5[%163, %c0_85, %c0_86] : memref<8x2x128xf32, #tpu.memory_space<vmem>>, vector<1x2x128xf32>
      %165 = vector.shape_cast %164 : vector<1x2x128xf32> to vector<2x128xf32>
      %c1_87 = arith.constant 1 : index
      %c0_88 = arith.constant 0 : index
      %c0_89 = arith.constant 0 : index
      %166 = vector.load %arg3[%c1_87, %c0_88, %c0_89] : memref<2x32x128xf32, #tpu.memory_space<vmem>>, vector<1x32x128xf32>
      %167 = vector.shape_cast %166 : vector<1x32x128xf32> to vector<32x128xf32>
      %cst_90 = arith.constant dense<0.000000e+00> : vector<2x128xf32>
      %168 = tpu.matmul %151, %167, %cst_90 {dimension_numbers = #tpu.dot_dimension_numbers<[1], [0], [0], [1], [0, 0, 1, 1], [], []>} : vector<2x32xf32>, vector<32x128xf32>, vector<2x128xf32> -> vector<2x128xf32>
      %169 = arith.addf %165, %168 : vector<2x128xf32>
      %170 = vector.extract_strided_slice %162 {offsets = [0, 0], sizes = [2, 32], strides = [1, 1]} : vector<2x128xf32> to vector<2x32xf32>
      %cst_91 = arith.constant 5.000000e-01 : f32
      %171 = vector.broadcast %cst_91 : f32 to vector<2x32xf32>
      %172 = arith.mulf %171, %170 : vector<2x32xf32>
      %173 = math.tanh %172 : vector<2x32xf32>
      %cst_92 = arith.constant 5.000000e-01 : f32
      %174 = vector.broadcast %cst_92 : f32 to vector<2x32xf32>
      %175 = arith.mulf %174, %173 : vector<2x32xf32>
      %cst_93 = arith.constant 5.000000e-01 : f32
      %176 = vector.broadcast %cst_93 : f32 to vector<2x32xf32>
      %177 = arith.addf %175, %176 : vector<2x32xf32>
      %178 = vector.extract_strided_slice %162 {offsets = [0, 32], sizes = [2, 32], strides = [1, 1]} : vector<2x128xf32> to vector<2x32xf32>
      %cst_94 = arith.constant 5.000000e-01 : f32
      %179 = vector.broadcast %cst_94 : f32 to vector<2x32xf32>
      %180 = arith.mulf %179, %178 : vector<2x32xf32>
      %181 = math.tanh %180 : vector<2x32xf32>
      %cst_95 = arith.constant 5.000000e-01 : f32
      %182 = vector.broadcast %cst_95 : f32 to vector<2x32xf32>
      %183 = arith.mulf %182, %181 : vector<2x32xf32>
      %cst_96 = arith.constant 5.000000e-01 : f32
      %184 = vector.broadcast %cst_96 : f32 to vector<2x32xf32>
      %185 = arith.addf %183, %184 : vector<2x32xf32>
      %186 = vector.extract_strided_slice %162 {offsets = [0, 64], sizes = [2, 32], strides = [1, 1]} : vector<2x128xf32> to vector<2x32xf32>
      %187 = math.tanh %186 : vector<2x32xf32>
      %188 = vector.extract_strided_slice %162 {offsets = [0, 96], sizes = [2, 32], strides = [1, 1]} : vector<2x128xf32> to vector<2x32xf32>
      %cst_97 = arith.constant 5.000000e-01 : f32
      %189 = vector.broadcast %cst_97 : f32 to vector<2x32xf32>
      %190 = arith.mulf %189, %188 : vector<2x32xf32>
      %191 = math.tanh %190 : vector<2x32xf32>
      %cst_98 = arith.constant 5.000000e-01 : f32
      %192 = vector.broadcast %cst_98 : f32 to vector<2x32xf32>
      %193 = arith.mulf %192, %191 : vector<2x32xf32>
      %cst_99 = arith.constant 5.000000e-01 : f32
      %194 = vector.broadcast %cst_99 : f32 to vector<2x32xf32>
      %195 = arith.addf %193, %194 : vector<2x32xf32>
      %196 = arith.mulf %185, %153 : vector<2x32xf32>
      %197 = arith.mulf %177, %187 : vector<2x32xf32>
      %198 = arith.addf %196, %197 : vector<2x32xf32>
      %199 = math.tanh %198 : vector<2x32xf32>
      %200 = arith.mulf %195, %199 : vector<2x32xf32>
      %201 = arith.addi %5, %c1_i32 : i32
      %202 = vector.broadcast %201 : i32 to vector<2x1xi32>
      %203 = arith.cmpi slt, %202, %1 : vector<2x1xi32>
      %204 = vector.shape_cast %203 : vector<2x1xi1> to vector<2x1xi1>
      %205 = vector.broadcast %204 : vector<2x1xi1> to vector<2x32xi1>
      %206 = arith.select %205, %200, %149 : vector<2x32xi1>, vector<2x32xf32>
      %c0_100 = arith.constant 0 : index
      %c0_101 = arith.constant 0 : index
      %c0_102 = arith.constant 0 : index
      %207 = vector.load %arg8[%c0_100, %c0_101, %c0_102] : memref<2x2x32xf32, #tpu.memory_space<vmem>>, vector<1x2x32xf32>
      %208 = vector.shape_cast %207 : vector<1x2x32xf32> to vector<2x32xf32>
      %209 = vector.shape_cast %206 : vector<2x32xf32> to vector<1x2x32xf32>
      tpu.vector_store %arg8[%c0_100, %c0_101, %c0_102], %209 {strides = array<i32>} : memref<2x2x32xf32, #tpu.memory_space<vmem>>, vector<1x2x32xf32>,
      %210 = vector.shape_cast %203 : vector<2x1xi1> to vector<2x1xi1>
      %211 = vector.broadcast %210 : vector<2x1xi1> to vector<2x32xi1>
      %212 = arith.select %211, %198, %153 : vector<2x32xi1>, vector<2x32xf32>
      %c0_103 = arith.constant 0 : index
      %c0_104 = arith.constant 0 : index
      %c0_105 = arith.constant 0 : index
      %213 = vector.load %arg9[%c0_103, %c0_104, %c0_105] : memref<2x2x32xf32, #tpu.memory_space<vmem>>, vector<1x2x32xf32>
      %214 = vector.shape_cast %213 : vector<1x2x32xf32> to vector<2x32xf32>
      %215 = vector.shape_cast %212 : vector<2x32xf32> to vector<1x2x32xf32>
      tpu.vector_store %arg9[%c0_103, %c0_104, %c0_105], %215 {strides = array<i32>} : memref<2x2x32xf32, #tpu.memory_space<vmem>>, vector<1x2x32xf32>,
      %cst_106 = arith.constant 0.000000e+00 : f32
      %216 = vector.shape_cast %203 : vector<2x1xi1> to vector<2x1xi1>
      %217 = vector.broadcast %216 : vector<2x1xi1> to vector<2x32xi1>
      %218 = vector.broadcast %cst_106 : f32 to vector<2x32xf32>
      %219 = arith.select %217, %200, %218 : vector<2x32xi1>, vector<2x32xf32>
      %220 = arith.index_cast %c1_i32 : i32 to index
      %c0_107 = arith.constant 0 : index
      %c0_108 = arith.constant 0 : index
      %221 = vector.load %arg6[%220, %c0_107, %c0_108] : memref<8x2x32xf32, #tpu.memory_space<vmem>>, vector<1x2x32xf32>
      %222 = vector.shape_cast %221 : vector<1x2x32xf32> to vector<2x32xf32>
      %223 = vector.shape_cast %219 : vector<2x32xf32> to vector<1x2x32xf32>
      tpu.vector_store %arg6[%220, %c0_107, %c0_108], %223 {strides = array<i32>} : memref<8x2x32xf32, #tpu.memory_space<vmem>>, vector<1x2x32xf32>,
      %224 = vector.extract_strided_slice %169 {offsets = [0, 0], sizes = [2, 32], strides = [1, 1]} : vector<2x128xf32> to vector<2x32xf32>
      %cst_109 = arith.constant 5.000000e-01 : f32
      %225 = vector.broadcast %cst_109 : f32 to vector<2x32xf32>
      %226 = arith.mulf %225, %224 : vector<2x32xf32>
      %227 = math.tanh %226 : vector<2x32xf32>
      %cst_110 = arith.constant 5.000000e-01 : f32
      %228 = vector.broadcast %cst_110 : f32 to vector<2x32xf32>
      %229 = arith.mulf %228, %227 : vector<2x32xf32>
      %cst_111 = arith.constant 5.000000e-01 : f32
      %230 = vector.broadcast %cst_111 : f32 to vector<2x32xf32>
      %231 = arith.addf %229, %230 : vector<2x32xf32>
      %232 = vector.extract_strided_slice %169 {offsets = [0, 32], sizes = [2, 32], strides = [1, 1]} : vector<2x128xf32> to vector<2x32xf32>
      %cst_112 = arith.constant 5.000000e-01 : f32
      %233 = vector.broadcast %cst_112 : f32 to vector<2x32xf32>
      %234 = arith.mulf %233, %232 : vector<2x32xf32>
      %235 = math.tanh %234 : vector<2x32xf32>
      %cst_113 = arith.constant 5.000000e-01 : f32
      %236 = vector.broadcast %cst_113 : f32 to vector<2x32xf32>
      %237 = arith.mulf %236, %235 : vector<2x32xf32>
      %cst_114 = arith.constant 5.000000e-01 : f32
      %238 = vector.broadcast %cst_114 : f32 to vector<2x32xf32>
      %239 = arith.addf %237, %238 : vector<2x32xf32>
      %240 = vector.extract_strided_slice %169 {offsets = [0, 64], sizes = [2, 32], strides = [1, 1]} : vector<2x128xf32> to vector<2x32xf32>
      %241 = math.tanh %240 : vector<2x32xf32>
      %242 = vector.extract_strided_slice %169 {offsets = [0, 96], sizes = [2, 32], strides = [1, 1]} : vector<2x128xf32> to vector<2x32xf32>
      %cst_115 = arith.constant 5.000000e-01 : f32
      %243 = vector.broadcast %cst_115 : f32 to vector<2x32xf32>
      %244 = arith.mulf %243, %242 : vector<2x32xf32>
      %245 = math.tanh %244 : vector<2x32xf32>
      %cst_116 = arith.constant 5.000000e-01 : f32
      %246 = vector.broadcast %cst_116 : f32 to vector<2x32xf32>
      %247 = arith.mulf %246, %245 : vector<2x32xf32>
      %cst_117 = arith.constant 5.000000e-01 : f32
      %248 = vector.broadcast %cst_117 : f32 to vector<2x32xf32>
      %249 = arith.addf %247, %248 : vector<2x32xf32>
      %250 = arith.mulf %239, %155 : vector<2x32xf32>
      %251 = arith.mulf %231, %241 : vector<2x32xf32>
      %252 = arith.addf %250, %251 : vector<2x32xf32>
      %253 = math.tanh %252 : vector<2x32xf32>
      %254 = arith.mulf %249, %253 : vector<2x32xf32>
      %255 = arith.addi %7, %147 : i32
      %256 = vector.broadcast %255 : i32 to vector<2x1xi32>
      %257 = arith.cmpi slt, %256, %1 : vector<2x1xi32>
      %258 = vector.shape_cast %257 : vector<2x1xi1> to vector<2x1xi1>
      %259 = vector.broadcast %258 : vector<2x1xi1> to vector<2x32xi1>
      %260 = arith.select %259, %254, %151 : vector<2x32xi1>, vector<2x32xf32>
      %c1_118 = arith.constant 1 : index
      %c0_119 = arith.constant 0 : index
      %c0_120 = arith.constant 0 : index
      %261 = vector.load %arg8[%c1_118, %c0_119, %c0_120] : memref<2x2x32xf32, #tpu.memory_space<vmem>>, vector<1x2x32xf32>
      %262 = vector.shape_cast %261 : vector<1x2x32xf32> to vector<2x32xf32>
      %263 = vector.shape_cast %260 : vector<2x32xf32> to vector<1x2x32xf32>
      tpu.vector_store %arg8[%c1_118, %c0_119, %c0_120], %263 {strides = array<i32>} : memref<2x2x32xf32, #tpu.memory_space<vmem>>, vector<1x2x32xf32>,
      %264 = vector.shape_cast %257 : vector<2x1xi1> to vector<2x1xi1>
      %265 = vector.broadcast %264 : vector<2x1xi1> to vector<2x32xi1>
      %266 = arith.select %265, %252, %155 : vector<2x32xi1>, vector<2x32xf32>
      %c1_121 = arith.constant 1 : index
      %c0_122 = arith.constant 0 : index
      %c0_123 = arith.constant 0 : index
      %267 = vector.load %arg9[%c1_121, %c0_122, %c0_123] : memref<2x2x32xf32, #tpu.memory_space<vmem>>, vector<1x2x32xf32>
      %268 = vector.shape_cast %267 : vector<1x2x32xf32> to vector<2x32xf32>
      %269 = vector.shape_cast %266 : vector<2x32xf32> to vector<1x2x32xf32>
      tpu.vector_store %arg9[%c1_121, %c0_122, %c0_123], %269 {strides = array<i32>} : memref<2x2x32xf32, #tpu.memory_space<vmem>>, vector<1x2x32xf32>,
      %cst_124 = arith.constant 0.000000e+00 : f32
      %270 = vector.shape_cast %257 : vector<2x1xi1> to vector<2x1xi1>
      %271 = vector.broadcast %270 : vector<2x1xi1> to vector<2x32xi1>
      %272 = vector.broadcast %cst_124 : f32 to vector<2x32xf32>
      %273 = arith.select %271, %254, %272 : vector<2x32xi1>, vector<2x32xf32>
      %274 = arith.index_cast %147 : i32 to index
      %c0_125 = arith.constant 0 : index
      %c0_126 = arith.constant 0 : index
      %275 = vector.load %arg7[%274, %c0_125, %c0_126] : memref<8x2x32xf32, #tpu.memory_space<vmem>>, vector<1x2x32xf32>
      %276 = vector.shape_cast %275 : vector<1x2x32xf32> to vector<2x32xf32>
      %277 = vector.shape_cast %273 : vector<2x32xf32> to vector<1x2x32xf32>
      tpu.vector_store %arg7[%274, %c0_125, %c0_126], %277 {strides = array<i32>} : memref<8x2x32xf32, #tpu.memory_space<vmem>>, vector<1x2x32xf32>,
      %c2_i32 = arith.constant 2 : i32
      %c7_i32_127 = arith.constant 7 : i32
      %278 = arith.subi %c7_i32_127, %c2_i32 : i32
      %c0_128 = arith.constant 0 : index
      %c0_129 = arith.constant 0 : index
      %c0_130 = arith.constant 0 : index
      %279 = vector.load %arg8[%c0_128, %c0_129, %c0_130] : memref<2x2x32xf32, #tpu.memory_space<vmem>>, vector<1x2x32xf32>
      %280 = vector.shape_cast %279 : vector<1x2x32xf32> to vector<2x32xf32>
      %c1_131 = arith.constant 1 : index
      %c0_132 = arith.constant 0 : index
      %c0_133 = arith.constant 0 : index
      %281 = vector.load %arg8[%c1_131, %c0_132, %c0_133] : memref<2x2x32xf32, #tpu.memory_space<vmem>>, vector<1x2x32xf32>
      %282 = vector.shape_cast %281 : vector<1x2x32xf32> to vector<2x32xf32>
      %c0_134 = arith.constant 0 : index
      %c0_135 = arith.constant 0 : index
      %c0_136 = arith.constant 0 : index
      %283 = vector.load %arg9[%c0_134, %c0_135, %c0_136] : memref<2x2x32xf32, #tpu.memory_space<vmem>>, vector<1x2x32xf32>
      %284 = vector.shape_cast %283 : vector<1x2x32xf32> to vector<2x32xf32>
      %c1_137 = arith.constant 1 : index
      %c0_138 = arith.constant 0 : index
      %c0_139 = arith.constant 0 : index
      %285 = vector.load %arg9[%c1_137, %c0_138, %c0_139] : memref<2x2x32xf32, #tpu.memory_space<vmem>>, vector<1x2x32xf32>
      %286 = vector.shape_cast %285 : vector<1x2x32xf32> to vector<2x32xf32>
      %287 = arith.index_cast %c2_i32 : i32 to index
      %c0_140 = arith.constant 0 : index
      %c0_141 = arith.constant 0 : index
      %288 = vector.load %arg4[%287, %c0_140, %c0_141] : memref<8x2x128xf32, #tpu.memory_space<vmem>>, vector<1x2x128xf32>
      %289 = vector.shape_cast %288 : vector<1x2x128xf32> to vector<2x128xf32>
      %c0_142 = arith.constant 0 : index
      %c0_143 = arith.constant 0 : index
      %c0_144 = arith.constant 0 : index
      %290 = vector.load %arg3[%c0_142, %c0_143, %c0_144] : memref<2x32x128xf32, #tpu.memory_space<vmem>>, vector<1x32x128xf32>
      %291 = vector.shape_cast %290 : vector<1x32x128xf32> to vector<32x128xf32>
      %cst_145 = arith.constant dense<0.000000e+00> : vector<2x128xf32>
      %292 = tpu.matmul %280, %291, %cst_145 {dimension_numbers = #tpu.dot_dimension_numbers<[1], [0], [0], [1], [0, 0, 1, 1], [], []>} : vector<2x32xf32>, vector<32x128xf32>, vector<2x128xf32> -> vector<2x128xf32>
      %293 = arith.addf %289, %292 : vector<2x128xf32>
      %294 = arith.index_cast %278 : i32 to index
      %c0_146 = arith.constant 0 : index
      %c0_147 = arith.constant 0 : index
      %295 = vector.load %arg5[%294, %c0_146, %c0_147] : memref<8x2x128xf32, #tpu.memory_space<vmem>>, vector<1x2x128xf32>
      %296 = vector.shape_cast %295 : vector<1x2x128xf32> to vector<2x128xf32>
      %c1_148 = arith.constant 1 : index
      %c0_149 = arith.constant 0 : index
      %c0_150 = arith.constant 0 : index
      %297 = vector.load %arg3[%c1_148, %c0_149, %c0_150] : memref<2x32x128xf32, #tpu.memory_space<vmem>>, vector<1x32x128xf32>
      %298 = vector.shape_cast %297 : vector<1x32x128xf32> to vector<32x128xf32>
      %cst_151 = arith.constant dense<0.000000e+00> : vector<2x128xf32>
      %299 = tpu.matmul %282, %298, %cst_151 {dimension_numbers = #tpu.dot_dimension_numbers<[1], [0], [0], [1], [0, 0, 1, 1], [], []>} : vector<2x32xf32>, vector<32x128xf32>, vector<2x128xf32> -> vector<2x128xf32>
      %300 = arith.addf %296, %299 : vector<2x128xf32>
      %301 = vector.extract_strided_slice %293 {offsets = [0, 0], sizes = [2, 32], strides = [1, 1]} : vector<2x128xf32> to vector<2x32xf32>
      %cst_152 = arith.constant 5.000000e-01 : f32
      %302 = vector.broadcast %cst_152 : f32 to vector<2x32xf32>
      %303 = arith.mulf %302, %301 : vector<2x32xf32>
      %304 = math.tanh %303 : vector<2x32xf32>
      %cst_153 = arith.constant 5.000000e-01 : f32
      %305 = vector.broadcast %cst_153 : f32 to vector<2x32xf32>
      %306 = arith.mulf %305, %304 : vector<2x32xf32>
      %cst_154 = arith.constant 5.000000e-01 : f32
      %307 = vector.broadcast %cst_154 : f32 to vector<2x32xf32>
      %308 = arith.addf %306, %307 : vector<2x32xf32>
      %309 = vector.extract_strided_slice %293 {offsets = [0, 32], sizes = [2, 32], strides = [1, 1]} : vector<2x128xf32> to vector<2x32xf32>
      %cst_155 = arith.constant 5.000000e-01 : f32
      %310 = vector.broadcast %cst_155 : f32 to vector<2x32xf32>
      %311 = arith.mulf %310, %309 : vector<2x32xf32>
      %312 = math.tanh %311 : vector<2x32xf32>
      %cst_156 = arith.constant 5.000000e-01 : f32
      %313 = vector.broadcast %cst_156 : f32 to vector<2x32xf32>
      %314 = arith.mulf %313, %312 : vector<2x32xf32>
      %cst_157 = arith.constant 5.000000e-01 : f32
      %315 = vector.broadcast %cst_157 : f32 to vector<2x32xf32>
      %316 = arith.addf %314, %315 : vector<2x32xf32>
      %317 = vector.extract_strided_slice %293 {offsets = [0, 64], sizes = [2, 32], strides = [1, 1]} : vector<2x128xf32> to vector<2x32xf32>
      %318 = math.tanh %317 : vector<2x32xf32>
      %319 = vector.extract_strided_slice %293 {offsets = [0, 96], sizes = [2, 32], strides = [1, 1]} : vector<2x128xf32> to vector<2x32xf32>
      %cst_158 = arith.constant 5.000000e-01 : f32
      %320 = vector.broadcast %cst_158 : f32 to vector<2x32xf32>
      %321 = arith.mulf %320, %319 : vector<2x32xf32>
      %322 = math.tanh %321 : vector<2x32xf32>
      %cst_159 = arith.constant 5.000000e-01 : f32
      %323 = vector.broadcast %cst_159 : f32 to vector<2x32xf32>
      %324 = arith.mulf %323, %322 : vector<2x32xf32>
      %cst_160 = arith.constant 5.000000e-01 : f32
      %325 = vector.broadcast %cst_160 : f32 to vector<2x32xf32>
      %326 = arith.addf %324, %325 : vector<2x32xf32>
      %327 = arith.mulf %316, %284 : vector<2x32xf32>
      %328 = arith.mulf %308, %318 : vector<2x32xf32>
      %329 = arith.addf %327, %328 : vector<2x32xf32>
      %330 = math.tanh %329 : vector<2x32xf32>
      %331 = arith.mulf %326, %330 : vector<2x32xf32>
      %332 = arith.addi %5, %c2_i32 : i32
      %333 = vector.broadcast %332 : i32 to vector<2x1xi32>
      %334 = arith.cmpi slt, %333, %1 : vector<2x1xi32>
      %335 = vector.shape_cast %334 : vector<2x1xi1> to vector<2x1xi1>
      %336 = vector.broadcast %335 : vector<2x1xi1> to vector<2x32xi1>
      %337 = arith.select %336, %331, %280 : vector<2x32xi1>, vector<2x32xf32>
      %c0_161 = arith.constant 0 : index
      %c0_162 = arith.constant 0 : index
      %c0_163 = arith.constant 0 : index
      %338 = vector.load %arg8[%c0_161, %c0_162, %c0_163] : memref<2x2x32xf32, #tpu.memory_space<vmem>>, vector<1x2x32xf32>
      %339 = vector.shape_cast %338 : vector<1x2x32xf32> to vector<2x32xf32>
      %340 = vector.shape_cast %337 : vector<2x32xf32> to vector<1x2x32xf32>
      tpu.vector_store %arg8[%c0_161, %c0_162, %c0_163], %340 {strides = array<i32>} : memref<2x2x32xf32, #tpu.memory_space<vmem>>, vector<1x2x32xf32>,
      %341 = vector.shape_cast %334 : vector<2x1xi1> to vector<2x1xi1>
      %342 = vector.broadcast %341 : vector<2x1xi1> to vector<2x32xi1>
      %343 = arith.select %342, %329, %284 : vector<2x32xi1>, vector<2x32xf32>
      %c0_164 = arith.constant 0 : index
      %c0_165 = arith.constant 0 : index
      %c0_166 = arith.constant 0 : index
      %344 = vector.load %arg9[%c0_164, %c0_165, %c0_166] : memref<2x2x32xf32, #tpu.memory_space<vmem>>, vector<1x2x32xf32>
      %345 = vector.shape_cast %344 : vector<1x2x32xf32> to vector<2x32xf32>
      %346 = vector.shape_cast %343 : vector<2x32xf32> to vector<1x2x32xf32>
      tpu.vector_store %arg9[%c0_164, %c0_165, %c0_166], %346 {strides = array<i32>} : memref<2x2x32xf32, #tpu.memory_space<vmem>>, vector<1x2x32xf32>,
      %cst_167 = arith.constant 0.000000e+00 : f32
      %347 = vector.shape_cast %334 : vector<2x1xi1> to vector<2x1xi1>
      %348 = vector.broadcast %347 : vector<2x1xi1> to vector<2x32xi1>
      %349 = vector.broadcast %cst_167 : f32 to vector<2x32xf32>
      %350 = arith.select %348, %331, %349 : vector<2x32xi1>, vector<2x32xf32>
      %351 = arith.index_cast %c2_i32 : i32 to index
      %c0_168 = arith.constant 0 : index
      %c0_169 = arith.constant 0 : index
      %352 = vector.load %arg6[%351, %c0_168, %c0_169] : memref<8x2x32xf32, #tpu.memory_space<vmem>>, vector<1x2x32xf32>
      %353 = vector.shape_cast %352 : vector<1x2x32xf32> to vector<2x32xf32>
      %354 = vector.shape_cast %350 : vector<2x32xf32> to vector<1x2x32xf32>
      tpu.vector_store %arg6[%351, %c0_168, %c0_169], %354 {strides = array<i32>} : memref<8x2x32xf32, #tpu.memory_space<vmem>>, vector<1x2x32xf32>,
      %355 = vector.extract_strided_slice %300 {offsets = [0, 0], sizes = [2, 32], strides = [1, 1]} : vector<2x128xf32> to vector<2x32xf32>
      %cst_170 = arith.constant 5.000000e-01 : f32
      %356 = vector.broadcast %cst_170 : f32 to vector<2x32xf32>
      %357 = arith.mulf %356, %355 : vector<2x32xf32>
      %358 = math.tanh %357 : vector<2x32xf32>
      %cst_171 = arith.constant 5.000000e-01 : f32
      %359 = vector.broadcast %cst_171 : f32 to vector<2x32xf32>
      %360 = arith.mulf %359, %358 : vector<2x32xf32>
      %cst_172 = arith.constant 5.000000e-01 : f32
      %361 = vector.broadcast %cst_172 : f32 to vector<2x32xf32>
      %362 = arith.addf %360, %361 : vector<2x32xf32>
      %363 = vector.extract_strided_slice %300 {offsets = [0, 32], sizes = [2, 32], strides = [1, 1]} : vector<2x128xf32> to vector<2x32xf32>
      %cst_173 = arith.constant 5.000000e-01 : f32
      %364 = vector.broadcast %cst_173 : f32 to vector<2x32xf32>
      %365 = arith.mulf %364, %363 : vector<2x32xf32>
      %366 = math.tanh %365 : vector<2x32xf32>
      %cst_174 = arith.constant 5.000000e-01 : f32
      %367 = vector.broadcast %cst_174 : f32 to vector<2x32xf32>
      %368 = arith.mulf %367, %366 : vector<2x32xf32>
      %cst_175 = arith.constant 5.000000e-01 : f32
      %369 = vector.broadcast %cst_175 : f32 to vector<2x32xf32>
      %370 = arith.addf %368, %369 : vector<2x32xf32>
      %371 = vector.extract_strided_slice %300 {offsets = [0, 64], sizes = [2, 32], strides = [1, 1]} : vector<2x128xf32> to vector<2x32xf32>
      %372 = math.tanh %371 : vector<2x32xf32>
      %373 = vector.extract_strided_slice %300 {offsets = [0, 96], sizes = [2, 32], strides = [1, 1]} : vector<2x128xf32> to vector<2x32xf32>
      %cst_176 = arith.constant 5.000000e-01 : f32
      %374 = vector.broadcast %cst_176 : f32 to vector<2x32xf32>
      %375 = arith.mulf %374, %373 : vector<2x32xf32>
      %376 = math.tanh %375 : vector<2x32xf32>
      %cst_177 = arith.constant 5.000000e-01 : f32
      %377 = vector.broadcast %cst_177 : f32 to vector<2x32xf32>
      %378 = arith.mulf %377, %376 : vector<2x32xf32>
      %cst_178 = arith.constant 5.000000e-01 : f32
      %379 = vector.broadcast %cst_178 : f32 to vector<2x32xf32>
      %380 = arith.addf %378, %379 : vector<2x32xf32>
      %381 = arith.mulf %370, %286 : vector<2x32xf32>
      %382 = arith.mulf %362, %372 : vector<2x32xf32>
      %383 = arith.addf %381, %382 : vector<2x32xf32>
      %384 = math.tanh %383 : vector<2x32xf32>
      %385 = arith.mulf %380, %384 : vector<2x32xf32>
      %386 = arith.addi %7, %278 : i32
      %387 = vector.broadcast %386 : i32 to vector<2x1xi32>
      %388 = arith.cmpi slt, %387, %1 : vector<2x1xi32>
      %389 = vector.shape_cast %388 : vector<2x1xi1> to vector<2x1xi1>
      %390 = vector.broadcast %389 : vector<2x1xi1> to vector<2x32xi1>
      %391 = arith.select %390, %385, %282 : vector<2x32xi1>, vector<2x32xf32>
      %c1_179 = arith.constant 1 : index
      %c0_180 = arith.constant 0 : index
      %c0_181 = arith.constant 0 : index
      %392 = vector.load %arg8[%c1_179, %c0_180, %c0_181] : memref<2x2x32xf32, #tpu.memory_space<vmem>>, vector<1x2x32xf32>
      %393 = vector.shape_cast %392 : vector<1x2x32xf32> to vector<2x32xf32>
      %394 = vector.shape_cast %391 : vector<2x32xf32> to vector<1x2x32xf32>
      tpu.vector_store %arg8[%c1_179, %c0_180, %c0_181], %394 {strides = array<i32>} : memref<2x2x32xf32, #tpu.memory_space<vmem>>, vector<1x2x32xf32>,
      %395 = vector.shape_cast %388 : vector<2x1xi1> to vector<2x1xi1>
      %396 = vector.broadcast %395 : vector<2x1xi1> to vector<2x32xi1>
      %397 = arith.select %396, %383, %286 : vector<2x32xi1>, vector<2x32xf32>
      %c1_182 = arith.constant 1 : index
      %c0_183 = arith.constant 0 : index
      %c0_184 = arith.constant 0 : index
      %398 = vector.load %arg9[%c1_182, %c0_183, %c0_184] : memref<2x2x32xf32, #tpu.memory_space<vmem>>, vector<1x2x32xf32>
      %399 = vector.shape_cast %398 : vector<1x2x32xf32> to vector<2x32xf32>
      %400 = vector.shape_cast %397 : vector<2x32xf32> to vector<1x2x32xf32>
      tpu.vector_store %arg9[%c1_182, %c0_183, %c0_184], %400 {strides = array<i32>} : memref<2x2x32xf32, #tpu.memory_space<vmem>>, vector<1x2x32xf32>,
      %cst_185 = arith.constant 0.000000e+00 : f32
      %401 = vector.shape_cast %388 : vector<2x1xi1> to vector<2x1xi1>
      %402 = vector.broadcast %401 : vector<2x1xi1> to vector<2x32xi1>
      %403 = vector.broadcast %cst_185 : f32 to vector<2x32xf32>
      %404 = arith.select %402, %385, %403 : vector<2x32xi1>, vector<2x32xf32>
      %405 = arith.index_cast %278 : i32 to index
      %c0_186 = arith.constant 0 : index
      %c0_187 = arith.constant 0 : index
      %406 = vector.load %arg7[%405, %c0_186, %c0_187] : memref<8x2x32xf32, #tpu.memory_space<vmem>>, vector<1x2x32xf32>
      %407 = vector.shape_cast %406 : vector<1x2x32xf32> to vector<2x32xf32>
      %408 = vector.shape_cast %404 : vector<2x32xf32> to vector<1x2x32xf32>
      tpu.vector_store %arg7[%405, %c0_186, %c0_187], %408 {strides = array<i32>} : memref<8x2x32xf32, #tpu.memory_space<vmem>>, vector<1x2x32xf32>,
      %c3_i32 = arith.constant 3 : i32
      %c7_i32_188 = arith.constant 7 : i32
      %409 = arith.subi %c7_i32_188, %c3_i32 : i32
      %c0_189 = arith.constant 0 : index
      %c0_190 = arith.constant 0 : index
      %c0_191 = arith.constant 0 : index
      %410 = vector.load %arg8[%c0_189, %c0_190, %c0_191] : memref<2x2x32xf32, #tpu.memory_space<vmem>>, vector<1x2x32xf32>
      %411 = vector.shape_cast %410 : vector<1x2x32xf32> to vector<2x32xf32>
      %c1_192 = arith.constant 1 : index
      %c0_193 = arith.constant 0 : index
      %c0_194 = arith.constant 0 : index
      %412 = vector.load %arg8[%c1_192, %c0_193, %c0_194] : memref<2x2x32xf32, #tpu.memory_space<vmem>>, vector<1x2x32xf32>
      %413 = vector.shape_cast %412 : vector<1x2x32xf32> to vector<2x32xf32>
      %c0_195 = arith.constant 0 : index
      %c0_196 = arith.constant 0 : index
      %c0_197 = arith.constant 0 : index
      %414 = vector.load %arg9[%c0_195, %c0_196, %c0_197] : memref<2x2x32xf32, #tpu.memory_space<vmem>>, vector<1x2x32xf32>
      %415 = vector.shape_cast %414 : vector<1x2x32xf32> to vector<2x32xf32>
      %c1_198 = arith.constant 1 : index
      %c0_199 = arith.constant 0 : index
      %c0_200 = arith.constant 0 : index
      %416 = vector.load %arg9[%c1_198, %c0_199, %c0_200] : memref<2x2x32xf32, #tpu.memory_space<vmem>>, vector<1x2x32xf32>
      %417 = vector.shape_cast %416 : vector<1x2x32xf32> to vector<2x32xf32>
      %418 = arith.index_cast %c3_i32 : i32 to index
      %c0_201 = arith.constant 0 : index
      %c0_202 = arith.constant 0 : index
      %419 = vector.load %arg4[%418, %c0_201, %c0_202] : memref<8x2x128xf32, #tpu.memory_space<vmem>>, vector<1x2x128xf32>
      %420 = vector.shape_cast %419 : vector<1x2x128xf32> to vector<2x128xf32>
      %c0_203 = arith.constant 0 : index
      %c0_204 = arith.constant 0 : index
      %c0_205 = arith.constant 0 : index
      %421 = vector.load %arg3[%c0_203, %c0_204, %c0_205] : memref<2x32x128xf32, #tpu.memory_space<vmem>>, vector<1x32x128xf32>
      %422 = vector.shape_cast %421 : vector<1x32x128xf32> to vector<32x128xf32>
      %cst_206 = arith.constant dense<0.000000e+00> : vector<2x128xf32>
      %423 = tpu.matmul %411, %422, %cst_206 {dimension_numbers = #tpu.dot_dimension_numbers<[1], [0], [0], [1], [0, 0, 1, 1], [], []>} : vector<2x32xf32>, vector<32x128xf32>, vector<2x128xf32> -> vector<2x128xf32>
      %424 = arith.addf %420, %423 : vector<2x128xf32>
      %425 = arith.index_cast %409 : i32 to index
      %c0_207 = arith.constant 0 : index
      %c0_208 = arith.constant 0 : index
      %426 = vector.load %arg5[%425, %c0_207, %c0_208] : memref<8x2x128xf32, #tpu.memory_space<vmem>>, vector<1x2x128xf32>
      %427 = vector.shape_cast %426 : vector<1x2x128xf32> to vector<2x128xf32>
      %c1_209 = arith.constant 1 : index
      %c0_210 = arith.constant 0 : index
      %c0_211 = arith.constant 0 : index
      %428 = vector.load %arg3[%c1_209, %c0_210, %c0_211] : memref<2x32x128xf32, #tpu.memory_space<vmem>>, vector<1x32x128xf32>
      %429 = vector.shape_cast %428 : vector<1x32x128xf32> to vector<32x128xf32>
      %cst_212 = arith.constant dense<0.000000e+00> : vector<2x128xf32>
      %430 = tpu.matmul %413, %429, %cst_212 {dimension_numbers = #tpu.dot_dimension_numbers<[1], [0], [0], [1], [0, 0, 1, 1], [], []>} : vector<2x32xf32>, vector<32x128xf32>, vector<2x128xf32> -> vector<2x128xf32>
      %431 = arith.addf %427, %430 : vector<2x128xf32>
      %432 = vector.extract_strided_slice %424 {offsets = [0, 0], sizes = [2, 32], strides = [1, 1]} : vector<2x128xf32> to vector<2x32xf32>
      %cst_213 = arith.constant 5.000000e-01 : f32
      %433 = vector.broadcast %cst_213 : f32 to vector<2x32xf32>
      %434 = arith.mulf %433, %432 : vector<2x32xf32>
      %435 = math.tanh %434 : vector<2x32xf32>
      %cst_214 = arith.constant 5.000000e-01 : f32
      %436 = vector.broadcast %cst_214 : f32 to vector<2x32xf32>
      %437 = arith.mulf %436, %435 : vector<2x32xf32>
      %cst_215 = arith.constant 5.000000e-01 : f32
      %438 = vector.broadcast %cst_215 : f32 to vector<2x32xf32>
      %439 = arith.addf %437, %438 : vector<2x32xf32>
      %440 = vector.extract_strided_slice %424 {offsets = [0, 32], sizes = [2, 32], strides = [1, 1]} : vector<2x128xf32> to vector<2x32xf32>
      %cst_216 = arith.constant 5.000000e-01 : f32
      %441 = vector.broadcast %cst_216 : f32 to vector<2x32xf32>
      %442 = arith.mulf %441, %440 : vector<2x32xf32>
      %443 = math.tanh %442 : vector<2x32xf32>
      %cst_217 = arith.constant 5.000000e-01 : f32
      %444 = vector.broadcast %cst_217 : f32 to vector<2x32xf32>
      %445 = arith.mulf %444, %443 : vector<2x32xf32>
      %cst_218 = arith.constant 5.000000e-01 : f32
      %446 = vector.broadcast %cst_218 : f32 to vector<2x32xf32>
      %447 = arith.addf %445, %446 : vector<2x32xf32>
      %448 = vector.extract_strided_slice %424 {offsets = [0, 64], sizes = [2, 32], strides = [1, 1]} : vector<2x128xf32> to vector<2x32xf32>
      %449 = math.tanh %448 : vector<2x32xf32>
      %450 = vector.extract_strided_slice %424 {offsets = [0, 96], sizes = [2, 32], strides = [1, 1]} : vector<2x128xf32> to vector<2x32xf32>
      %cst_219 = arith.constant 5.000000e-01 : f32
      %451 = vector.broadcast %cst_219 : f32 to vector<2x32xf32>
      %452 = arith.mulf %451, %450 : vector<2x32xf32>
      %453 = math.tanh %452 : vector<2x32xf32>
      %cst_220 = arith.constant 5.000000e-01 : f32
      %454 = vector.broadcast %cst_220 : f32 to vector<2x32xf32>
      %455 = arith.mulf %454, %453 : vector<2x32xf32>
      %cst_221 = arith.constant 5.000000e-01 : f32
      %456 = vector.broadcast %cst_221 : f32 to vector<2x32xf32>
      %457 = arith.addf %455, %456 : vector<2x32xf32>
      %458 = arith.mulf %447, %415 : vector<2x32xf32>
      %459 = arith.mulf %439, %449 : vector<2x32xf32>
      %460 = arith.addf %458, %459 : vector<2x32xf32>
      %461 = math.tanh %460 : vector<2x32xf32>
      %462 = arith.mulf %457, %461 : vector<2x32xf32>
      %463 = arith.addi %5, %c3_i32 : i32
      %464 = vector.broadcast %463 : i32 to vector<2x1xi32>
      %465 = arith.cmpi slt, %464, %1 : vector<2x1xi32>
      %466 = vector.shape_cast %465 : vector<2x1xi1> to vector<2x1xi1>
      %467 = vector.broadcast %466 : vector<2x1xi1> to vector<2x32xi1>
      %468 = arith.select %467, %462, %411 : vector<2x32xi1>, vector<2x32xf32>
      %c0_222 = arith.constant 0 : index
      %c0_223 = arith.constant 0 : index
      %c0_224 = arith.constant 0 : index
      %469 = vector.load %arg8[%c0_222, %c0_223, %c0_224] : memref<2x2x32xf32, #tpu.memory_space<vmem>>, vector<1x2x32xf32>
      %470 = vector.shape_cast %469 : vector<1x2x32xf32> to vector<2x32xf32>
      %471 = vector.shape_cast %468 : vector<2x32xf32> to vector<1x2x32xf32>
      tpu.vector_store %arg8[%c0_222, %c0_223, %c0_224], %471 {strides = array<i32>} : memref<2x2x32xf32, #tpu.memory_space<vmem>>, vector<1x2x32xf32>,
      %472 = vector.shape_cast %465 : vector<2x1xi1> to vector<2x1xi1>
      %473 = vector.broadcast %472 : vector<2x1xi1> to vector<2x32xi1>
      %474 = arith.select %473, %460, %415 : vector<2x32xi1>, vector<2x32xf32>
      %c0_225 = arith.constant 0 : index
      %c0_226 = arith.constant 0 : index
      %c0_227 = arith.constant 0 : index
      %475 = vector.load %arg9[%c0_225, %c0_226, %c0_227] : memref<2x2x32xf32, #tpu.memory_space<vmem>>, vector<1x2x32xf32>
      %476 = vector.shape_cast %475 : vector<1x2x32xf32> to vector<2x32xf32>
      %477 = vector.shape_cast %474 : vector<2x32xf32> to vector<1x2x32xf32>
      tpu.vector_store %arg9[%c0_225, %c0_226, %c0_227], %477 {strides = array<i32>} : memref<2x2x32xf32, #tpu.memory_space<vmem>>, vector<1x2x32xf32>,
      %cst_228 = arith.constant 0.000000e+00 : f32
      %478 = vector.shape_cast %465 : vector<2x1xi1> to vector<2x1xi1>
      %479 = vector.broadcast %478 : vector<2x1xi1> to vector<2x32xi1>
      %480 = vector.broadcast %cst_228 : f32 to vector<2x32xf32>
      %481 = arith.select %479, %462, %480 : vector<2x32xi1>, vector<2x32xf32>
      %482 = arith.index_cast %c3_i32 : i32 to index
      %c0_229 = arith.constant 0 : index
      %c0_230 = arith.constant 0 : index
      %483 = vector.load %arg6[%482, %c0_229, %c0_230] : memref<8x2x32xf32, #tpu.memory_space<vmem>>, vector<1x2x32xf32>
      %484 = vector.shape_cast %483 : vector<1x2x32xf32> to vector<2x32xf32>
      %485 = vector.shape_cast %481 : vector<2x32xf32> to vector<1x2x32xf32>
      tpu.vector_store %arg6[%482, %c0_229, %c0_230], %485 {strides = array<i32>} : memref<8x2x32xf32, #tpu.memory_space<vmem>>, vector<1x2x32xf32>,
      %486 = vector.extract_strided_slice %431 {offsets = [0, 0], sizes = [2, 32], strides = [1, 1]} : vector<2x128xf32> to vector<2x32xf32>
      %cst_231 = arith.constant 5.000000e-01 : f32
      %487 = vector.broadcast %cst_231 : f32 to vector<2x32xf32>
      %488 = arith.mulf %487, %486 : vector<2x32xf32>
      %489 = math.tanh %488 : vector<2x32xf32>
      %cst_232 = arith.constant 5.000000e-01 : f32
      %490 = vector.broadcast %cst_232 : f32 to vector<2x32xf32>
      %491 = arith.mulf %490, %489 : vector<2x32xf32>
      %cst_233 = arith.constant 5.000000e-01 : f32
      %492 = vector.broadcast %cst_233 : f32 to vector<2x32xf32>
      %493 = arith.addf %491, %492 : vector<2x32xf32>
      %494 = vector.extract_strided_slice %431 {offsets = [0, 32], sizes = [2, 32], strides = [1, 1]} : vector<2x128xf32> to vector<2x32xf32>
      %cst_234 = arith.constant 5.000000e-01 : f32
      %495 = vector.broadcast %cst_234 : f32 to vector<2x32xf32>
      %496 = arith.mulf %495, %494 : vector<2x32xf32>
      %497 = math.tanh %496 : vector<2x32xf32>
      %cst_235 = arith.constant 5.000000e-01 : f32
      %498 = vector.broadcast %cst_235 : f32 to vector<2x32xf32>
      %499 = arith.mulf %498, %497 : vector<2x32xf32>
      %cst_236 = arith.constant 5.000000e-01 : f32
      %500 = vector.broadcast %cst_236 : f32 to vector<2x32xf32>
      %501 = arith.addf %499, %500 : vector<2x32xf32>
      %502 = vector.extract_strided_slice %431 {offsets = [0, 64], sizes = [2, 32], strides = [1, 1]} : vector<2x128xf32> to vector<2x32xf32>
      %503 = math.tanh %502 : vector<2x32xf32>
      %504 = vector.extract_strided_slice %431 {offsets = [0, 96], sizes = [2, 32], strides = [1, 1]} : vector<2x128xf32> to vector<2x32xf32>
      %cst_237 = arith.constant 5.000000e-01 : f32
      %505 = vector.broadcast %cst_237 : f32 to vector<2x32xf32>
      %506 = arith.mulf %505, %504 : vector<2x32xf32>
      %507 = math.tanh %506 : vector<2x32xf32>
      %cst_238 = arith.constant 5.000000e-01 : f32
      %508 = vector.broadcast %cst_238 : f32 to vector<2x32xf32>
      %509 = arith.mulf %508, %507 : vector<2x32xf32>
      %cst_239 = arith.constant 5.000000e-01 : f32
      %510 = vector.broadcast %cst_239 : f32 to vector<2x32xf32>
      %511 = arith.addf %509, %510 : vector<2x32xf32>
      %512 = arith.mulf %501, %417 : vector<2x32xf32>
      %513 = arith.mulf %493, %503 : vector<2x32xf32>
      %514 = arith.addf %512, %513 : vector<2x32xf32>
      %515 = math.tanh %514 : vector<2x32xf32>
      %516 = arith.mulf %511, %515 : vector<2x32xf32>
      %517 = arith.addi %7, %409 : i32
      %518 = vector.broadcast %517 : i32 to vector<2x1xi32>
      %519 = arith.cmpi slt, %518, %1 : vector<2x1xi32>
      %520 = vector.shape_cast %519 : vector<2x1xi1> to vector<2x1xi1>
      %521 = vector.broadcast %520 : vector<2x1xi1> to vector<2x32xi1>
      %522 = arith.select %521, %516, %413 : vector<2x32xi1>, vector<2x32xf32>
      %c1_240 = arith.constant 1 : index
      %c0_241 = arith.constant 0 : index
      %c0_242 = arith.constant 0 : index
      %523 = vector.load %arg8[%c1_240, %c0_241, %c0_242] : memref<2x2x32xf32, #tpu.memory_space<vmem>>, vector<1x2x32xf32>
      %524 = vector.shape_cast %523 : vector<1x2x32xf32> to vector<2x32xf32>
      %525 = vector.shape_cast %522 : vector<2x32xf32> to vector<1x2x32xf32>
      tpu.vector_store %arg8[%c1_240, %c0_241, %c0_242], %525 {strides = array<i32>} : memref<2x2x32xf32, #tpu.memory_space<vmem>>, vector<1x2x32xf32>,
      %526 = vector.shape_cast %519 : vector<2x1xi1> to vector<2x1xi1>
      %527 = vector.broadcast %526 : vector<2x1xi1> to vector<2x32xi1>
      %528 = arith.select %527, %514, %417 : vector<2x32xi1>, vector<2x32xf32>
      %c1_243 = arith.constant 1 : index
      %c0_244 = arith.constant 0 : index
      %c0_245 = arith.constant 0 : index
      %529 = vector.load %arg9[%c1_243, %c0_244, %c0_245] : memref<2x2x32xf32, #tpu.memory_space<vmem>>, vector<1x2x32xf32>
      %530 = vector.shape_cast %529 : vector<1x2x32xf32> to vector<2x32xf32>
      %531 = vector.shape_cast %528 : vector<2x32xf32> to vector<1x2x32xf32>
      tpu.vector_store %arg9[%c1_243, %c0_244, %c0_245], %531 {strides = array<i32>} : memref<2x2x32xf32, #tpu.memory_space<vmem>>, vector<1x2x32xf32>,
      %cst_246 = arith.constant 0.000000e+00 : f32
      %532 = vector.shape_cast %519 : vector<2x1xi1> to vector<2x1xi1>
      %533 = vector.broadcast %532 : vector<2x1xi1> to vector<2x32xi1>
      %534 = vector.broadcast %cst_246 : f32 to vector<2x32xf32>
      %535 = arith.select %533, %516, %534 : vector<2x32xi1>, vector<2x32xf32>
      %536 = arith.index_cast %409 : i32 to index
      %c0_247 = arith.constant 0 : index
      %c0_248 = arith.constant 0 : index
      %537 = vector.load %arg7[%536, %c0_247, %c0_248] : memref<8x2x32xf32, #tpu.memory_space<vmem>>, vector<1x2x32xf32>
      %538 = vector.shape_cast %537 : vector<1x2x32xf32> to vector<2x32xf32>
      %539 = vector.shape_cast %535 : vector<2x32xf32> to vector<1x2x32xf32>
      tpu.vector_store %arg7[%536, %c0_247, %c0_248], %539 {strides = array<i32>} : memref<8x2x32xf32, #tpu.memory_space<vmem>>, vector<1x2x32xf32>,
      %c4_i32 = arith.constant 4 : i32
      %c7_i32_249 = arith.constant 7 : i32
      %540 = arith.subi %c7_i32_249, %c4_i32 : i32
      %c0_250 = arith.constant 0 : index
      %c0_251 = arith.constant 0 : index
      %c0_252 = arith.constant 0 : index
      %541 = vector.load %arg8[%c0_250, %c0_251, %c0_252] : memref<2x2x32xf32, #tpu.memory_space<vmem>>, vector<1x2x32xf32>
      %542 = vector.shape_cast %541 : vector<1x2x32xf32> to vector<2x32xf32>
      %c1_253 = arith.constant 1 : index
      %c0_254 = arith.constant 0 : index
      %c0_255 = arith.constant 0 : index
      %543 = vector.load %arg8[%c1_253, %c0_254, %c0_255] : memref<2x2x32xf32, #tpu.memory_space<vmem>>, vector<1x2x32xf32>
      %544 = vector.shape_cast %543 : vector<1x2x32xf32> to vector<2x32xf32>
      %c0_256 = arith.constant 0 : index
      %c0_257 = arith.constant 0 : index
      %c0_258 = arith.constant 0 : index
      %545 = vector.load %arg9[%c0_256, %c0_257, %c0_258] : memref<2x2x32xf32, #tpu.memory_space<vmem>>, vector<1x2x32xf32>
      %546 = vector.shape_cast %545 : vector<1x2x32xf32> to vector<2x32xf32>
      %c1_259 = arith.constant 1 : index
      %c0_260 = arith.constant 0 : index
      %c0_261 = arith.constant 0 : index
      %547 = vector.load %arg9[%c1_259, %c0_260, %c0_261] : memref<2x2x32xf32, #tpu.memory_space<vmem>>, vector<1x2x32xf32>
      %548 = vector.shape_cast %547 : vector<1x2x32xf32> to vector<2x32xf32>
      %549 = arith.index_cast %c4_i32 : i32 to index
      %c0_262 = arith.constant 0 : index
      %c0_263 = arith.constant 0 : index
      %550 = vector.load %arg4[%549, %c0_262, %c0_263] : memref<8x2x128xf32, #tpu.memory_space<vmem>>, vector<1x2x128xf32>
      %551 = vector.shape_cast %550 : vector<1x2x128xf32> to vector<2x128xf32>
      %c0_264 = arith.constant 0 : index
      %c0_265 = arith.constant 0 : index
      %c0_266 = arith.constant 0 : index
      %552 = vector.load %arg3[%c0_264, %c0_265, %c0_266] : memref<2x32x128xf32, #tpu.memory_space<vmem>>, vector<1x32x128xf32>
      %553 = vector.shape_cast %552 : vector<1x32x128xf32> to vector<32x128xf32>
      %cst_267 = arith.constant dense<0.000000e+00> : vector<2x128xf32>
      %554 = tpu.matmul %542, %553, %cst_267 {dimension_numbers = #tpu.dot_dimension_numbers<[1], [0], [0], [1], [0, 0, 1, 1], [], []>} : vector<2x32xf32>, vector<32x128xf32>, vector<2x128xf32> -> vector<2x128xf32>
      %555 = arith.addf %551, %554 : vector<2x128xf32>
      %556 = arith.index_cast %540 : i32 to index
      %c0_268 = arith.constant 0 : index
      %c0_269 = arith.constant 0 : index
      %557 = vector.load %arg5[%556, %c0_268, %c0_269] : memref<8x2x128xf32, #tpu.memory_space<vmem>>, vector<1x2x128xf32>
      %558 = vector.shape_cast %557 : vector<1x2x128xf32> to vector<2x128xf32>
      %c1_270 = arith.constant 1 : index
      %c0_271 = arith.constant 0 : index
      %c0_272 = arith.constant 0 : index
      %559 = vector.load %arg3[%c1_270, %c0_271, %c0_272] : memref<2x32x128xf32, #tpu.memory_space<vmem>>, vector<1x32x128xf32>
      %560 = vector.shape_cast %559 : vector<1x32x128xf32> to vector<32x128xf32>
      %cst_273 = arith.constant dense<0.000000e+00> : vector<2x128xf32>
      %561 = tpu.matmul %544, %560, %cst_273 {dimension_numbers = #tpu.dot_dimension_numbers<[1], [0], [0], [1], [0, 0, 1, 1], [], []>} : vector<2x32xf32>, vector<32x128xf32>, vector<2x128xf32> -> vector<2x128xf32>
      %562 = arith.addf %558, %561 : vector<2x128xf32>
      %563 = vector.extract_strided_slice %555 {offsets = [0, 0], sizes = [2, 32], strides = [1, 1]} : vector<2x128xf32> to vector<2x32xf32>
      %cst_274 = arith.constant 5.000000e-01 : f32
      %564 = vector.broadcast %cst_274 : f32 to vector<2x32xf32>
      %565 = arith.mulf %564, %563 : vector<2x32xf32>
      %566 = math.tanh %565 : vector<2x32xf32>
      %cst_275 = arith.constant 5.000000e-01 : f32
      %567 = vector.broadcast %cst_275 : f32 to vector<2x32xf32>
      %568 = arith.mulf %567, %566 : vector<2x32xf32>
      %cst_276 = arith.constant 5.000000e-01 : f32
      %569 = vector.broadcast %cst_276 : f32 to vector<2x32xf32>
      %570 = arith.addf %568, %569 : vector<2x32xf32>
      %571 = vector.extract_strided_slice %555 {offsets = [0, 32], sizes = [2, 32], strides = [1, 1]} : vector<2x128xf32> to vector<2x32xf32>
      %cst_277 = arith.constant 5.000000e-01 : f32
      %572 = vector.broadcast %cst_277 : f32 to vector<2x32xf32>
      %573 = arith.mulf %572, %571 : vector<2x32xf32>
      %574 = math.tanh %573 : vector<2x32xf32>
      %cst_278 = arith.constant 5.000000e-01 : f32
      %575 = vector.broadcast %cst_278 : f32 to vector<2x32xf32>
      %576 = arith.mulf %575, %574 : vector<2x32xf32>
      %cst_279 = arith.constant 5.000000e-01 : f32
      %577 = vector.broadcast %cst_279 : f32 to vector<2x32xf32>
      %578 = arith.addf %576, %577 : vector<2x32xf32>
      %579 = vector.extract_strided_slice %555 {offsets = [0, 64], sizes = [2, 32], strides = [1, 1]} : vector<2x128xf32> to vector<2x32xf32>
      %580 = math.tanh %579 : vector<2x32xf32>
      %581 = vector.extract_strided_slice %555 {offsets = [0, 96], sizes = [2, 32], strides = [1, 1]} : vector<2x128xf32> to vector<2x32xf32>
      %cst_280 = arith.constant 5.000000e-01 : f32
      %582 = vector.broadcast %cst_280 : f32 to vector<2x32xf32>
      %583 = arith.mulf %582, %581 : vector<2x32xf32>
      %584 = math.tanh %583 : vector<2x32xf32>
      %cst_281 = arith.constant 5.000000e-01 : f32
      %585 = vector.broadcast %cst_281 : f32 to vector<2x32xf32>
      %586 = arith.mulf %585, %584 : vector<2x32xf32>
      %cst_282 = arith.constant 5.000000e-01 : f32
      %587 = vector.broadcast %cst_282 : f32 to vector<2x32xf32>
      %588 = arith.addf %586, %587 : vector<2x32xf32>
      %589 = arith.mulf %578, %546 : vector<2x32xf32>
      %590 = arith.mulf %570, %580 : vector<2x32xf32>
      %591 = arith.addf %589, %590 : vector<2x32xf32>
      %592 = math.tanh %591 : vector<2x32xf32>
      %593 = arith.mulf %588, %592 : vector<2x32xf32>
      %594 = arith.addi %5, %c4_i32 : i32
      %595 = vector.broadcast %594 : i32 to vector<2x1xi32>
      %596 = arith.cmpi slt, %595, %1 : vector<2x1xi32>
      %597 = vector.shape_cast %596 : vector<2x1xi1> to vector<2x1xi1>
      %598 = vector.broadcast %597 : vector<2x1xi1> to vector<2x32xi1>
      %599 = arith.select %598, %593, %542 : vector<2x32xi1>, vector<2x32xf32>
      %c0_283 = arith.constant 0 : index
      %c0_284 = arith.constant 0 : index
      %c0_285 = arith.constant 0 : index
      %600 = vector.load %arg8[%c0_283, %c0_284, %c0_285] : memref<2x2x32xf32, #tpu.memory_space<vmem>>, vector<1x2x32xf32>
      %601 = vector.shape_cast %600 : vector<1x2x32xf32> to vector<2x32xf32>
      %602 = vector.shape_cast %599 : vector<2x32xf32> to vector<1x2x32xf32>
      tpu.vector_store %arg8[%c0_283, %c0_284, %c0_285], %602 {strides = array<i32>} : memref<2x2x32xf32, #tpu.memory_space<vmem>>, vector<1x2x32xf32>,
      %603 = vector.shape_cast %596 : vector<2x1xi1> to vector<2x1xi1>
      %604 = vector.broadcast %603 : vector<2x1xi1> to vector<2x32xi1>
      %605 = arith.select %604, %591, %546 : vector<2x32xi1>, vector<2x32xf32>
      %c0_286 = arith.constant 0 : index
      %c0_287 = arith.constant 0 : index
      %c0_288 = arith.constant 0 : index
      %606 = vector.load %arg9[%c0_286, %c0_287, %c0_288] : memref<2x2x32xf32, #tpu.memory_space<vmem>>, vector<1x2x32xf32>
      %607 = vector.shape_cast %606 : vector<1x2x32xf32> to vector<2x32xf32>
      %608 = vector.shape_cast %605 : vector<2x32xf32> to vector<1x2x32xf32>
      tpu.vector_store %arg9[%c0_286, %c0_287, %c0_288], %608 {strides = array<i32>} : memref<2x2x32xf32, #tpu.memory_space<vmem>>, vector<1x2x32xf32>,
      %cst_289 = arith.constant 0.000000e+00 : f32
      %609 = vector.shape_cast %596 : vector<2x1xi1> to vector<2x1xi1>
      %610 = vector.broadcast %609 : vector<2x1xi1> to vector<2x32xi1>
      %611 = vector.broadcast %cst_289 : f32 to vector<2x32xf32>
      %612 = arith.select %610, %593, %611 : vector<2x32xi1>, vector<2x32xf32>
      %613 = arith.index_cast %c4_i32 : i32 to index
      %c0_290 = arith.constant 0 : index
      %c0_291 = arith.constant 0 : index
      %614 = vector.load %arg6[%613, %c0_290, %c0_291] : memref<8x2x32xf32, #tpu.memory_space<vmem>>, vector<1x2x32xf32>
      %615 = vector.shape_cast %614 : vector<1x2x32xf32> to vector<2x32xf32>
      %616 = vector.shape_cast %612 : vector<2x32xf32> to vector<1x2x32xf32>
      tpu.vector_store %arg6[%613, %c0_290, %c0_291], %616 {strides = array<i32>} : memref<8x2x32xf32, #tpu.memory_space<vmem>>, vector<1x2x32xf32>,
      %617 = vector.extract_strided_slice %562 {offsets = [0, 0], sizes = [2, 32], strides = [1, 1]} : vector<2x128xf32> to vector<2x32xf32>
      %cst_292 = arith.constant 5.000000e-01 : f32
      %618 = vector.broadcast %cst_292 : f32 to vector<2x32xf32>
      %619 = arith.mulf %618, %617 : vector<2x32xf32>
      %620 = math.tanh %619 : vector<2x32xf32>
      %cst_293 = arith.constant 5.000000e-01 : f32
      %621 = vector.broadcast %cst_293 : f32 to vector<2x32xf32>
      %622 = arith.mulf %621, %620 : vector<2x32xf32>
      %cst_294 = arith.constant 5.000000e-01 : f32
      %623 = vector.broadcast %cst_294 : f32 to vector<2x32xf32>
      %624 = arith.addf %622, %623 : vector<2x32xf32>
      %625 = vector.extract_strided_slice %562 {offsets = [0, 32], sizes = [2, 32], strides = [1, 1]} : vector<2x128xf32> to vector<2x32xf32>
      %cst_295 = arith.constant 5.000000e-01 : f32
      %626 = vector.broadcast %cst_295 : f32 to vector<2x32xf32>
      %627 = arith.mulf %626, %625 : vector<2x32xf32>
      %628 = math.tanh %627 : vector<2x32xf32>
      %cst_296 = arith.constant 5.000000e-01 : f32
      %629 = vector.broadcast %cst_296 : f32 to vector<2x32xf32>
      %630 = arith.mulf %629, %628 : vector<2x32xf32>
      %cst_297 = arith.constant 5.000000e-01 : f32
      %631 = vector.broadcast %cst_297 : f32 to vector<2x32xf32>
      %632 = arith.addf %630, %631 : vector<2x32xf32>
      %633 = vector.extract_strided_slice %562 {offsets = [0, 64], sizes = [2, 32], strides = [1, 1]} : vector<2x128xf32> to vector<2x32xf32>
      %634 = math.tanh %633 : vector<2x32xf32>
      %635 = vector.extract_strided_slice %562 {offsets = [0, 96], sizes = [2, 32], strides = [1, 1]} : vector<2x128xf32> to vector<2x32xf32>
      %cst_298 = arith.constant 5.000000e-01 : f32
      %636 = vector.broadcast %cst_298 : f32 to vector<2x32xf32>
      %637 = arith.mulf %636, %635 : vector<2x32xf32>
      %638 = math.tanh %637 : vector<2x32xf32>
      %cst_299 = arith.constant 5.000000e-01 : f32
      %639 = vector.broadcast %cst_299 : f32 to vector<2x32xf32>
      %640 = arith.mulf %639, %638 : vector<2x32xf32>
      %cst_300 = arith.constant 5.000000e-01 : f32
      %641 = vector.broadcast %cst_300 : f32 to vector<2x32xf32>
      %642 = arith.addf %640, %641 : vector<2x32xf32>
      %643 = arith.mulf %632, %548 : vector<2x32xf32>
      %644 = arith.mulf %624, %634 : vector<2x32xf32>
      %645 = arith.addf %643, %644 : vector<2x32xf32>
      %646 = math.tanh %645 : vector<2x32xf32>
      %647 = arith.mulf %642, %646 : vector<2x32xf32>
      %648 = arith.addi %7, %540 : i32
      %649 = vector.broadcast %648 : i32 to vector<2x1xi32>
      %650 = arith.cmpi slt, %649, %1 : vector<2x1xi32>
      %651 = vector.shape_cast %650 : vector<2x1xi1> to vector<2x1xi1>
      %652 = vector.broadcast %651 : vector<2x1xi1> to vector<2x32xi1>
      %653 = arith.select %652, %647, %544 : vector<2x32xi1>, vector<2x32xf32>
      %c1_301 = arith.constant 1 : index
      %c0_302 = arith.constant 0 : index
      %c0_303 = arith.constant 0 : index
      %654 = vector.load %arg8[%c1_301, %c0_302, %c0_303] : memref<2x2x32xf32, #tpu.memory_space<vmem>>, vector<1x2x32xf32>
      %655 = vector.shape_cast %654 : vector<1x2x32xf32> to vector<2x32xf32>
      %656 = vector.shape_cast %653 : vector<2x32xf32> to vector<1x2x32xf32>
      tpu.vector_store %arg8[%c1_301, %c0_302, %c0_303], %656 {strides = array<i32>} : memref<2x2x32xf32, #tpu.memory_space<vmem>>, vector<1x2x32xf32>,
      %657 = vector.shape_cast %650 : vector<2x1xi1> to vector<2x1xi1>
      %658 = vector.broadcast %657 : vector<2x1xi1> to vector<2x32xi1>
      %659 = arith.select %658, %645, %548 : vector<2x32xi1>, vector<2x32xf32>
      %c1_304 = arith.constant 1 : index
      %c0_305 = arith.constant 0 : index
      %c0_306 = arith.constant 0 : index
      %660 = vector.load %arg9[%c1_304, %c0_305, %c0_306] : memref<2x2x32xf32, #tpu.memory_space<vmem>>, vector<1x2x32xf32>
      %661 = vector.shape_cast %660 : vector<1x2x32xf32> to vector<2x32xf32>
      %662 = vector.shape_cast %659 : vector<2x32xf32> to vector<1x2x32xf32>
      tpu.vector_store %arg9[%c1_304, %c0_305, %c0_306], %662 {strides = array<i32>} : memref<2x2x32xf32, #tpu.memory_space<vmem>>, vector<1x2x32xf32>,
      %cst_307 = arith.constant 0.000000e+00 : f32
      %663 = vector.shape_cast %650 : vector<2x1xi1> to vector<2x1xi1>
      %664 = vector.broadcast %663 : vector<2x1xi1> to vector<2x32xi1>
      %665 = vector.broadcast %cst_307 : f32 to vector<2x32xf32>
      %666 = arith.select %664, %647, %665 : vector<2x32xi1>, vector<2x32xf32>
      %667 = arith.index_cast %540 : i32 to index
      %c0_308 = arith.constant 0 : index
      %c0_309 = arith.constant 0 : index
      %668 = vector.load %arg7[%667, %c0_308, %c0_309] : memref<8x2x32xf32, #tpu.memory_space<vmem>>, vector<1x2x32xf32>
      %669 = vector.shape_cast %668 : vector<1x2x32xf32> to vector<2x32xf32>
      %670 = vector.shape_cast %666 : vector<2x32xf32> to vector<1x2x32xf32>
      tpu.vector_store %arg7[%667, %c0_308, %c0_309], %670 {strides = array<i32>} : memref<8x2x32xf32, #tpu.memory_space<vmem>>, vector<1x2x32xf32>,
      %c5_i32 = arith.constant 5 : i32
      %c7_i32_310 = arith.constant 7 : i32
      %671 = arith.subi %c7_i32_310, %c5_i32 : i32
      %c0_311 = arith.constant 0 : index
      %c0_312 = arith.constant 0 : index
      %c0_313 = arith.constant 0 : index
      %672 = vector.load %arg8[%c0_311, %c0_312, %c0_313] : memref<2x2x32xf32, #tpu.memory_space<vmem>>, vector<1x2x32xf32>
      %673 = vector.shape_cast %672 : vector<1x2x32xf32> to vector<2x32xf32>
      %c1_314 = arith.constant 1 : index
      %c0_315 = arith.constant 0 : index
      %c0_316 = arith.constant 0 : index
      %674 = vector.load %arg8[%c1_314, %c0_315, %c0_316] : memref<2x2x32xf32, #tpu.memory_space<vmem>>, vector<1x2x32xf32>
      %675 = vector.shape_cast %674 : vector<1x2x32xf32> to vector<2x32xf32>
      %c0_317 = arith.constant 0 : index
      %c0_318 = arith.constant 0 : index
      %c0_319 = arith.constant 0 : index
      %676 = vector.load %arg9[%c0_317, %c0_318, %c0_319] : memref<2x2x32xf32, #tpu.memory_space<vmem>>, vector<1x2x32xf32>
      %677 = vector.shape_cast %676 : vector<1x2x32xf32> to vector<2x32xf32>
      %c1_320 = arith.constant 1 : index
      %c0_321 = arith.constant 0 : index
      %c0_322 = arith.constant 0 : index
      %678 = vector.load %arg9[%c1_320, %c0_321, %c0_322] : memref<2x2x32xf32, #tpu.memory_space<vmem>>, vector<1x2x32xf32>
      %679 = vector.shape_cast %678 : vector<1x2x32xf32> to vector<2x32xf32>
      %680 = arith.index_cast %c5_i32 : i32 to index
      %c0_323 = arith.constant 0 : index
      %c0_324 = arith.constant 0 : index
      %681 = vector.load %arg4[%680, %c0_323, %c0_324] : memref<8x2x128xf32, #tpu.memory_space<vmem>>, vector<1x2x128xf32>
      %682 = vector.shape_cast %681 : vector<1x2x128xf32> to vector<2x128xf32>
      %c0_325 = arith.constant 0 : index
      %c0_326 = arith.constant 0 : index
      %c0_327 = arith.constant 0 : index
      %683 = vector.load %arg3[%c0_325, %c0_326, %c0_327] : memref<2x32x128xf32, #tpu.memory_space<vmem>>, vector<1x32x128xf32>
      %684 = vector.shape_cast %683 : vector<1x32x128xf32> to vector<32x128xf32>
      %cst_328 = arith.constant dense<0.000000e+00> : vector<2x128xf32>
      %685 = tpu.matmul %673, %684, %cst_328 {dimension_numbers = #tpu.dot_dimension_numbers<[1], [0], [0], [1], [0, 0, 1, 1], [], []>} : vector<2x32xf32>, vector<32x128xf32>, vector<2x128xf32> -> vector<2x128xf32>
      %686 = arith.addf %682, %685 : vector<2x128xf32>
      %687 = arith.index_cast %671 : i32 to index
      %c0_329 = arith.constant 0 : index
      %c0_330 = arith.constant 0 : index
      %688 = vector.load %arg5[%687, %c0_329, %c0_330] : memref<8x2x128xf32, #tpu.memory_space<vmem>>, vector<1x2x128xf32>
      %689 = vector.shape_cast %688 : vector<1x2x128xf32> to vector<2x128xf32>
      %c1_331 = arith.constant 1 : index
      %c0_332 = arith.constant 0 : index
      %c0_333 = arith.constant 0 : index
      %690 = vector.load %arg3[%c1_331, %c0_332, %c0_333] : memref<2x32x128xf32, #tpu.memory_space<vmem>>, vector<1x32x128xf32>
      %691 = vector.shape_cast %690 : vector<1x32x128xf32> to vector<32x128xf32>
      %cst_334 = arith.constant dense<0.000000e+00> : vector<2x128xf32>
      %692 = tpu.matmul %675, %691, %cst_334 {dimension_numbers = #tpu.dot_dimension_numbers<[1], [0], [0], [1], [0, 0, 1, 1], [], []>} : vector<2x32xf32>, vector<32x128xf32>, vector<2x128xf32> -> vector<2x128xf32>
      %693 = arith.addf %689, %692 : vector<2x128xf32>
      %694 = vector.extract_strided_slice %686 {offsets = [0, 0], sizes = [2, 32], strides = [1, 1]} : vector<2x128xf32> to vector<2x32xf32>
      %cst_335 = arith.constant 5.000000e-01 : f32
      %695 = vector.broadcast %cst_335 : f32 to vector<2x32xf32>
      %696 = arith.mulf %695, %694 : vector<2x32xf32>
      %697 = math.tanh %696 : vector<2x32xf32>
      %cst_336 = arith.constant 5.000000e-01 : f32
      %698 = vector.broadcast %cst_336 : f32 to vector<2x32xf32>
      %699 = arith.mulf %698, %697 : vector<2x32xf32>
      %cst_337 = arith.constant 5.000000e-01 : f32
      %700 = vector.broadcast %cst_337 : f32 to vector<2x32xf32>
      %701 = arith.addf %699, %700 : vector<2x32xf32>
      %702 = vector.extract_strided_slice %686 {offsets = [0, 32], sizes = [2, 32], strides = [1, 1]} : vector<2x128xf32> to vector<2x32xf32>
      %cst_338 = arith.constant 5.000000e-01 : f32
      %703 = vector.broadcast %cst_338 : f32 to vector<2x32xf32>
      %704 = arith.mulf %703, %702 : vector<2x32xf32>
      %705 = math.tanh %704 : vector<2x32xf32>
      %cst_339 = arith.constant 5.000000e-01 : f32
      %706 = vector.broadcast %cst_339 : f32 to vector<2x32xf32>
      %707 = arith.mulf %706, %705 : vector<2x32xf32>
      %cst_340 = arith.constant 5.000000e-01 : f32
      %708 = vector.broadcast %cst_340 : f32 to vector<2x32xf32>
      %709 = arith.addf %707, %708 : vector<2x32xf32>
      %710 = vector.extract_strided_slice %686 {offsets = [0, 64], sizes = [2, 32], strides = [1, 1]} : vector<2x128xf32> to vector<2x32xf32>
      %711 = math.tanh %710 : vector<2x32xf32>
      %712 = vector.extract_strided_slice %686 {offsets = [0, 96], sizes = [2, 32], strides = [1, 1]} : vector<2x128xf32> to vector<2x32xf32>
      %cst_341 = arith.constant 5.000000e-01 : f32
      %713 = vector.broadcast %cst_341 : f32 to vector<2x32xf32>
      %714 = arith.mulf %713, %712 : vector<2x32xf32>
      %715 = math.tanh %714 : vector<2x32xf32>
      %cst_342 = arith.constant 5.000000e-01 : f32
      %716 = vector.broadcast %cst_342 : f32 to vector<2x32xf32>
      %717 = arith.mulf %716, %715 : vector<2x32xf32>
      %cst_343 = arith.constant 5.000000e-01 : f32
      %718 = vector.broadcast %cst_343 : f32 to vector<2x32xf32>
      %719 = arith.addf %717, %718 : vector<2x32xf32>
      %720 = arith.mulf %709, %677 : vector<2x32xf32>
      %721 = arith.mulf %701, %711 : vector<2x32xf32>
      %722 = arith.addf %720, %721 : vector<2x32xf32>
      %723 = math.tanh %722 : vector<2x32xf32>
      %724 = arith.mulf %719, %723 : vector<2x32xf32>
      %725 = arith.addi %5, %c5_i32 : i32
      %726 = vector.broadcast %725 : i32 to vector<2x1xi32>
      %727 = arith.cmpi slt, %726, %1 : vector<2x1xi32>
      %728 = vector.shape_cast %727 : vector<2x1xi1> to vector<2x1xi1>
      %729 = vector.broadcast %728 : vector<2x1xi1> to vector<2x32xi1>
      %730 = arith.select %729, %724, %673 : vector<2x32xi1>, vector<2x32xf32>
      %c0_344 = arith.constant 0 : index
      %c0_345 = arith.constant 0 : index
      %c0_346 = arith.constant 0 : index
      %731 = vector.load %arg8[%c0_344, %c0_345, %c0_346] : memref<2x2x32xf32, #tpu.memory_space<vmem>>, vector<1x2x32xf32>
      %732 = vector.shape_cast %731 : vector<1x2x32xf32> to vector<2x32xf32>
      %733 = vector.shape_cast %730 : vector<2x32xf32> to vector<1x2x32xf32>
      tpu.vector_store %arg8[%c0_344, %c0_345, %c0_346], %733 {strides = array<i32>} : memref<2x2x32xf32, #tpu.memory_space<vmem>>, vector<1x2x32xf32>,
      %734 = vector.shape_cast %727 : vector<2x1xi1> to vector<2x1xi1>
      %735 = vector.broadcast %734 : vector<2x1xi1> to vector<2x32xi1>
      %736 = arith.select %735, %722, %677 : vector<2x32xi1>, vector<2x32xf32>
      %c0_347 = arith.constant 0 : index
      %c0_348 = arith.constant 0 : index
      %c0_349 = arith.constant 0 : index
      %737 = vector.load %arg9[%c0_347, %c0_348, %c0_349] : memref<2x2x32xf32, #tpu.memory_space<vmem>>, vector<1x2x32xf32>
      %738 = vector.shape_cast %737 : vector<1x2x32xf32> to vector<2x32xf32>
      %739 = vector.shape_cast %736 : vector<2x32xf32> to vector<1x2x32xf32>
      tpu.vector_store %arg9[%c0_347, %c0_348, %c0_349], %739 {strides = array<i32>} : memref<2x2x32xf32, #tpu.memory_space<vmem>>, vector<1x2x32xf32>,
      %cst_350 = arith.constant 0.000000e+00 : f32
      %740 = vector.shape_cast %727 : vector<2x1xi1> to vector<2x1xi1>
      %741 = vector.broadcast %740 : vector<2x1xi1> to vector<2x32xi1>
      %742 = vector.broadcast %cst_350 : f32 to vector<2x32xf32>
      %743 = arith.select %741, %724, %742 : vector<2x32xi1>, vector<2x32xf32>
      %744 = arith.index_cast %c5_i32 : i32 to index
      %c0_351 = arith.constant 0 : index
      %c0_352 = arith.constant 0 : index
      %745 = vector.load %arg6[%744, %c0_351, %c0_352] : memref<8x2x32xf32, #tpu.memory_space<vmem>>, vector<1x2x32xf32>
      %746 = vector.shape_cast %745 : vector<1x2x32xf32> to vector<2x32xf32>
      %747 = vector.shape_cast %743 : vector<2x32xf32> to vector<1x2x32xf32>
      tpu.vector_store %arg6[%744, %c0_351, %c0_352], %747 {strides = array<i32>} : memref<8x2x32xf32, #tpu.memory_space<vmem>>, vector<1x2x32xf32>,
      %748 = vector.extract_strided_slice %693 {offsets = [0, 0], sizes = [2, 32], strides = [1, 1]} : vector<2x128xf32> to vector<2x32xf32>
      %cst_353 = arith.constant 5.000000e-01 : f32
      %749 = vector.broadcast %cst_353 : f32 to vector<2x32xf32>
      %750 = arith.mulf %749, %748 : vector<2x32xf32>
      %751 = math.tanh %750 : vector<2x32xf32>
      %cst_354 = arith.constant 5.000000e-01 : f32
      %752 = vector.broadcast %cst_354 : f32 to vector<2x32xf32>
      %753 = arith.mulf %752, %751 : vector<2x32xf32>
      %cst_355 = arith.constant 5.000000e-01 : f32
      %754 = vector.broadcast %cst_355 : f32 to vector<2x32xf32>
      %755 = arith.addf %753, %754 : vector<2x32xf32>
      %756 = vector.extract_strided_slice %693 {offsets = [0, 32], sizes = [2, 32], strides = [1, 1]} : vector<2x128xf32> to vector<2x32xf32>
      %cst_356 = arith.constant 5.000000e-01 : f32
      %757 = vector.broadcast %cst_356 : f32 to vector<2x32xf32>
      %758 = arith.mulf %757, %756 : vector<2x32xf32>
      %759 = math.tanh %758 : vector<2x32xf32>
      %cst_357 = arith.constant 5.000000e-01 : f32
      %760 = vector.broadcast %cst_357 : f32 to vector<2x32xf32>
      %761 = arith.mulf %760, %759 : vector<2x32xf32>
      %cst_358 = arith.constant 5.000000e-01 : f32
      %762 = vector.broadcast %cst_358 : f32 to vector<2x32xf32>
      %763 = arith.addf %761, %762 : vector<2x32xf32>
      %764 = vector.extract_strided_slice %693 {offsets = [0, 64], sizes = [2, 32], strides = [1, 1]} : vector<2x128xf32> to vector<2x32xf32>
      %765 = math.tanh %764 : vector<2x32xf32>
      %766 = vector.extract_strided_slice %693 {offsets = [0, 96], sizes = [2, 32], strides = [1, 1]} : vector<2x128xf32> to vector<2x32xf32>
      %cst_359 = arith.constant 5.000000e-01 : f32
      %767 = vector.broadcast %cst_359 : f32 to vector<2x32xf32>
      %768 = arith.mulf %767, %766 : vector<2x32xf32>
      %769 = math.tanh %768 : vector<2x32xf32>
      %cst_360 = arith.constant 5.000000e-01 : f32
      %770 = vector.broadcast %cst_360 : f32 to vector<2x32xf32>
      %771 = arith.mulf %770, %769 : vector<2x32xf32>
      %cst_361 = arith.constant 5.000000e-01 : f32
      %772 = vector.broadcast %cst_361 : f32 to vector<2x32xf32>
      %773 = arith.addf %771, %772 : vector<2x32xf32>
      %774 = arith.mulf %763, %679 : vector<2x32xf32>
      %775 = arith.mulf %755, %765 : vector<2x32xf32>
      %776 = arith.addf %774, %775 : vector<2x32xf32>
      %777 = math.tanh %776 : vector<2x32xf32>
      %778 = arith.mulf %773, %777 : vector<2x32xf32>
      %779 = arith.addi %7, %671 : i32
      %780 = vector.broadcast %779 : i32 to vector<2x1xi32>
      %781 = arith.cmpi slt, %780, %1 : vector<2x1xi32>
      %782 = vector.shape_cast %781 : vector<2x1xi1> to vector<2x1xi1>
      %783 = vector.broadcast %782 : vector<2x1xi1> to vector<2x32xi1>
      %784 = arith.select %783, %778, %675 : vector<2x32xi1>, vector<2x32xf32>
      %c1_362 = arith.constant 1 : index
      %c0_363 = arith.constant 0 : index
      %c0_364 = arith.constant 0 : index
      %785 = vector.load %arg8[%c1_362, %c0_363, %c0_364] : memref<2x2x32xf32, #tpu.memory_space<vmem>>, vector<1x2x32xf32>
      %786 = vector.shape_cast %785 : vector<1x2x32xf32> to vector<2x32xf32>
      %787 = vector.shape_cast %784 : vector<2x32xf32> to vector<1x2x32xf32>
      tpu.vector_store %arg8[%c1_362, %c0_363, %c0_364], %787 {strides = array<i32>} : memref<2x2x32xf32, #tpu.memory_space<vmem>>, vector<1x2x32xf32>,
      %788 = vector.shape_cast %781 : vector<2x1xi1> to vector<2x1xi1>
      %789 = vector.broadcast %788 : vector<2x1xi1> to vector<2x32xi1>
      %790 = arith.select %789, %776, %679 : vector<2x32xi1>, vector<2x32xf32>
      %c1_365 = arith.constant 1 : index
      %c0_366 = arith.constant 0 : index
      %c0_367 = arith.constant 0 : index
      %791 = vector.load %arg9[%c1_365, %c0_366, %c0_367] : memref<2x2x32xf32, #tpu.memory_space<vmem>>, vector<1x2x32xf32>
      %792 = vector.shape_cast %791 : vector<1x2x32xf32> to vector<2x32xf32>
      %793 = vector.shape_cast %790 : vector<2x32xf32> to vector<1x2x32xf32>
      tpu.vector_store %arg9[%c1_365, %c0_366, %c0_367], %793 {strides = array<i32>} : memref<2x2x32xf32, #tpu.memory_space<vmem>>, vector<1x2x32xf32>,
      %cst_368 = arith.constant 0.000000e+00 : f32
      %794 = vector.shape_cast %781 : vector<2x1xi1> to vector<2x1xi1>
      %795 = vector.broadcast %794 : vector<2x1xi1> to vector<2x32xi1>
      %796 = vector.broadcast %cst_368 : f32 to vector<2x32xf32>
      %797 = arith.select %795, %778, %796 : vector<2x32xi1>, vector<2x32xf32>
      %798 = arith.index_cast %671 : i32 to index
      %c0_369 = arith.constant 0 : index
      %c0_370 = arith.constant 0 : index
      %799 = vector.load %arg7[%798, %c0_369, %c0_370] : memref<8x2x32xf32, #tpu.memory_space<vmem>>, vector<1x2x32xf32>
      %800 = vector.shape_cast %799 : vector<1x2x32xf32> to vector<2x32xf32>
      %801 = vector.shape_cast %797 : vector<2x32xf32> to vector<1x2x32xf32>
      tpu.vector_store %arg7[%798, %c0_369, %c0_370], %801 {strides = array<i32>} : memref<8x2x32xf32, #tpu.memory_space<vmem>>, vector<1x2x32xf32>,
      %c6_i32 = arith.constant 6 : i32
      %c7_i32_371 = arith.constant 7 : i32
      %802 = arith.subi %c7_i32_371, %c6_i32 : i32
      %c0_372 = arith.constant 0 : index
      %c0_373 = arith.constant 0 : index
      %c0_374 = arith.constant 0 : index
      %803 = vector.load %arg8[%c0_372, %c0_373, %c0_374] : memref<2x2x32xf32, #tpu.memory_space<vmem>>, vector<1x2x32xf32>
      %804 = vector.shape_cast %803 : vector<1x2x32xf32> to vector<2x32xf32>
      %c1_375 = arith.constant 1 : index
      %c0_376 = arith.constant 0 : index
      %c0_377 = arith.constant 0 : index
      %805 = vector.load %arg8[%c1_375, %c0_376, %c0_377] : memref<2x2x32xf32, #tpu.memory_space<vmem>>, vector<1x2x32xf32>
      %806 = vector.shape_cast %805 : vector<1x2x32xf32> to vector<2x32xf32>
      %c0_378 = arith.constant 0 : index
      %c0_379 = arith.constant 0 : index
      %c0_380 = arith.constant 0 : index
      %807 = vector.load %arg9[%c0_378, %c0_379, %c0_380] : memref<2x2x32xf32, #tpu.memory_space<vmem>>, vector<1x2x32xf32>
      %808 = vector.shape_cast %807 : vector<1x2x32xf32> to vector<2x32xf32>
      %c1_381 = arith.constant 1 : index
      %c0_382 = arith.constant 0 : index
      %c0_383 = arith.constant 0 : index
      %809 = vector.load %arg9[%c1_381, %c0_382, %c0_383] : memref<2x2x32xf32, #tpu.memory_space<vmem>>, vector<1x2x32xf32>
      %810 = vector.shape_cast %809 : vector<1x2x32xf32> to vector<2x32xf32>
      %811 = arith.index_cast %c6_i32 : i32 to index
      %c0_384 = arith.constant 0 : index
      %c0_385 = arith.constant 0 : index
      %812 = vector.load %arg4[%811, %c0_384, %c0_385] : memref<8x2x128xf32, #tpu.memory_space<vmem>>, vector<1x2x128xf32>
      %813 = vector.shape_cast %812 : vector<1x2x128xf32> to vector<2x128xf32>
      %c0_386 = arith.constant 0 : index
      %c0_387 = arith.constant 0 : index
      %c0_388 = arith.constant 0 : index
      %814 = vector.load %arg3[%c0_386, %c0_387, %c0_388] : memref<2x32x128xf32, #tpu.memory_space<vmem>>, vector<1x32x128xf32>
      %815 = vector.shape_cast %814 : vector<1x32x128xf32> to vector<32x128xf32>
      %cst_389 = arith.constant dense<0.000000e+00> : vector<2x128xf32>
      %816 = tpu.matmul %804, %815, %cst_389 {dimension_numbers = #tpu.dot_dimension_numbers<[1], [0], [0], [1], [0, 0, 1, 1], [], []>} : vector<2x32xf32>, vector<32x128xf32>, vector<2x128xf32> -> vector<2x128xf32>
      %817 = arith.addf %813, %816 : vector<2x128xf32>
      %818 = arith.index_cast %802 : i32 to index
      %c0_390 = arith.constant 0 : index
      %c0_391 = arith.constant 0 : index
      %819 = vector.load %arg5[%818, %c0_390, %c0_391] : memref<8x2x128xf32, #tpu.memory_space<vmem>>, vector<1x2x128xf32>
      %820 = vector.shape_cast %819 : vector<1x2x128xf32> to vector<2x128xf32>
      %c1_392 = arith.constant 1 : index
      %c0_393 = arith.constant 0 : index
      %c0_394 = arith.constant 0 : index
      %821 = vector.load %arg3[%c1_392, %c0_393, %c0_394] : memref<2x32x128xf32, #tpu.memory_space<vmem>>, vector<1x32x128xf32>
      %822 = vector.shape_cast %821 : vector<1x32x128xf32> to vector<32x128xf32>
      %cst_395 = arith.constant dense<0.000000e+00> : vector<2x128xf32>
      %823 = tpu.matmul %806, %822, %cst_395 {dimension_numbers = #tpu.dot_dimension_numbers<[1], [0], [0], [1], [0, 0, 1, 1], [], []>} : vector<2x32xf32>, vector<32x128xf32>, vector<2x128xf32> -> vector<2x128xf32>
      %824 = arith.addf %820, %823 : vector<2x128xf32>
      %825 = vector.extract_strided_slice %817 {offsets = [0, 0], sizes = [2, 32], strides = [1, 1]} : vector<2x128xf32> to vector<2x32xf32>
      %cst_396 = arith.constant 5.000000e-01 : f32
      %826 = vector.broadcast %cst_396 : f32 to vector<2x32xf32>
      %827 = arith.mulf %826, %825 : vector<2x32xf32>
      %828 = math.tanh %827 : vector<2x32xf32>
      %cst_397 = arith.constant 5.000000e-01 : f32
      %829 = vector.broadcast %cst_397 : f32 to vector<2x32xf32>
      %830 = arith.mulf %829, %828 : vector<2x32xf32>
      %cst_398 = arith.constant 5.000000e-01 : f32
      %831 = vector.broadcast %cst_398 : f32 to vector<2x32xf32>
      %832 = arith.addf %830, %831 : vector<2x32xf32>
      %833 = vector.extract_strided_slice %817 {offsets = [0, 32], sizes = [2, 32], strides = [1, 1]} : vector<2x128xf32> to vector<2x32xf32>
      %cst_399 = arith.constant 5.000000e-01 : f32
      %834 = vector.broadcast %cst_399 : f32 to vector<2x32xf32>
      %835 = arith.mulf %834, %833 : vector<2x32xf32>
      %836 = math.tanh %835 : vector<2x32xf32>
      %cst_400 = arith.constant 5.000000e-01 : f32
      %837 = vector.broadcast %cst_400 : f32 to vector<2x32xf32>
      %838 = arith.mulf %837, %836 : vector<2x32xf32>
      %cst_401 = arith.constant 5.000000e-01 : f32
      %839 = vector.broadcast %cst_401 : f32 to vector<2x32xf32>
      %840 = arith.addf %838, %839 : vector<2x32xf32>
      %841 = vector.extract_strided_slice %817 {offsets = [0, 64], sizes = [2, 32], strides = [1, 1]} : vector<2x128xf32> to vector<2x32xf32>
      %842 = math.tanh %841 : vector<2x32xf32>
      %843 = vector.extract_strided_slice %817 {offsets = [0, 96], sizes = [2, 32], strides = [1, 1]} : vector<2x128xf32> to vector<2x32xf32>
      %cst_402 = arith.constant 5.000000e-01 : f32
      %844 = vector.broadcast %cst_402 : f32 to vector<2x32xf32>
      %845 = arith.mulf %844, %843 : vector<2x32xf32>
      %846 = math.tanh %845 : vector<2x32xf32>
      %cst_403 = arith.constant 5.000000e-01 : f32
      %847 = vector.broadcast %cst_403 : f32 to vector<2x32xf32>
      %848 = arith.mulf %847, %846 : vector<2x32xf32>
      %cst_404 = arith.constant 5.000000e-01 : f32
      %849 = vector.broadcast %cst_404 : f32 to vector<2x32xf32>
      %850 = arith.addf %848, %849 : vector<2x32xf32>
      %851 = arith.mulf %840, %808 : vector<2x32xf32>
      %852 = arith.mulf %832, %842 : vector<2x32xf32>
      %853 = arith.addf %851, %852 : vector<2x32xf32>
      %854 = math.tanh %853 : vector<2x32xf32>
      %855 = arith.mulf %850, %854 : vector<2x32xf32>
      %856 = arith.addi %5, %c6_i32 : i32
      %857 = vector.broadcast %856 : i32 to vector<2x1xi32>
      %858 = arith.cmpi slt, %857, %1 : vector<2x1xi32>
      %859 = vector.shape_cast %858 : vector<2x1xi1> to vector<2x1xi1>
      %860 = vector.broadcast %859 : vector<2x1xi1> to vector<2x32xi1>
      %861 = arith.select %860, %855, %804 : vector<2x32xi1>, vector<2x32xf32>
      %c0_405 = arith.constant 0 : index
      %c0_406 = arith.constant 0 : index
      %c0_407 = arith.constant 0 : index
      %862 = vector.load %arg8[%c0_405, %c0_406, %c0_407] : memref<2x2x32xf32, #tpu.memory_space<vmem>>, vector<1x2x32xf32>
      %863 = vector.shape_cast %862 : vector<1x2x32xf32> to vector<2x32xf32>
      %864 = vector.shape_cast %861 : vector<2x32xf32> to vector<1x2x32xf32>
      tpu.vector_store %arg8[%c0_405, %c0_406, %c0_407], %864 {strides = array<i32>} : memref<2x2x32xf32, #tpu.memory_space<vmem>>, vector<1x2x32xf32>,
      %865 = vector.shape_cast %858 : vector<2x1xi1> to vector<2x1xi1>
      %866 = vector.broadcast %865 : vector<2x1xi1> to vector<2x32xi1>
      %867 = arith.select %866, %853, %808 : vector<2x32xi1>, vector<2x32xf32>
      %c0_408 = arith.constant 0 : index
      %c0_409 = arith.constant 0 : index
      %c0_410 = arith.constant 0 : index
      %868 = vector.load %arg9[%c0_408, %c0_409, %c0_410] : memref<2x2x32xf32, #tpu.memory_space<vmem>>, vector<1x2x32xf32>
      %869 = vector.shape_cast %868 : vector<1x2x32xf32> to vector<2x32xf32>
      %870 = vector.shape_cast %867 : vector<2x32xf32> to vector<1x2x32xf32>
      tpu.vector_store %arg9[%c0_408, %c0_409, %c0_410], %870 {strides = array<i32>} : memref<2x2x32xf32, #tpu.memory_space<vmem>>, vector<1x2x32xf32>,
      %cst_411 = arith.constant 0.000000e+00 : f32
      %871 = vector.shape_cast %858 : vector<2x1xi1> to vector<2x1xi1>
      %872 = vector.broadcast %871 : vector<2x1xi1> to vector<2x32xi1>
      %873 = vector.broadcast %cst_411 : f32 to vector<2x32xf32>
      %874 = arith.select %872, %855, %873 : vector<2x32xi1>, vector<2x32xf32>
      %875 = arith.index_cast %c6_i32 : i32 to index
      %c0_412 = arith.constant 0 : index
      %c0_413 = arith.constant 0 : index
      %876 = vector.load %arg6[%875, %c0_412, %c0_413] : memref<8x2x32xf32, #tpu.memory_space<vmem>>, vector<1x2x32xf32>
      %877 = vector.shape_cast %876 : vector<1x2x32xf32> to vector<2x32xf32>
      %878 = vector.shape_cast %874 : vector<2x32xf32> to vector<1x2x32xf32>
      tpu.vector_store %arg6[%875, %c0_412, %c0_413], %878 {strides = array<i32>} : memref<8x2x32xf32, #tpu.memory_space<vmem>>, vector<1x2x32xf32>,
      %879 = vector.extract_strided_slice %824 {offsets = [0, 0], sizes = [2, 32], strides = [1, 1]} : vector<2x128xf32> to vector<2x32xf32>
      %cst_414 = arith.constant 5.000000e-01 : f32
      %880 = vector.broadcast %cst_414 : f32 to vector<2x32xf32>
      %881 = arith.mulf %880, %879 : vector<2x32xf32>
      %882 = math.tanh %881 : vector<2x32xf32>
      %cst_415 = arith.constant 5.000000e-01 : f32
      %883 = vector.broadcast %cst_415 : f32 to vector<2x32xf32>
      %884 = arith.mulf %883, %882 : vector<2x32xf32>
      %cst_416 = arith.constant 5.000000e-01 : f32
      %885 = vector.broadcast %cst_416 : f32 to vector<2x32xf32>
      %886 = arith.addf %884, %885 : vector<2x32xf32>
      %887 = vector.extract_strided_slice %824 {offsets = [0, 32], sizes = [2, 32], strides = [1, 1]} : vector<2x128xf32> to vector<2x32xf32>
      %cst_417 = arith.constant 5.000000e-01 : f32
      %888 = vector.broadcast %cst_417 : f32 to vector<2x32xf32>
      %889 = arith.mulf %888, %887 : vector<2x32xf32>
      %890 = math.tanh %889 : vector<2x32xf32>
      %cst_418 = arith.constant 5.000000e-01 : f32
      %891 = vector.broadcast %cst_418 : f32 to vector<2x32xf32>
      %892 = arith.mulf %891, %890 : vector<2x32xf32>
      %cst_419 = arith.constant 5.000000e-01 : f32
      %893 = vector.broadcast %cst_419 : f32 to vector<2x32xf32>
      %894 = arith.addf %892, %893 : vector<2x32xf32>
      %895 = vector.extract_strided_slice %824 {offsets = [0, 64], sizes = [2, 32], strides = [1, 1]} : vector<2x128xf32> to vector<2x32xf32>
      %896 = math.tanh %895 : vector<2x32xf32>
      %897 = vector.extract_strided_slice %824 {offsets = [0, 96], sizes = [2, 32], strides = [1, 1]} : vector<2x128xf32> to vector<2x32xf32>
      %cst_420 = arith.constant 5.000000e-01 : f32
      %898 = vector.broadcast %cst_420 : f32 to vector<2x32xf32>
      %899 = arith.mulf %898, %897 : vector<2x32xf32>
      %900 = math.tanh %899 : vector<2x32xf32>
      %cst_421 = arith.constant 5.000000e-01 : f32
      %901 = vector.broadcast %cst_421 : f32 to vector<2x32xf32>
      %902 = arith.mulf %901, %900 : vector<2x32xf32>
      %cst_422 = arith.constant 5.000000e-01 : f32
      %903 = vector.broadcast %cst_422 : f32 to vector<2x32xf32>
      %904 = arith.addf %902, %903 : vector<2x32xf32>
      %905 = arith.mulf %894, %810 : vector<2x32xf32>
      %906 = arith.mulf %886, %896 : vector<2x32xf32>
      %907 = arith.addf %905, %906 : vector<2x32xf32>
      %908 = math.tanh %907 : vector<2x32xf32>
      %909 = arith.mulf %904, %908 : vector<2x32xf32>
      %910 = arith.addi %7, %802 : i32
      %911 = vector.broadcast %910 : i32 to vector<2x1xi32>
      %912 = arith.cmpi slt, %911, %1 : vector<2x1xi32>
      %913 = vector.shape_cast %912 : vector<2x1xi1> to vector<2x1xi1>
      %914 = vector.broadcast %913 : vector<2x1xi1> to vector<2x32xi1>
      %915 = arith.select %914, %909, %806 : vector<2x32xi1>, vector<2x32xf32>
      %c1_423 = arith.constant 1 : index
      %c0_424 = arith.constant 0 : index
      %c0_425 = arith.constant 0 : index
      %916 = vector.load %arg8[%c1_423, %c0_424, %c0_425] : memref<2x2x32xf32, #tpu.memory_space<vmem>>, vector<1x2x32xf32>
      %917 = vector.shape_cast %916 : vector<1x2x32xf32> to vector<2x32xf32>
      %918 = vector.shape_cast %915 : vector<2x32xf32> to vector<1x2x32xf32>
      tpu.vector_store %arg8[%c1_423, %c0_424, %c0_425], %918 {strides = array<i32>} : memref<2x2x32xf32, #tpu.memory_space<vmem>>, vector<1x2x32xf32>,
      %919 = vector.shape_cast %912 : vector<2x1xi1> to vector<2x1xi1>
      %920 = vector.broadcast %919 : vector<2x1xi1> to vector<2x32xi1>
      %921 = arith.select %920, %907, %810 : vector<2x32xi1>, vector<2x32xf32>
      %c1_426 = arith.constant 1 : index
      %c0_427 = arith.constant 0 : index
      %c0_428 = arith.constant 0 : index
      %922 = vector.load %arg9[%c1_426, %c0_427, %c0_428] : memref<2x2x32xf32, #tpu.memory_space<vmem>>, vector<1x2x32xf32>
      %923 = vector.shape_cast %922 : vector<1x2x32xf32> to vector<2x32xf32>
      %924 = vector.shape_cast %921 : vector<2x32xf32> to vector<1x2x32xf32>
      tpu.vector_store %arg9[%c1_426, %c0_427, %c0_428], %924 {strides = array<i32>} : memref<2x2x32xf32, #tpu.memory_space<vmem>>, vector<1x2x32xf32>,
      %cst_429 = arith.constant 0.000000e+00 : f32
      %925 = vector.shape_cast %912 : vector<2x1xi1> to vector<2x1xi1>
      %926 = vector.broadcast %925 : vector<2x1xi1> to vector<2x32xi1>
      %927 = vector.broadcast %cst_429 : f32 to vector<2x32xf32>
      %928 = arith.select %926, %909, %927 : vector<2x32xi1>, vector<2x32xf32>
      %929 = arith.index_cast %802 : i32 to index
      %c0_430 = arith.constant 0 : index
      %c0_431 = arith.constant 0 : index
      %930 = vector.load %arg7[%929, %c0_430, %c0_431] : memref<8x2x32xf32, #tpu.memory_space<vmem>>, vector<1x2x32xf32>
      %931 = vector.shape_cast %930 : vector<1x2x32xf32> to vector<2x32xf32>
      %932 = vector.shape_cast %928 : vector<2x32xf32> to vector<1x2x32xf32>
      tpu.vector_store %arg7[%929, %c0_430, %c0_431], %932 {strides = array<i32>} : memref<8x2x32xf32, #tpu.memory_space<vmem>>, vector<1x2x32xf32>,
      %c7_i32_432 = arith.constant 7 : i32
      %c7_i32_433 = arith.constant 7 : i32
      %933 = arith.subi %c7_i32_433, %c7_i32_432 : i32
      %c0_434 = arith.constant 0 : index
      %c0_435 = arith.constant 0 : index
      %c0_436 = arith.constant 0 : index
      %934 = vector.load %arg8[%c0_434, %c0_435, %c0_436] : memref<2x2x32xf32, #tpu.memory_space<vmem>>, vector<1x2x32xf32>
      %935 = vector.shape_cast %934 : vector<1x2x32xf32> to vector<2x32xf32>
      %c1_437 = arith.constant 1 : index
      %c0_438 = arith.constant 0 : index
      %c0_439 = arith.constant 0 : index
      %936 = vector.load %arg8[%c1_437, %c0_438, %c0_439] : memref<2x2x32xf32, #tpu.memory_space<vmem>>, vector<1x2x32xf32>
      %937 = vector.shape_cast %936 : vector<1x2x32xf32> to vector<2x32xf32>
      %c0_440 = arith.constant 0 : index
      %c0_441 = arith.constant 0 : index
      %c0_442 = arith.constant 0 : index
      %938 = vector.load %arg9[%c0_440, %c0_441, %c0_442] : memref<2x2x32xf32, #tpu.memory_space<vmem>>, vector<1x2x32xf32>
      %939 = vector.shape_cast %938 : vector<1x2x32xf32> to vector<2x32xf32>
      %c1_443 = arith.constant 1 : index
      %c0_444 = arith.constant 0 : index
      %c0_445 = arith.constant 0 : index
      %940 = vector.load %arg9[%c1_443, %c0_444, %c0_445] : memref<2x2x32xf32, #tpu.memory_space<vmem>>, vector<1x2x32xf32>
      %941 = vector.shape_cast %940 : vector<1x2x32xf32> to vector<2x32xf32>
      %942 = arith.index_cast %c7_i32_432 : i32 to index
      %c0_446 = arith.constant 0 : index
      %c0_447 = arith.constant 0 : index
      %943 = vector.load %arg4[%942, %c0_446, %c0_447] : memref<8x2x128xf32, #tpu.memory_space<vmem>>, vector<1x2x128xf32>
      %944 = vector.shape_cast %943 : vector<1x2x128xf32> to vector<2x128xf32>
      %c0_448 = arith.constant 0 : index
      %c0_449 = arith.constant 0 : index
      %c0_450 = arith.constant 0 : index
      %945 = vector.load %arg3[%c0_448, %c0_449, %c0_450] : memref<2x32x128xf32, #tpu.memory_space<vmem>>, vector<1x32x128xf32>
      %946 = vector.shape_cast %945 : vector<1x32x128xf32> to vector<32x128xf32>
      %cst_451 = arith.constant dense<0.000000e+00> : vector<2x128xf32>
      %947 = tpu.matmul %935, %946, %cst_451 {dimension_numbers = #tpu.dot_dimension_numbers<[1], [0], [0], [1], [0, 0, 1, 1], [], []>} : vector<2x32xf32>, vector<32x128xf32>, vector<2x128xf32> -> vector<2x128xf32>
      %948 = arith.addf %944, %947 : vector<2x128xf32>
      %949 = arith.index_cast %933 : i32 to index
      %c0_452 = arith.constant 0 : index
      %c0_453 = arith.constant 0 : index
      %950 = vector.load %arg5[%949, %c0_452, %c0_453] : memref<8x2x128xf32, #tpu.memory_space<vmem>>, vector<1x2x128xf32>
      %951 = vector.shape_cast %950 : vector<1x2x128xf32> to vector<2x128xf32>
      %c1_454 = arith.constant 1 : index
      %c0_455 = arith.constant 0 : index
      %c0_456 = arith.constant 0 : index
      %952 = vector.load %arg3[%c1_454, %c0_455, %c0_456] : memref<2x32x128xf32, #tpu.memory_space<vmem>>, vector<1x32x128xf32>
      %953 = vector.shape_cast %952 : vector<1x32x128xf32> to vector<32x128xf32>
      %cst_457 = arith.constant dense<0.000000e+00> : vector<2x128xf32>
      %954 = tpu.matmul %937, %953, %cst_457 {dimension_numbers = #tpu.dot_dimension_numbers<[1], [0], [0], [1], [0, 0, 1, 1], [], []>} : vector<2x32xf32>, vector<32x128xf32>, vector<2x128xf32> -> vector<2x128xf32>
      %955 = arith.addf %951, %954 : vector<2x128xf32>
      %956 = vector.extract_strided_slice %948 {offsets = [0, 0], sizes = [2, 32], strides = [1, 1]} : vector<2x128xf32> to vector<2x32xf32>
      %cst_458 = arith.constant 5.000000e-01 : f32
      %957 = vector.broadcast %cst_458 : f32 to vector<2x32xf32>
      %958 = arith.mulf %957, %956 : vector<2x32xf32>
      %959 = math.tanh %958 : vector<2x32xf32>
      %cst_459 = arith.constant 5.000000e-01 : f32
      %960 = vector.broadcast %cst_459 : f32 to vector<2x32xf32>
      %961 = arith.mulf %960, %959 : vector<2x32xf32>
      %cst_460 = arith.constant 5.000000e-01 : f32
      %962 = vector.broadcast %cst_460 : f32 to vector<2x32xf32>
      %963 = arith.addf %961, %962 : vector<2x32xf32>
      %964 = vector.extract_strided_slice %948 {offsets = [0, 32], sizes = [2, 32], strides = [1, 1]} : vector<2x128xf32> to vector<2x32xf32>
      %cst_461 = arith.constant 5.000000e-01 : f32
      %965 = vector.broadcast %cst_461 : f32 to vector<2x32xf32>
      %966 = arith.mulf %965, %964 : vector<2x32xf32>
      %967 = math.tanh %966 : vector<2x32xf32>
      %cst_462 = arith.constant 5.000000e-01 : f32
      %968 = vector.broadcast %cst_462 : f32 to vector<2x32xf32>
      %969 = arith.mulf %968, %967 : vector<2x32xf32>
      %cst_463 = arith.constant 5.000000e-01 : f32
      %970 = vector.broadcast %cst_463 : f32 to vector<2x32xf32>
      %971 = arith.addf %969, %970 : vector<2x32xf32>
      %972 = vector.extract_strided_slice %948 {offsets = [0, 64], sizes = [2, 32], strides = [1, 1]} : vector<2x128xf32> to vector<2x32xf32>
      %973 = math.tanh %972 : vector<2x32xf32>
      %974 = vector.extract_strided_slice %948 {offsets = [0, 96], sizes = [2, 32], strides = [1, 1]} : vector<2x128xf32> to vector<2x32xf32>
      %cst_464 = arith.constant 5.000000e-01 : f32
      %975 = vector.broadcast %cst_464 : f32 to vector<2x32xf32>
      %976 = arith.mulf %975, %974 : vector<2x32xf32>
      %977 = math.tanh %976 : vector<2x32xf32>
      %cst_465 = arith.constant 5.000000e-01 : f32
      %978 = vector.broadcast %cst_465 : f32 to vector<2x32xf32>
      %979 = arith.mulf %978, %977 : vector<2x32xf32>
      %cst_466 = arith.constant 5.000000e-01 : f32
      %980 = vector.broadcast %cst_466 : f32 to vector<2x32xf32>
      %981 = arith.addf %979, %980 : vector<2x32xf32>
      %982 = arith.mulf %971, %939 : vector<2x32xf32>
      %983 = arith.mulf %963, %973 : vector<2x32xf32>
      %984 = arith.addf %982, %983 : vector<2x32xf32>
      %985 = math.tanh %984 : vector<2x32xf32>
      %986 = arith.mulf %981, %985 : vector<2x32xf32>
      %987 = arith.addi %5, %c7_i32_432 : i32
      %988 = vector.broadcast %987 : i32 to vector<2x1xi32>
      %989 = arith.cmpi slt, %988, %1 : vector<2x1xi32>
      %990 = vector.shape_cast %989 : vector<2x1xi1> to vector<2x1xi1>
      %991 = vector.broadcast %990 : vector<2x1xi1> to vector<2x32xi1>
      %992 = arith.select %991, %986, %935 : vector<2x32xi1>, vector<2x32xf32>
      %c0_467 = arith.constant 0 : index
      %c0_468 = arith.constant 0 : index
      %c0_469 = arith.constant 0 : index
      %993 = vector.load %arg8[%c0_467, %c0_468, %c0_469] : memref<2x2x32xf32, #tpu.memory_space<vmem>>, vector<1x2x32xf32>
      %994 = vector.shape_cast %993 : vector<1x2x32xf32> to vector<2x32xf32>
      %995 = vector.shape_cast %992 : vector<2x32xf32> to vector<1x2x32xf32>
      tpu.vector_store %arg8[%c0_467, %c0_468, %c0_469], %995 {strides = array<i32>} : memref<2x2x32xf32, #tpu.memory_space<vmem>>, vector<1x2x32xf32>,
      %996 = vector.shape_cast %989 : vector<2x1xi1> to vector<2x1xi1>
      %997 = vector.broadcast %996 : vector<2x1xi1> to vector<2x32xi1>
      %998 = arith.select %997, %984, %939 : vector<2x32xi1>, vector<2x32xf32>
      %c0_470 = arith.constant 0 : index
      %c0_471 = arith.constant 0 : index
      %c0_472 = arith.constant 0 : index
      %999 = vector.load %arg9[%c0_470, %c0_471, %c0_472] : memref<2x2x32xf32, #tpu.memory_space<vmem>>, vector<1x2x32xf32>
      %1000 = vector.shape_cast %999 : vector<1x2x32xf32> to vector<2x32xf32>
      %1001 = vector.shape_cast %998 : vector<2x32xf32> to vector<1x2x32xf32>
      tpu.vector_store %arg9[%c0_470, %c0_471, %c0_472], %1001 {strides = array<i32>} : memref<2x2x32xf32, #tpu.memory_space<vmem>>, vector<1x2x32xf32>,
      %cst_473 = arith.constant 0.000000e+00 : f32
      %1002 = vector.shape_cast %989 : vector<2x1xi1> to vector<2x1xi1>
      %1003 = vector.broadcast %1002 : vector<2x1xi1> to vector<2x32xi1>
      %1004 = vector.broadcast %cst_473 : f32 to vector<2x32xf32>
      %1005 = arith.select %1003, %986, %1004 : vector<2x32xi1>, vector<2x32xf32>
      %1006 = arith.index_cast %c7_i32_432 : i32 to index
      %c0_474 = arith.constant 0 : index
      %c0_475 = arith.constant 0 : index
      %1007 = vector.load %arg6[%1006, %c0_474, %c0_475] : memref<8x2x32xf32, #tpu.memory_space<vmem>>, vector<1x2x32xf32>
      %1008 = vector.shape_cast %1007 : vector<1x2x32xf32> to vector<2x32xf32>
      %1009 = vector.shape_cast %1005 : vector<2x32xf32> to vector<1x2x32xf32>
      tpu.vector_store %arg6[%1006, %c0_474, %c0_475], %1009 {strides = array<i32>} : memref<8x2x32xf32, #tpu.memory_space<vmem>>, vector<1x2x32xf32>,
      %1010 = vector.extract_strided_slice %955 {offsets = [0, 0], sizes = [2, 32], strides = [1, 1]} : vector<2x128xf32> to vector<2x32xf32>
      %cst_476 = arith.constant 5.000000e-01 : f32
      %1011 = vector.broadcast %cst_476 : f32 to vector<2x32xf32>
      %1012 = arith.mulf %1011, %1010 : vector<2x32xf32>
      %1013 = math.tanh %1012 : vector<2x32xf32>
      %cst_477 = arith.constant 5.000000e-01 : f32
      %1014 = vector.broadcast %cst_477 : f32 to vector<2x32xf32>
      %1015 = arith.mulf %1014, %1013 : vector<2x32xf32>
      %cst_478 = arith.constant 5.000000e-01 : f32
      %1016 = vector.broadcast %cst_478 : f32 to vector<2x32xf32>
      %1017 = arith.addf %1015, %1016 : vector<2x32xf32>
      %1018 = vector.extract_strided_slice %955 {offsets = [0, 32], sizes = [2, 32], strides = [1, 1]} : vector<2x128xf32> to vector<2x32xf32>
      %cst_479 = arith.constant 5.000000e-01 : f32
      %1019 = vector.broadcast %cst_479 : f32 to vector<2x32xf32>
      %1020 = arith.mulf %1019, %1018 : vector<2x32xf32>
      %1021 = math.tanh %1020 : vector<2x32xf32>
      %cst_480 = arith.constant 5.000000e-01 : f32
      %1022 = vector.broadcast %cst_480 : f32 to vector<2x32xf32>
      %1023 = arith.mulf %1022, %1021 : vector<2x32xf32>
      %cst_481 = arith.constant 5.000000e-01 : f32
      %1024 = vector.broadcast %cst_481 : f32 to vector<2x32xf32>
      %1025 = arith.addf %1023, %1024 : vector<2x32xf32>
      %1026 = vector.extract_strided_slice %955 {offsets = [0, 64], sizes = [2, 32], strides = [1, 1]} : vector<2x128xf32> to vector<2x32xf32>
      %1027 = math.tanh %1026 : vector<2x32xf32>
      %1028 = vector.extract_strided_slice %955 {offsets = [0, 96], sizes = [2, 32], strides = [1, 1]} : vector<2x128xf32> to vector<2x32xf32>
      %cst_482 = arith.constant 5.000000e-01 : f32
      %1029 = vector.broadcast %cst_482 : f32 to vector<2x32xf32>
      %1030 = arith.mulf %1029, %1028 : vector<2x32xf32>
      %1031 = math.tanh %1030 : vector<2x32xf32>
      %cst_483 = arith.constant 5.000000e-01 : f32
      %1032 = vector.broadcast %cst_483 : f32 to vector<2x32xf32>
      %1033 = arith.mulf %1032, %1031 : vector<2x32xf32>
      %cst_484 = arith.constant 5.000000e-01 : f32
      %1034 = vector.broadcast %cst_484 : f32 to vector<2x32xf32>
      %1035 = arith.addf %1033, %1034 : vector<2x32xf32>
      %1036 = arith.mulf %1025, %941 : vector<2x32xf32>
      %1037 = arith.mulf %1017, %1027 : vector<2x32xf32>
      %1038 = arith.addf %1036, %1037 : vector<2x32xf32>
      %1039 = math.tanh %1038 : vector<2x32xf32>
      %1040 = arith.mulf %1035, %1039 : vector<2x32xf32>
      %1041 = arith.addi %7, %933 : i32
      %1042 = vector.broadcast %1041 : i32 to vector<2x1xi32>
      %1043 = arith.cmpi slt, %1042, %1 : vector<2x1xi32>
      %1044 = vector.shape_cast %1043 : vector<2x1xi1> to vector<2x1xi1>
      %1045 = vector.broadcast %1044 : vector<2x1xi1> to vector<2x32xi1>
      %1046 = arith.select %1045, %1040, %937 : vector<2x32xi1>, vector<2x32xf32>
      %c1_485 = arith.constant 1 : index
      %c0_486 = arith.constant 0 : index
      %c0_487 = arith.constant 0 : index
      %1047 = vector.load %arg8[%c1_485, %c0_486, %c0_487] : memref<2x2x32xf32, #tpu.memory_space<vmem>>, vector<1x2x32xf32>
      %1048 = vector.shape_cast %1047 : vector<1x2x32xf32> to vector<2x32xf32>
      %1049 = vector.shape_cast %1046 : vector<2x32xf32> to vector<1x2x32xf32>
      tpu.vector_store %arg8[%c1_485, %c0_486, %c0_487], %1049 {strides = array<i32>} : memref<2x2x32xf32, #tpu.memory_space<vmem>>, vector<1x2x32xf32>,
      %1050 = vector.shape_cast %1043 : vector<2x1xi1> to vector<2x1xi1>
      %1051 = vector.broadcast %1050 : vector<2x1xi1> to vector<2x32xi1>
      %1052 = arith.select %1051, %1038, %941 : vector<2x32xi1>, vector<2x32xf32>
      %c1_488 = arith.constant 1 : index
      %c0_489 = arith.constant 0 : index
      %c0_490 = arith.constant 0 : index
      %1053 = vector.load %arg9[%c1_488, %c0_489, %c0_490] : memref<2x2x32xf32, #tpu.memory_space<vmem>>, vector<1x2x32xf32>
      %1054 = vector.shape_cast %1053 : vector<1x2x32xf32> to vector<2x32xf32>
      %1055 = vector.shape_cast %1052 : vector<2x32xf32> to vector<1x2x32xf32>
      tpu.vector_store %arg9[%c1_488, %c0_489, %c0_490], %1055 {strides = array<i32>} : memref<2x2x32xf32, #tpu.memory_space<vmem>>, vector<1x2x32xf32>,
      %cst_491 = arith.constant 0.000000e+00 : f32
      %1056 = vector.shape_cast %1043 : vector<2x1xi1> to vector<2x1xi1>
      %1057 = vector.broadcast %1056 : vector<2x1xi1> to vector<2x32xi1>
      %1058 = vector.broadcast %cst_491 : f32 to vector<2x32xf32>
      %1059 = arith.select %1057, %1040, %1058 : vector<2x32xi1>, vector<2x32xf32>
      %1060 = arith.index_cast %933 : i32 to index
      %c0_492 = arith.constant 0 : index
      %c0_493 = arith.constant 0 : index
      %1061 = vector.load %arg7[%1060, %c0_492, %c0_493] : memref<8x2x32xf32, #tpu.memory_space<vmem>>, vector<1x2x32xf32>
      %1062 = vector.shape_cast %1061 : vector<1x2x32xf32> to vector<2x32xf32>
      %1063 = vector.shape_cast %1059 : vector<2x32xf32> to vector<1x2x32xf32>
      tpu.vector_store %arg7[%1060, %c0_492, %c0_493], %1063 {strides = array<i32>} : memref<8x2x32xf32, #tpu.memory_space<vmem>>, vector<1x2x32xf32>,
      %c8_i32_494 = arith.constant 8 : i32
    } else {
    }
    %true = arith.constant true
    %13 = arith.xori %10, %true : i1
    %14 = arith.extui %13 : i1 to i32
    %c0_i32_6 = arith.constant 0 : i32
    %15 = arith.cmpi ne, %14, %c0_i32_6 : i32
    scf.if %15 {
      %cst = arith.constant 0.000000e+00 : f32
      %16 = vector.broadcast %cst : f32 to vector<8x2x32xf32>
      %c0_7 = arith.constant 0 : index
      %c0_8 = arith.constant 0 : index
      %c0_9 = arith.constant 0 : index
      %17 = vector.load %arg6[%c0_7, %c0_8, %c0_9] : memref<8x2x32xf32, #tpu.memory_space<vmem>>, vector<8x2x32xf32>
      tpu.vector_store %arg6[%c0_7, %c0_8, %c0_9], %16 {strides = array<i32>} : memref<8x2x32xf32, #tpu.memory_space<vmem>>, vector<8x2x32xf32>,
      %cst_10 = arith.constant 0.000000e+00 : f32
      %18 = vector.broadcast %cst_10 : f32 to vector<8x2x32xf32>
      %c0_11 = arith.constant 0 : index
      %c0_12 = arith.constant 0 : index
      %c0_13 = arith.constant 0 : index
      %19 = vector.load %arg7[%c0_11, %c0_12, %c0_13] : memref<8x2x32xf32, #tpu.memory_space<vmem>>, vector<8x2x32xf32>
      tpu.vector_store %arg7[%c0_11, %c0_12, %c0_13], %18 {strides = array<i32>} : memref<8x2x32xf32, #tpu.memory_space<vmem>>, vector<8x2x32xf32>,
    } else {
    }
    return
  }
  func.func @transform_0(%arg0: i32, %arg1: memref<2xi32, #tpu.memory_space<smem>>) -> (i32, i32) {
    %c0_i32 = arith.constant 0 : i32
    %c0_i32_0 = arith.constant 0 : i32
    %c0_i32_1 = arith.constant 0 : i32
    return %c0_i32, %c0_i32_0 : i32, i32
  }
  func.func @transform_1(%arg0: i32, %arg1: memref<2xi32, #tpu.memory_space<smem>>) -> (i32, i32, i32) {
    %c0_i32 = arith.constant 0 : i32
    %c0_i32_0 = arith.constant 0 : i32
    %c0_i32_1 = arith.constant 0 : i32
    %c0_i32_2 = arith.constant 0 : i32
    return %c0_i32, %c0_i32_0, %c0_i32_1 : i32, i32, i32
  }
  func.func @transform_2(%arg0: i32, %arg1: memref<2xi32, #tpu.memory_space<smem>>) -> (i32, i32, i32) {
    %c0_i32 = arith.constant 0 : i32
    %c0_i32_0 = arith.constant 0 : i32
    %c0_i32_1 = arith.constant 0 : i32
    return %arg0, %c0_i32, %c0_i32_0 : i32, i32, i32
  }
  func.func @transform_3(%arg0: i32, %arg1: memref<2xi32, #tpu.memory_space<smem>>) -> (i32, i32, i32) {
    %c0_i32 = arith.constant 0 : i32
    %0 = arith.subi %c0_i32, %arg0 : i32
    %c0_i32_0 = arith.constant 0 : i32
    %c0_i32_1 = arith.constant 0 : i32
    %c0_i32_2 = arith.constant 0 : i32
    return %0, %c0_i32_0, %c0_i32_1 : i32, i32, i32
  }
  func.func @transform_4(%arg0: i32, %arg1: memref<2xi32, #tpu.memory_space<smem>>) -> (i32, i32, i32) {
    %c0_i32 = arith.constant 0 : i32
    %c0_i32_0 = arith.constant 0 : i32
    %c0_i32_1 = arith.constant 0 : i32
    return %arg0, %c0_i32, %c0_i32_0 : i32, i32, i32
  }
  func.func @transform_5(%arg0: i32, %arg1: memref<2xi32, #tpu.memory_space<smem>>) -> (i32, i32, i32) {
    %c0_i32 = arith.constant 0 : i32
    %0 = arith.subi %c0_i32, %arg0 : i32
    %c0_i32_0 = arith.constant 0 : i32
    %c0_i32_1 = arith.constant 0 : i32
    %c0_i32_2 = arith.constant 0 : i32
    return %0, %c0_i32_0, %c0_i32_1 : i32, i32, i32
  }
  func.func @transform_6(%arg0: i32, %arg1: memref<2xi32, #tpu.memory_space<smem>>) -> (i32, i32, i32) {
    %c0_i32 = arith.constant 0 : i32
    %c0_i32_0 = arith.constant 0 : i32
    %c0_i32_1 = arith.constant 0 : i32
    %c0_i32_2 = arith.constant 0 : i32
    return %c0_i32, %c0_i32_0, %c0_i32_1 : i32, i32, i32
  }
  func.func @transform_7(%arg0: i32, %arg1: memref<2xi32, #tpu.memory_space<smem>>) -> (i32, i32, i32) {
    %c0_i32 = arith.constant 0 : i32
    %c0_i32_0 = arith.constant 0 : i32
    %c0_i32_1 = arith.constant 0 : i32
    %c0_i32_2 = arith.constant 0 : i32
    return %c0_i32, %c0_i32_0, %c0_i32_1 : i32, i32, i32
  }
}

</mosaic_0001>

<llo_original>
// kernel: encoder_forward.2
$region0: #{encoder_forward.2}
  #allocation0 [shape = 'u32[]', space=smem, size = 0x4, offset = 0x4, fixed_abs, tag = 'smem constant byte address 0x4 - core index']
  #allocation1 [shape = 'u32[144,128]{1,0:T(1,128)}', space=vmem, size = 0x12000, scoped, tag = 'internal scratch']
  #allocation2 [shape = 's32[1]{0}', space=sflag, size = 0x4, scoped, tag = 'scoped memory for encoder_forward.2']
  #allocation3 [shape = 'u8[512]{0}', space=smem, size = 0x200, scoped, tag = 'prefetched SMEM operand 0']
  %s0 = inlined_call_operand.vmem [shape: s32[2], index: 0, kind: input, shape index: {}]
  %s1 = inlined_call_operand.vmem [shape: s32[2,1], index: 1, kind: input, shape index: {}]
  %s2 = inlined_call_operand.vmem [shape: f32[2,32,128], index: 2, kind: input, shape index: {}]
  %s3 = inlined_call_operand.vmem [shape: f32[8,2,128], index: 3, kind: input, shape index: {}]
  %s4 = inlined_call_operand.vmem [shape: f32[8,2,128], index: 4, kind: input, shape index: {}]
  %s5 = inlined_call_operand.vmem [shape: f32[8,2,32], index: 5, kind: output, shape index: {0}]
  %s6 = inlined_call_operand.vmem [shape: f32[8,2,32], index: 6, kind: output, shape index: {1}]
  %s7 = inlined_call_operand.vmem [shape: f32[2,2,32], index: 7, kind: output, shape index: {2}]
  %s8 = inlined_call_operand.vmem [shape: f32[2,2,32], index: 8, kind: output, shape index: {3}]
  %9 = xla_tuple %s5, %s6, %s7, %s8
  %s10 = sld [smem:[#allocation0]]
  $region62: #{encoder_forward.2} parent=0
    _
  %s12 = ssub.s32 1, %s10
  %s13 = scalar_select 0, %s12, %s10
  %s14 = sshll.u32 %s0, 4
  %s15 = int_to_ptr.vmem [resolvable:$true] %s14
  %17 = dma.vmem_to_smem %s15, 16, [#allocation3], [#allocation2]
  %18 = dma.done [#allocation2], 16
  %19 = sfence
  // Predicated region
  $region2: #{encoder_forward.2} parent=0 // pred_check
    _
  $region3: #{encoder_forward.2} parent=0 // pred_check_branch
    %21 = sbr.rel (0) target = $region5
  $region4: #{encoder_forward.2} parent=0 // pred_region
    _
  $region5: #{encoder_forward.2} parent=0 // pred_fallthru
    _
  // Predicated region
  $region6: #{encoder_forward.2} parent=0 // pred_check
    _
  $region7: #{encoder_forward.2} parent=0 // pred_check_branch
    %23 = sbr.rel (0) target = $region9
  $region8: #{encoder_forward.2} parent=0 // pred_region
    _
  $region9: #{encoder_forward.2} parent=0 // pred_fallthru
    _
  // Predicated region
  $region10: #{encoder_forward.2} parent=0 // pred_check
    _
  $region11: #{encoder_forward.2} parent=0 // pred_check_branch
    %25 = sbr.rel (0) target = $region13
  $region12: #{encoder_forward.2} parent=0 // pred_region
    _
  $region13: #{encoder_forward.2} parent=0 // pred_fallthru
    _
  // Predicated region
  $region14: #{encoder_forward.2} parent=0 // pred_check
    _
  $region15: #{encoder_forward.2} parent=0 // pred_check_branch
    %27 = sbr.rel (0) target = $region17
  $region16: #{encoder_forward.2} parent=0 // pred_region
    %s28 = ssub.s32 0, 0
    %s29 = smul.u32 8, %s28
    %p30 = scmp.lt.s32.totalorder %s29, 7
    %s31 = scalar_select %p30, %s29, 7
    %s32 = smul.addr %s31, 2
    %s33 = scalar_lea.vmem %s4, %s32
    %s34 = ssub.s32 0, 0
    %s35 = smul.u32 8, %s34
  $region17: #{encoder_forward.2} parent=0 // pred_fallthru
    _
  %s36 = ssub.s32 0, 0
  %s37 = smul.u32 8, %s36
  %p38 = scmp.lt.s32.totalorder %s37, 7
  %s39 = scalar_select %p38, %s37, 7
  %s40 = smul.addr %s39, 2
  %s41 = scalar_lea.vmem %s4, %s40
  %s42 = ssub.s32 0, 0
  %s43 = smul.u32 8, %s42
  %p44 = scmp.lt.s32.totalorder %s43, 7
  %s45 = scalar_select %p44, %s43, 7
  %s46 = smul.addr %s45, 2
  %s47 = scalar_lea.vmem %s6, %s46
  %s48 = ssub.s32 0, 0
  %s49 = smul.u32 8, %s48
  %p50 = scmp.lt.s32.totalorder %s49, 7
  %s51 = scalar_select %p50, %s49, 7
  %s52 = smul.addr %s51, 2
  %s53 = scalar_lea.vmem %s4, %s52
  %s54 = ssub.s32 0, 0
  %s55 = smul.u32 8, %s54
  %s56 = ssub.s32 0, 0
  %s57 = smul.u32 8, %s56
  %p58 = scmp.lt.s32.totalorder %s57, 7
  %s59 = scalar_select %p58, %s57, 7
  %s60 = smul.addr %s59, 2
  %s61 = scalar_lea.vmem %s6, %s60
  %s62 = ssub.s32 0, 0
  %s63 = smul.u32 8, %s62
  %s64 = sld [smem:[#allocation3]]
  %v65 = vld [vmem:[%s1] sm:$0x3]
  %p66 = scmp.eq.s32.totalorder 0, 0
  // Predicated region
  $region18: #{encoder_forward.2} parent=0 // pred_check
    %p67 = pneg %p66
  $region19: #{encoder_forward.2} parent=0 // pred_check_branch
    %69 = sbr.rel (%p67) target = $region21
  $region20: #{encoder_forward.2} parent=0 // pred_region
    %vm70 = vcmask 254976
    %71 = vst.msk [vmem:[%s7] sm:$0x3] %vm70, 0.0
    %72 = vst.msk [vmem:[%s7 + $0x2] sm:$0x3] %vm70, 0.0
    %73 = vst.msk [vmem:[%s8] sm:$0x3] %vm70, 0.0
    %74 = vst.msk [vmem:[%s8 + $0x2] sm:$0x3] %vm70, 0.0
  $region21: #{encoder_forward.2} parent=0 // pred_fallthru
    _
  %s75 = smul.u32 0, 8
  %s76 = ssub.s32 0, 0
  %s77 = smul.u32 %s76, 8
  %p78 = scmp.lt.s32.totalorder %s75, %s64
  %p79 = scmp.lt.s32.totalorder %s77, %s64
  %p80 = por %p78, %p79
  // Predicated region
  $region22: #{encoder_forward.2} parent=0 // pred_check
    %p81 = pneg %p80
  $region23: #{encoder_forward.2} parent=0 // pred_check_branch
    %83 = sbr.rel (%p81) target = $region25
  $region24: #{encoder_forward.2} parent=0 // pred_region
    %v84 = vld [vmem:[%s7] sm:$0x3]
    %s85 = scalar_lea.vmem %s7, 2
    %v86 = vld [vmem:[%s85] sm:$0x3]
    %v87 = vld [vmem:[%s8] sm:$0x3]
    %s88 = scalar_lea.vmem %s8, 2
    %v89 = vld [vmem:[%s88] sm:$0x3]
    %v90 = vld [vmem:[%s3] sm:$0x3]
    %v91 = vld [vmem:[%s2] sm:$0xff]
    %v92 = vld [vmem:[%s2 + $0x8] sm:$0xff]
    %v93 = vld [vmem:[%s2 + $0x10] sm:$0xff]
    %v94 = vld [vmem:[%s2 + $0x18] sm:$0xff]
    %vm95 = vcmask 261120
    %v97 = vsel %vm95, %v84, 0
    %99 = vmatprep.subr.mxu0 0.0
    %100 = vmatpush1.msra.mxu0 %v91
    %101 = vmatprep.subr.mxu0 0.0
    %102 = vmatpush1.msra.mxu0 %v92
    %103 = vmatprep.subr.mxu0 0.0
    %104 = vmatpush1.msra.mxu0 %v93
    %105 = vmatprep.subr.mxu0 0.0
    %106 = vmatpush1.msra.mxu0 %v94
    %107 = vmatprep.subr.mxu0 0.0
    %108 = vmatpush1.msra.mxu0 0.0
    %109 = vmatprep.subr.mxu0 0.0
    %110 = vmatpush1.msra.mxu0 0.0
    %111 = vmatprep.subr.mxu0 0.0
    %112 = vmatpush1.msra.mxu0 0.0
    %113 = vmatprep.subr.mxu0 0.0
    %114 = vmatpush1.msra.mxu0 0.0
    %115 = vmatprep.subr.mxu0 0.0
    %116 = vmatpush1.msra.mxu0 0.0
    %117 = vmatprep.subr.mxu0 0.0
    %118 = vmatpush1.msra.mxu0 0.0
    %119 = vmatprep.subr.mxu0 0.0
    %120 = vmatpush1.msra.mxu0 0.0
    %121 = vmatprep.subr.mxu0 0.0
    %122 = vmatpush1.msra.mxu0 0.0
    %123 = vmatprep.subr.mxu0 0.0
    %124 = vmatpush1.msra.mxu0 0.0
    %125 = vmatprep.subr.mxu0 0.0
    %126 = vmatpush1.msra.mxu0 0.0
    %127 = vmatprep.subr.mxu0 0.0
    %128 = vmatpush1.msra.mxu0 0.0
    %129 = vmatprep.subr.mxu0 0.0
    %130 = vmatpush1.msra.mxu0 0.0
    %131 = vmatprep.subr.mxu0 0.0
    %132 = vmatpush1.msra.mxu0 0.0
    %133 = vmatprep.subr.mxu0 0.0
    %134 = vmatpush1.msra.mxu0 0.0
    %135 = vmatprep.subr.mxu0 0.0
    %136 = vmatpush1.msra.mxu0 0.0
    %137 = vmatprep.subr.mxu0 0.0
    %138 = vmatpush1.msra.mxu0 0.0
    %139 = vmatprep.subr.mxu0 0.0
    %140 = vmatpush1.msra.mxu0 0.0
    %141 = vmatprep.subr.mxu0 0.0
    %142 = vmatpush1.msra.mxu0 0.0
    %143 = vmatprep.subr.mxu0 0.0
    %144 = vmatpush1.msra.mxu0 0.0
    %145 = vmatprep.subr.mxu0 0.0
    %146 = vmatpush1.msra.mxu0 0.0
    %147 = vmatprep.subr.mxu0 0.0
    %148 = vmatpush1.msra.mxu0 0.0
    %149 = vmatprep.subr.mxu0 0.0
    %150 = vmatpush1.msra.mxu0 0.0
    %151 = vmatprep.subr.mxu0 0.0
    %152 = vmatpush1.msra.mxu0 0.0
    %153 = vmatprep.subr.mxu0 0.0
    %154 = vmatpush1.msra.mxu0 0.0
    %155 = vmatprep.subr.mxu0 0.0
    %156 = vmatpush1.msra.mxu0 0.0
    %157 = vmatprep.subr.mxu0 0.0
    %158 = vmatpush1.msra.mxu0 0.0
    %159 = vmatprep.subr.mxu0 0.0
    %160 = vmatpush1.msra.mxu0 0.0
    %161 = vmatprep.subr.mxu0 0.0
    %162 = vmatpush1.msra.mxu0 0.0
    %163 = vmatprep.mubr.f32.mxu0 0.0
    %164 = vmatmul.mubr.f32.gmra.mrb[0].mxu0 %v97
    %v165 = vpop.f32.mrb[0].mxu0
    %v166 = vadd.f32 0.0, %v165
    %v167 = vpop.f32.mrb[0].mxu0
    %168 = vdwg.mxu0
    %v169 = vadd.f32 %v90, %v166
    %s170 = scalar_lea.vmem %s53, 14
    %v171 = vld [vmem:[%s170] sm:$0x3]
    %s172 = scalar_lea.vmem %s2, 32
    %v173 = vld [vmem:[%s172] sm:$0xff]
    %v174 = vld [vmem:[%s172 + $0x8] sm:$0xff]
    %v175 = vld [vmem:[%s172 + $0x10] sm:$0xff]
    %v176 = vld [vmem:[%s172 + $0x18] sm:$0xff]
    %v178 = vsel %vm95, %v86, 0
    %180 = vmatprep.subr.mxu0 0.0
    %181 = vmatpush1.msra.mxu0 %v173
    %182 = vmatprep.subr.mxu0 0.0
    %183 = vmatpush1.msra.mxu0 %v174
    %184 = vmatprep.subr.mxu0 0.0
    %185 = vmatpush1.msra.mxu0 %v175
    %186 = vmatprep.subr.mxu0 0.0
    %187 = vmatpush1.msra.mxu0 %v176
    %188 = vmatprep.subr.mxu0 0.0
    %189 = vmatpush1.msra.mxu0 0.0
    %190 = vmatprep.subr.mxu0 0.0
    %191 = vmatpush1.msra.mxu0 0.0
    %192 = vmatprep.subr.mxu0 0.0
    %193 = vmatpush1.msra.mxu0 0.0
    %194 = vmatprep.subr.mxu0 0.0
    %195 = vmatpush1.msra.mxu0 0.0
    %196 = vmatprep.subr.mxu0 0.0
    %197 = vmatpush1.msra.mxu0 0.0
    %198 = vmatprep.subr.mxu0 0.0
    %199 = vmatpush1.msra.mxu0 0.0
    %200 = vmatprep.subr.mxu0 0.0
    %201 = vmatpush1.msra.mxu0 0.0
    %202 = vmatprep.subr.mxu0 0.0
    %203 = vmatpush1.msra.mxu0 0.0
    %204 = vmatprep.subr.mxu0 0.0
    %205 = vmatpush1.msra.mxu0 0.0
    %206 = vmatprep.subr.mxu0 0.0
    %207 = vmatpush1.msra.mxu0 0.0
    %208 = vmatprep.subr.mxu0 0.0
    %209 = vmatpush1.msra.mxu0 0.0
    %210 = vmatprep.subr.mxu0 0.0
    %211 = vmatpush1.msra.mxu0 0.0
    %212 = vmatprep.subr.mxu0 0.0
    %213 = vmatpush1.msra.mxu0 0.0
    %214 = vmatprep.subr.mxu0 0.0
    %215 = vmatpush1.msra.mxu0 0.0
    %216 = vmatprep.subr.mxu0 0.0
    %217 = vmatpush1.msra.mxu0 0.0
    %218 = vmatprep.subr.mxu0 0.0
    %219 = vmatpush1.msra.mxu0 0.0
    %220 = vmatprep.subr.mxu0 0.0
    %221 = vmatpush1.msra.mxu0 0.0
    %222 = vmatprep.subr.mxu0 0.0
    %223 = vmatpush1.msra.mxu0 0.0
    %224 = vmatprep.subr.mxu0 0.0
    %225 = vmatpush1.msra.mxu0 0.0
    %226 = vmatprep.subr.mxu0 0.0
    %227 = vmatpush1.msra.mxu0 0.0
    %228 = vmatprep.subr.mxu0 0.0
    %229 = vmatpush1.msra.mxu0 0.0
    %230 = vmatprep.subr.mxu0 0.0
    %231 = vmatpush1.msra.mxu0 0.0
    %232 = vmatprep.subr.mxu0 0.0
    %233 = vmatpush1.msra.mxu0 0.0
    %234 = vmatprep.subr.mxu0 0.0
    %235 = vmatpush1.msra.mxu0 0.0
    %236 = vmatprep.subr.mxu0 0.0
    %237 = vmatpush1.msra.mxu0 0.0
    %238 = vmatprep.subr.mxu0 0.0
    %239 = vmatpush1.msra.mxu0 0.0
    %240 = vmatprep.subr.mxu0 0.0
    %241 = vmatpush1.msra.mxu0 0.0
    %242 = vmatprep.subr.mxu0 0.0
    %243 = vmatpush1.msra.mxu0 0.0
    %244 = vmatprep.mubr.f32.mxu0 0.0
    %245 = vmatmul.mubr.f32.gmra.mrb[0].mxu0 %v178
    %v246 = vpop.f32.mrb[0].mxu0
    %v247 = vadd.f32 0.0, %v246
    %v248 = vpop.f32.mrb[0].mxu0
    %249 = vdwg.mxu0
    %v250 = vadd.f32 %v171, %v247
    %v251 = vmul.f32 %v169, 0.5
    %v252 = vtanh.pop %v251
    %v253 = vmul.f32 %v252, 0.5
    %v254 = vadd.f32 %v253, 0.5
    %v255 = vtanh.pop %v169
    %257 = vrot.lane.b32.xlu0 %v87, 32
    %v258 = vpop.permute.xlu0 %257
    %v260 = vmul.f32 %v254, %v258
    %262 = vrot.lane.b32.xlu0 %v255, 64
    %v263 = vpop.permute.xlu0 %262
    %v265 = vmul.f32 %v254, %v263
    %267 = vrot.lane.b32.xlu0 %v265, 32
    %v268 = vpop.permute.xlu0 %267
    %v270 = vadd.f32 %v260, %v268
    %v271 = vtanh.pop %v270
    %273 = vrot.lane.b32.xlu0 %v271, 64
    %v274 = vpop.permute.xlu0 %273
    %v276 = vmul.f32 %v254, %v274
    %v277 = vstv %s75
    %vm278 = vcmp.lt.s32.totalorder %v277, %v65
    %v279 = vsel %vm278, 1, 0
    %280 = vset.pattern.permute.xlu0 0
    %281 = vperm.xlu0 %280, %v279
    %v282 = vpop.permute.xlu0 %281
    %vm283 = vcmp.eq.s32.totalorder %v282, 1
    %284 = vrot.lane.b32.xlu0 %v84, 96
    %v285 = vpop.permute.xlu0 %284
    %v287 = vsel %vm283, %v276, %v285
    %289 = vrot.lane.b32.xlu0 %v287, 32
    %v290 = vpop.permute.xlu0 %289
    %vm292 = vcmask 254976
    %293 = vst.msk [vmem:[%s7] sm:$0x3] %vm292, %v290
    %v294 = vsel %vm283, %v270, %v258
    %296 = vrot.lane.b32.xlu0 %v294, 96
    %v297 = vpop.permute.xlu0 %296
    %299 = vst.msk [vmem:[%s8] sm:$0x3] %vm292, %v297
    %v300 = vsel %vm283, %v276, 0.0
    %302 = vrot.lane.b32.xlu0 %v300, 32
    %v303 = vpop.permute.xlu0 %302
    %305 = vst.msk [vmem:[%s5] sm:$0x3] %vm292, %v303
    %v306 = vmul.f32 %v250, 0.5
    %v307 = vtanh.pop %v306
    %v308 = vmul.f32 %v307, 0.5
    %v309 = vadd.f32 %v308, 0.5
    %v310 = vtanh.pop %v250
    %312 = vrot.lane.b32.xlu0 %v89, 32
    %v313 = vpop.permute.xlu0 %312
    %v315 = vmul.f32 %v309, %v313
    %317 = vrot.lane.b32.xlu0 %v310, 64
    %v318 = vpop.permute.xlu0 %317
    %v320 = vmul.f32 %v309, %v318
    %322 = vrot.lane.b32.xlu0 %v320, 32
    %v323 = vpop.permute.xlu0 %322
    %v325 = vadd.f32 %v315, %v323
    %v326 = vtanh.pop %v325
    %328 = vrot.lane.b32.xlu0 %v326, 64
    %v329 = vpop.permute.xlu0 %328
    %v331 = vmul.f32 %v309, %v329
    %s332 = sadd.s32 %s77, 7
    %v333 = vstv %s332
    %vm334 = vcmp.lt.s32.totalorder %v333, %v65
    %v335 = vsel %vm334, 1, 0
    %336 = vset.pattern.permute.xlu0 0
    %337 = vperm.xlu0 %336, %v335
    %v338 = vpop.permute.xlu0 %337
    %vm339 = vcmp.eq.s32.totalorder %v338, 1
    %340 = vrot.lane.b32.xlu0 %v86, 96
    %v341 = vpop.permute.xlu0 %340
    %v343 = vsel %vm339, %v331, %v341
    %345 = vrot.lane.b32.xlu0 %v343, 32
    %v346 = vpop.permute.xlu0 %345
    %348 = vst.msk [vmem:[%s85] sm:$0x3] %vm292, %v346
    %v349 = vsel %vm339, %v325, %v313
    %351 = vrot.lane.b32.xlu0 %v349, 96
    %v352 = vpop.permute.xlu0 %351
    %354 = vst.msk [vmem:[%s88] sm:$0x3] %vm292, %v352
    %v355 = vsel %vm339, %v331, 0.0
    %357 = vrot.lane.b32.xlu0 %v355, 32
    %v358 = vpop.permute.xlu0 %357
    %s360 = scalar_lea.vmem %s61, 14
    %361 = vst.msk [vmem:[%s360] sm:$0x3] %vm292, %v358
    %v362 = vld [vmem:[%s7] sm:$0x3]
    %v363 = vld [vmem:[%s85] sm:$0x3]
    %v364 = vld [vmem:[%s8] sm:$0x3]
    %v365 = vld [vmem:[%s88] sm:$0x3]
    %s366 = scalar_lea.vmem %s3, 2
    %v367 = vld [vmem:[%s366] sm:$0x3]
    %v368 = vld [vmem:[%s2] sm:$0xff]
    %v369 = vld [vmem:[%s2 + $0x8] sm:$0xff]
    %v370 = vld [vmem:[%s2 + $0x10] sm:$0xff]
    %v371 = vld [vmem:[%s2 + $0x18] sm:$0xff]
    %v373 = vsel %vm95, %v362, 0
    %375 = vmatprep.subr.mxu0 0.0
    %376 = vmatpush1.msra.mxu0 %v368
    %377 = vmatprep.subr.mxu0 0.0
    %378 = vmatpush1.msra.mxu0 %v369
    %379 = vmatprep.subr.mxu0 0.0
    %380 = vmatpush1.msra.mxu0 %v370
    %381 = vmatprep.subr.mxu0 0.0
    %382 = vmatpush1.msra.mxu0 %v371
    %383 = vmatprep.subr.mxu0 0.0
    %384 = vmatpush1.msra.mxu0 0.0
    %385 = vmatprep.subr.mxu0 0.0
    %386 = vmatpush1.msra.mxu0 0.0
    %387 = vmatprep.subr.mxu0 0.0
    %388 = vmatpush1.msra.mxu0 0.0
    %389 = vmatprep.subr.mxu0 0.0
    %390 = vmatpush1.msra.mxu0 0.0
    %391 = vmatprep.subr.mxu0 0.0
    %392 = vmatpush1.msra.mxu0 0.0
    %393 = vmatprep.subr.mxu0 0.0
    %394 = vmatpush1.msra.mxu0 0.0
    %395 = vmatprep.subr.mxu0 0.0
    %396 = vmatpush1.msra.mxu0 0.0
    %397 = vmatprep.subr.mxu0 0.0
    %398 = vmatpush1.msra.mxu0 0.0
    %399 = vmatprep.subr.mxu0 0.0
    %400 = vmatpush1.msra.mxu0 0.0
    %401 = vmatprep.subr.mxu0 0.0
    %402 = vmatpush1.msra.mxu0 0.0
    %403 = vmatprep.subr.mxu0 0.0
    %404 = vmatpush1.msra.mxu0 0.0
    %405 = vmatprep.subr.mxu0 0.0
    %406 = vmatpush1.msra.mxu0 0.0
    %407 = vmatprep.subr.mxu0 0.0
    %408 = vmatpush1.msra.mxu0 0.0
    %409 = vmatprep.subr.mxu0 0.0
    %410 = vmatpush1.msra.mxu0 0.0
    %411 = vmatprep.subr.mxu0 0.0
    %412 = vmatpush1.msra.mxu0 0.0
    %413 = vmatprep.subr.mxu0 0.0
    %414 = vmatpush1.msra.mxu0 0.0
    %415 = vmatprep.subr.mxu0 0.0
    %416 = vmatpush1.msra.mxu0 0.0
    %417 = vmatprep.subr.mxu0 0.0
    %418 = vmatpush1.msra.mxu0 0.0
    %419 = vmatprep.subr.mxu0 0.0
    %420 = vmatpush1.msra.mxu0 0.0
    %421 = vmatprep.subr.mxu0 0.0
    %422 = vmatpush1.msra.mxu0 0.0
    %423 = vmatprep.subr.mxu0 0.0
    %424 = vmatpush1.msra.mxu0 0.0
    %425 = vmatprep.subr.mxu0 0.0
    %426 = vmatpush1.msra.mxu0 0.0
    %427 = vmatprep.subr.mxu0 0.0
    %428 = vmatpush1.msra.mxu0 0.0
    %429 = vmatprep.subr.mxu0 0.0
    %430 = vmatpush1.msra.mxu0 0.0
    %431 = vmatprep.subr.mxu0 0.0
    %432 = vmatpush1.msra.mxu0 0.0
    %433 = vmatprep.subr.mxu0 0.0
    %434 = vmatpush1.msra.mxu0 0.0
    %435 = vmatprep.subr.mxu0 0.0
    %436 = vmatpush1.msra.mxu0 0.0
    %437 = vmatprep.subr.mxu0 0.0
    %438 = vmatpush1.msra.mxu0 0.0
    %439 = vmatprep.mubr.f32.mxu0 0.0
    %440 = vmatmul.mubr.f32.gmra.mrb[0].mxu0 %v373
    %v441 = vpop.f32.mrb[0].mxu0
    %v442 = vadd.f32 0.0, %v441
    %v443 = vpop.f32.mrb[0].mxu0
    %444 = vdwg.mxu0
    %v445 = vadd.f32 %v367, %v442
    %s446 = scalar_lea.vmem %s53, 12
    %v447 = vld [vmem:[%s446] sm:$0x3]
    %v448 = vld [vmem:[%s172] sm:$0xff]
    %v449 = vld [vmem:[%s172 + $0x8] sm:$0xff]
    %v450 = vld [vmem:[%s172 + $0x10] sm:$0xff]
    %v451 = vld [vmem:[%s172 + $0x18] sm:$0xff]
    %v453 = vsel %vm95, %v363, 0
    %455 = vmatprep.subr.mxu0 0.0
    %456 = vmatpush1.msra.mxu0 %v448
    %457 = vmatprep.subr.mxu0 0.0
    %458 = vmatpush1.msra.mxu0 %v449
    %459 = vmatprep.subr.mxu0 0.0
    %460 = vmatpush1.msra.mxu0 %v450
    %461 = vmatprep.subr.mxu0 0.0
    %462 = vmatpush1.msra.mxu0 %v451
    %463 = vmatprep.subr.mxu0 0.0
    %464 = vmatpush1.msra.mxu0 0.0
    %465 = vmatprep.subr.mxu0 0.0
    %466 = vmatpush1.msra.mxu0 0.0
    %467 = vmatprep.subr.mxu0 0.0
    %468 = vmatpush1.msra.mxu0 0.0
    %469 = vmatprep.subr.mxu0 0.0
    %470 = vmatpush1.msra.mxu0 0.0
    %471 = vmatprep.subr.mxu0 0.0
    %472 = vmatpush1.msra.mxu0 0.0
    %473 = vmatprep.subr.mxu0 0.0
    %474 = vmatpush1.msra.mxu0 0.0
    %475 = vmatprep.subr.mxu0 0.0
    %476 = vmatpush1.msra.mxu0 0.0
    %477 = vmatprep.subr.mxu0 0.0
    %478 = vmatpush1.msra.mxu0 0.0
    %479 = vmatprep.subr.mxu0 0.0
    %480 = vmatpush1.msra.mxu0 0.0
    %481 = vmatprep.subr.mxu0 0.0
    %482 = vmatpush1.msra.mxu0 0.0
    %483 = vmatprep.subr.mxu0 0.0
    %484 = vmatpush1.msra.mxu0 0.0
    %485 = vmatprep.subr.mxu0 0.0
    %486 = vmatpush1.msra.mxu0 0.0
    %487 = vmatprep.subr.mxu0 0.0
    %488 = vmatpush1.msra.mxu0 0.0
    %489 = vmatprep.subr.mxu0 0.0
    %490 = vmatpush1.msra.mxu0 0.0
    %491 = vmatprep.subr.mxu0 0.0
    %492 = vmatpush1.msra.mxu0 0.0
    %493 = vmatprep.subr.mxu0 0.0
    %494 = vmatpush1.msra.mxu0 0.0
    %495 = vmatprep.subr.mxu0 0.0
    %496 = vmatpush1.msra.mxu0 0.0
    %497 = vmatprep.subr.mxu0 0.0
    %498 = vmatpush1.msra.mxu0 0.0
    %499 = vmatprep.subr.mxu0 0.0
    %500 = vmatpush1.msra.mxu0 0.0
    %501 = vmatprep.subr.mxu0 0.0
    %502 = vmatpush1.msra.mxu0 0.0
    %503 = vmatprep.subr.mxu0 0.0
    %504 = vmatpush1.msra.mxu0 0.0
    %505 = vmatprep.subr.mxu0 0.0
    %506 = vmatpush1.msra.mxu0 0.0
    %507 = vmatprep.subr.mxu0 0.0
    %508 = vmatpush1.msra.mxu0 0.0
    %509 = vmatprep.subr.mxu0 0.0
    %510 = vmatpush1.msra.mxu0 0.0
    %511 = vmatprep.subr.mxu0 0.0
    %512 = vmatpush1.msra.mxu0 0.0
    %513 = vmatprep.subr.mxu0 0.0
    %514 = vmatpush1.msra.mxu0 0.0
    %515 = vmatprep.subr.mxu0 0.0
    %516 = vmatpush1.msra.mxu0 0.0
    %517 = vmatprep.subr.mxu0 0.0
    %518 = vmatpush1.msra.mxu0 0.0
    %519 = vmatprep.mubr.f32.mxu0 0.0
    %520 = vmatmul.mubr.f32.gmra.mrb[0].mxu0 %v453
    %v521 = vpop.f32.mrb[0].mxu0
    %v522 = vadd.f32 0.0, %v521
    %v523 = vpop.f32.mrb[0].mxu0
    %524 = vdwg.mxu0
    %v525 = vadd.f32 %v447, %v522
    %v526 = vmul.f32 %v445, 0.5
    %v527 = vtanh.pop %v526
    %v528 = vmul.f32 %v527, 0.5
    %v529 = vadd.f32 %v528, 0.5
    %v530 = vtanh.pop %v445
    %532 = vrot.lane.b32.xlu0 %v364, 32
    %v533 = vpop.permute.xlu0 %532
    %v535 = vmul.f32 %v529, %v533
    %537 = vrot.lane.b32.xlu0 %v530, 64
    %v538 = vpop.permute.xlu0 %537
    %v540 = vmul.f32 %v529, %v538
    %542 = vrot.lane.b32.xlu0 %v540, 32
    %v543 = vpop.permute.xlu0 %542
    %v545 = vadd.f32 %v535, %v543
    %v546 = vtanh.pop %v545
    %548 = vrot.lane.b32.xlu0 %v546, 64
    %v549 = vpop.permute.xlu0 %548
    %v551 = vmul.f32 %v529, %v549
    %s552 = sadd.s32 %s75, 1
    %v553 = vstv %s552
    %vm554 = vcmp.lt.s32.totalorder %v553, %v65
    %v555 = vsel %vm554, 1, 0
    %556 = vset.pattern.permute.xlu0 0
    %557 = vperm.xlu0 %556, %v555
    %v558 = vpop.permute.xlu0 %557
    %vm559 = vcmp.eq.s32.totalorder %v558, 1
    %560 = vrot.lane.b32.xlu0 %v362, 96
    %v561 = vpop.permute.xlu0 %560
    %v563 = vsel %vm559, %v551, %v561
    %565 = vrot.lane.b32.xlu0 %v563, 32
    %v566 = vpop.permute.xlu0 %565
    %568 = vst.msk [vmem:[%s7] sm:$0x3] %vm292, %v566
    %v569 = vsel %vm559, %v545, %v533
    %571 = vrot.lane.b32.xlu0 %v569, 96
    %v572 = vpop.permute.xlu0 %571
    %574 = vst.msk [vmem:[%s8] sm:$0x3] %vm292, %v572
    %v575 = vsel %vm559, %v551, 0.0
    %577 = vrot.lane.b32.xlu0 %v575, 32
    %v578 = vpop.permute.xlu0 %577
    %s580 = scalar_lea.vmem %s5, 2
    %581 = vst.msk [vmem:[%s580] sm:$0x3] %vm292, %v578
    %v582 = vmul.f32 %v525, 0.5
    %v583 = vtanh.pop %v582
    %v584 = vmul.f32 %v583, 0.5
    %v585 = vadd.f32 %v584, 0.5
    %v586 = vtanh.pop %v525
    %588 = vrot.lane.b32.xlu0 %v365, 32
    %v589 = vpop.permute.xlu0 %588
    %v591 = vmul.f32 %v585, %v589
    %593 = vrot.lane.b32.xlu0 %v586, 64
    %v594 = vpop.permute.xlu0 %593
    %v596 = vmul.f32 %v585, %v594
    %598 = vrot.lane.b32.xlu0 %v596, 32
    %v599 = vpop.permute.xlu0 %598
    %v601 = vadd.f32 %v591, %v599
    %v602 = vtanh.pop %v601
    %604 = vrot.lane.b32.xlu0 %v602, 64
    %v605 = vpop.permute.xlu0 %604
    %v607 = vmul.f32 %v585, %v605
    %s608 = sadd.s32 %s77, 6
    %v609 = vstv %s608
    %vm610 = vcmp.lt.s32.totalorder %v609, %v65
    %v611 = vsel %vm610, 1, 0
    %612 = vset.pattern.permute.xlu0 0
    %613 = vperm.xlu0 %612, %v611
    %v614 = vpop.permute.xlu0 %613
    %vm615 = vcmp.eq.s32.totalorder %v614, 1
    %616 = vrot.lane.b32.xlu0 %v363, 96
    %v617 = vpop.permute.xlu0 %616
    %v619 = vsel %vm615, %v607, %v617
    %621 = vrot.lane.b32.xlu0 %v619, 32
    %v622 = vpop.permute.xlu0 %621
    %624 = vst.msk [vmem:[%s85] sm:$0x3] %vm292, %v622
    %v625 = vsel %vm615, %v601, %v589
    %627 = vrot.lane.b32.xlu0 %v625, 96
    %v628 = vpop.permute.xlu0 %627
    %630 = vst.msk [vmem:[%s88] sm:$0x3] %vm292, %v628
    %v631 = vsel %vm615, %v607, 0.0
    %633 = vrot.lane.b32.xlu0 %v631, 32
    %v634 = vpop.permute.xlu0 %633
    %s636 = scalar_lea.vmem %s61, 12
    %637 = vst.msk [vmem:[%s636] sm:$0x3] %vm292, %v634
    %v638 = vld [vmem:[%s7] sm:$0x3]
    %v639 = vld [vmem:[%s85] sm:$0x3]
    %v640 = vld [vmem:[%s8] sm:$0x3]
    %v641 = vld [vmem:[%s88] sm:$0x3]
    %s642 = scalar_lea.vmem %s3, 4
    %v643 = vld [vmem:[%s642] sm:$0x3]
    %v644 = vld [vmem:[%s2] sm:$0xff]
    %v645 = vld [vmem:[%s2 + $0x8] sm:$0xff]
    %v646 = vld [vmem:[%s2 + $0x10] sm:$0xff]
    %v647 = vld [vmem:[%s2 + $0x18] sm:$0xff]
    %v649 = vsel %vm95, %v638, 0
    %651 = vmatprep.subr.mxu0 0.0
    %652 = vmatpush1.msra.mxu0 %v644
    %653 = vmatprep.subr.mxu0 0.0
    %654 = vmatpush1.msra.mxu0 %v645
    %655 = vmatprep.subr.mxu0 0.0
    %656 = vmatpush1.msra.mxu0 %v646
    %657 = vmatprep.subr.mxu0 0.0
    %658 = vmatpush1.msra.mxu0 %v647
    %659 = vmatprep.subr.mxu0 0.0
    %660 = vmatpush1.msra.mxu0 0.0
    %661 = vmatprep.subr.mxu0 0.0
    %662 = vmatpush1.msra.mxu0 0.0
    %663 = vmatprep.subr.mxu0 0.0
    %664 = vmatpush1.msra.mxu0 0.0
    %665 = vmatprep.subr.mxu0 0.0
    %666 = vmatpush1.msra.mxu0 0.0
    %667 = vmatprep.subr.mxu0 0.0
    %668 = vmatpush1.msra.mxu0 0.0
    %669 = vmatprep.subr.mxu0 0.0
    %670 = vmatpush1.msra.mxu0 0.0
    %671 = vmatprep.subr.mxu0 0.0
    %672 = vmatpush1.msra.mxu0 0.0
    %673 = vmatprep.subr.mxu0 0.0
    %674 = vmatpush1.msra.mxu0 0.0
    %675 = vmatprep.subr.mxu0 0.0
    %676 = vmatpush1.msra.mxu0 0.0
    %677 = vmatprep.subr.mxu0 0.0
    %678 = vmatpush1.msra.mxu0 0.0
    %679 = vmatprep.subr.mxu0 0.0
    %680 = vmatpush1.msra.mxu0 0.0
    %681 = vmatprep.subr.mxu0 0.0
    %682 = vmatpush1.msra.mxu0 0.0
    %683 = vmatprep.subr.mxu0 0.0
    %684 = vmatpush1.msra.mxu0 0.0
    %685 = vmatprep.subr.mxu0 0.0
    %686 = vmatpush1.msra.mxu0 0.0
    %687 = vmatprep.subr.mxu0 0.0
    %688 = vmatpush1.msra.mxu0 0.0
    %689 = vmatprep.subr.mxu0 0.0
    %690 = vmatpush1.msra.mxu0 0.0
    %691 = vmatprep.subr.mxu0 0.0
    %692 = vmatpush1.msra.mxu0 0.0
    %693 = vmatprep.subr.mxu0 0.0
    %694 = vmatpush1.msra.mxu0 0.0
    %695 = vmatprep.subr.mxu0 0.0
    %696 = vmatpush1.msra.mxu0 0.0
    %697 = vmatprep.subr.mxu0 0.0
    %698 = vmatpush1.msra.mxu0 0.0
    %699 = vmatprep.subr.mxu0 0.0
    %700 = vmatpush1.msra.mxu0 0.0
    %701 = vmatprep.subr.mxu0 0.0
    %702 = vmatpush1.msra.mxu0 0.0
    %703 = vmatprep.subr.mxu0 0.0
    %704 = vmatpush1.msra.mxu0 0.0
    %705 = vmatprep.subr.mxu0 0.0
    %706 = vmatpush1.msra.mxu0 0.0
    %707 = vmatprep.subr.mxu0 0.0
    %708 = vmatpush1.msra.mxu0 0.0
    %709 = vmatprep.subr.mxu0 0.0
    %710 = vmatpush1.msra.mxu0 0.0
    %711 = vmatprep.subr.mxu0 0.0
    %712 = vmatpush1.msra.mxu0 0.0
    %713 = vmatprep.subr.mxu0 0.0
    %714 = vmatpush1.msra.mxu0 0.0
    %715 = vmatprep.mubr.f32.mxu0 0.0
    %716 = vmatmul.mubr.f32.gmra.mrb[0].mxu0 %v649
    %v717 = vpop.f32.mrb[0].mxu0
    %v718 = vadd.f32 0.0, %v717
    %v719 = vpop.f32.mrb[0].mxu0
    %720 = vdwg.mxu0
    %v721 = vadd.f32 %v643, %v718
    %s722 = scalar_lea.vmem %s53, 10
    %v723 = vld [vmem:[%s722] sm:$0x3]
    %v724 = vld [vmem:[%s172] sm:$0xff]
    %v725 = vld [vmem:[%s172 + $0x8] sm:$0xff]
    %v726 = vld [vmem:[%s172 + $0x10] sm:$0xff]
    %v727 = vld [vmem:[%s172 + $0x18] sm:$0xff]
    %v729 = vsel %vm95, %v639, 0
    %731 = vmatprep.subr.mxu0 0.0
    %732 = vmatpush1.msra.mxu0 %v724
    %733 = vmatprep.subr.mxu0 0.0
    %734 = vmatpush1.msra.mxu0 %v725
    %735 = vmatprep.subr.mxu0 0.0
    %736 = vmatpush1.msra.mxu0 %v726
    %737 = vmatprep.subr.mxu0 0.0
    %738 = vmatpush1.msra.mxu0 %v727
    %739 = vmatprep.subr.mxu0 0.0
    %740 = vmatpush1.msra.mxu0 0.0
    %741 = vmatprep.subr.mxu0 0.0
    %742 = vmatpush1.msra.mxu0 0.0
    %743 = vmatprep.subr.mxu0 0.0
    %744 = vmatpush1.msra.mxu0 0.0
    %745 = vmatprep.subr.mxu0 0.0
    %746 = vmatpush1.msra.mxu0 0.0
    %747 = vmatprep.subr.mxu0 0.0
    %748 = vmatpush1.msra.mxu0 0.0
    %749 = vmatprep.subr.mxu0 0.0
    %750 = vmatpush1.msra.mxu0 0.0
    %751 = vmatprep.subr.mxu0 0.0
    %752 = vmatpush1.msra.mxu0 0.0
    %753 = vmatprep.subr.mxu0 0.0
    %754 = vmatpush1.msra.mxu0 0.0
    %755 = vmatprep.subr.mxu0 0.0
    %756 = vmatpush1.msra.mxu0 0.0
    %757 = vmatprep.subr.mxu0 0.0
    %758 = vmatpush1.msra.mxu0 0.0
    %759 = vmatprep.subr.mxu0 0.0
    %760 = vmatpush1.msra.mxu0 0.0
    %761 = vmatprep.subr.mxu0 0.0
    %762 = vmatpush1.msra.mxu0 0.0
    %763 = vmatprep.subr.mxu0 0.0
    %764 = vmatpush1.msra.mxu0 0.0
    %765 = vmatprep.subr.mxu0 0.0
    %766 = vmatpush1.msra.mxu0 0.0
    %767 = vmatprep.subr.mxu0 0.0
    %768 = vmatpush1.msra.mxu0 0.0
    %769 = vmatprep.subr.mxu0 0.0
    %770 = vmatpush1.msra.mxu0 0.0
    %771 = vmatprep.subr.mxu0 0.0
    %772 = vmatpush1.msra.mxu0 0.0
    %773 = vmatprep.subr.mxu0 0.0
    %774 = vmatpush1.msra.mxu0 0.0
    %775 = vmatprep.subr.mxu0 0.0
    %776 = vmatpush1.msra.mxu0 0.0
    %777 = vmatprep.subr.mxu0 0.0
    %778 = vmatpush1.msra.mxu0 0.0
    %779 = vmatprep.subr.mxu0 0.0
    %780 = vmatpush1.msra.mxu0 0.0
    %781 = vmatprep.subr.mxu0 0.0
    %782 = vmatpush1.msra.mxu0 0.0
    %783 = vmatprep.subr.mxu0 0.0
    %784 = vmatpush1.msra.mxu0 0.0
    %785 = vmatprep.subr.mxu0 0.0
    %786 = vmatpush1.msra.mxu0 0.0
    %787 = vmatprep.subr.mxu0 0.0
    %788 = vmatpush1.msra.mxu0 0.0
    %789 = vmatprep.subr.mxu0 0.0
    %790 = vmatpush1.msra.mxu0 0.0
    %791 = vmatprep.subr.mxu0 0.0
    %792 = vmatpush1.msra.mxu0 0.0
    %793 = vmatprep.subr.mxu0 0.0
    %794 = vmatpush1.msra.mxu0 0.0
    %795 = vmatprep.mubr.f32.mxu0 0.0
    %796 = vmatmul.mubr.f32.gmra.mrb[0].mxu0 %v729
    %v797 = vpop.f32.mrb[0].mxu0
    %v798 = vadd.f32 0.0, %v797
    %v799 = vpop.f32.mrb[0].mxu0
    %800 = vdwg.mxu0
    %v801 = vadd.f32 %v723, %v798
    %v802 = vmul.f32 %v721, 0.5
    %v803 = vtanh.pop %v802
    %v804 = vmul.f32 %v803, 0.5
    %v805 = vadd.f32 %v804, 0.5
    %v806 = vtanh.pop %v721
    %808 = vrot.lane.b32.xlu0 %v640, 32
    %v809 = vpop.permute.xlu0 %808
    %v811 = vmul.f32 %v805, %v809
    %813 = vrot.lane.b32.xlu0 %v806, 64
    %v814 = vpop.permute.xlu0 %813
    %v816 = vmul.f32 %v805, %v814
    %818 = vrot.lane.b32.xlu0 %v816, 32
    %v819 = vpop.permute.xlu0 %818
    %v821 = vadd.f32 %v811, %v819
    %v822 = vtanh.pop %v821
    %824 = vrot.lane.b32.xlu0 %v822, 64
    %v825 = vpop.permute.xlu0 %824
    %v827 = vmul.f32 %v805, %v825
    %s828 = sadd.s32 %s75, 2
    %v829 = vstv %s828
    %vm830 = vcmp.lt.s32.totalorder %v829, %v65
    %v831 = vsel %vm830, 1, 0
    %832 = vset.pattern.permute.xlu0 0
    %833 = vperm.xlu0 %832, %v831
    %v834 = vpop.permute.xlu0 %833
    %vm835 = vcmp.eq.s32.totalorder %v834, 1
    %836 = vrot.lane.b32.xlu0 %v638, 96
    %v837 = vpop.permute.xlu0 %836
    %v839 = vsel %vm835, %v827, %v837
    %841 = vrot.lane.b32.xlu0 %v839, 32
    %v842 = vpop.permute.xlu0 %841
    %844 = vst.msk [vmem:[%s7] sm:$0x3] %vm292, %v842
    %v845 = vsel %vm835, %v821, %v809
    %847 = vrot.lane.b32.xlu0 %v845, 96
    %v848 = vpop.permute.xlu0 %847
    %850 = vst.msk [vmem:[%s8] sm:$0x3] %vm292, %v848
    %v851 = vsel %vm835, %v827, 0.0
    %853 = vrot.lane.b32.xlu0 %v851, 32
    %v854 = vpop.permute.xlu0 %853
    %s856 = scalar_lea.vmem %s5, 4
    %857 = vst.msk [vmem:[%s856] sm:$0x3] %vm292, %v854
    %v858 = vmul.f32 %v801, 0.5
    %v859 = vtanh.pop %v858
    %v860 = vmul.f32 %v859, 0.5
    %v861 = vadd.f32 %v860, 0.5
    %v862 = vtanh.pop %v801
    %864 = vrot.lane.b32.xlu0 %v641, 32
    %v865 = vpop.permute.xlu0 %864
    %v867 = vmul.f32 %v861, %v865
    %869 = vrot.lane.b32.xlu0 %v862, 64
    %v870 = vpop.permute.xlu0 %869
    %v872 = vmul.f32 %v861, %v870
    %874 = vrot.lane.b32.xlu0 %v872, 32
    %v875 = vpop.permute.xlu0 %874
    %v877 = vadd.f32 %v867, %v875
    %v878 = vtanh.pop %v877
    %880 = vrot.lane.b32.xlu0 %v878, 64
    %v881 = vpop.permute.xlu0 %880
    %v883 = vmul.f32 %v861, %v881
    %s884 = sadd.s32 %s77, 5
    %v885 = vstv %s884
    %vm886 = vcmp.lt.s32.totalorder %v885, %v65
    %v887 = vsel %vm886, 1, 0
    %888 = vset.pattern.permute.xlu0 0
    %889 = vperm.xlu0 %888, %v887
    %v890 = vpop.permute.xlu0 %889
    %vm891 = vcmp.eq.s32.totalorder %v890, 1
    %892 = vrot.lane.b32.xlu0 %v639, 96
    %v893 = vpop.permute.xlu0 %892
    %v895 = vsel %vm891, %v883, %v893
    %897 = vrot.lane.b32.xlu0 %v895, 32
    %v898 = vpop.permute.xlu0 %897
    %900 = vst.msk [vmem:[%s85] sm:$0x3] %vm292, %v898
    %v901 = vsel %vm891, %v877, %v865
    %903 = vrot.lane.b32.xlu0 %v901, 96
    %v904 = vpop.permute.xlu0 %903
    %906 = vst.msk [vmem:[%s88] sm:$0x3] %vm292, %v904
    %v907 = vsel %vm891, %v883, 0.0
    %909 = vrot.lane.b32.xlu0 %v907, 32
    %v910 = vpop.permute.xlu0 %909
    %s912 = scalar_lea.vmem %s61, 10
    %913 = vst.msk [vmem:[%s912] sm:$0x3] %vm292, %v910
    %v914 = vld [vmem:[%s7] sm:$0x3]
    %v915 = vld [vmem:[%s85] sm:$0x3]
    %v916 = vld [vmem:[%s8] sm:$0x3]
    %v917 = vld [vmem:[%s88] sm:$0x3]
    %s918 = scalar_lea.vmem %s3, 6
    %v919 = vld [vmem:[%s918] sm:$0x3]
    %v920 = vld [vmem:[%s2] sm:$0xff]
    %v921 = vld [vmem:[%s2 + $0x8] sm:$0xff]
    %v922 = vld [vmem:[%s2 + $0x10] sm:$0xff]
    %v923 = vld [vmem:[%s2 + $0x18] sm:$0xff]
    %v925 = vsel %vm95, %v914, 0
    %927 = vmatprep.subr.mxu0 0.0
    %928 = vmatpush1.msra.mxu0 %v920
    %929 = vmatprep.subr.mxu0 0.0
    %930 = vmatpush1.msra.mxu0 %v921
    %931 = vmatprep.subr.mxu0 0.0
    %932 = vmatpush1.msra.mxu0 %v922
    %933 = vmatprep.subr.mxu0 0.0
    %934 = vmatpush1.msra.mxu0 %v923
    %935 = vmatprep.subr.mxu0 0.0
    %936 = vmatpush1.msra.mxu0 0.0
    %937 = vmatprep.subr.mxu0 0.0
    %938 = vmatpush1.msra.mxu0 0.0
    %939 = vmatprep.subr.mxu0 0.0
    %940 = vmatpush1.msra.mxu0 0.0
    %941 = vmatprep.subr.mxu0 0.0
    %942 = vmatpush1.msra.mxu0 0.0
    %943 = vmatprep.subr.mxu0 0.0
    %944 = vmatpush1.msra.mxu0 0.0
    %945 = vmatprep.subr.mxu0 0.0
    %946 = vmatpush1.msra.mxu0 0.0
    %947 = vmatprep.subr.mxu0 0.0
    %948 = vmatpush1.msra.mxu0 0.0
    %949 = vmatprep.subr.mxu0 0.0
    %950 = vmatpush1.msra.mxu0 0.0
    %951 = vmatprep.subr.mxu0 0.0
    %952 = vmatpush1.msra.mxu0 0.0
    %953 = vmatprep.subr.mxu0 0.0
    %954 = vmatpush1.msra.mxu0 0.0
    %955 = vmatprep.subr.mxu0 0.0
    %956 = vmatpush1.msra.mxu0 0.0
    %957 = vmatprep.subr.mxu0 0.0
    %958 = vmatpush1.msra.mxu0 0.0
    %959 = vmatprep.subr.mxu0 0.0
    %960 = vmatpush1.msra.mxu0 0.0
    %961 = vmatprep.subr.mxu0 0.0
    %962 = vmatpush1.msra.mxu0 0.0
    %963 = vmatprep.subr.mxu0 0.0
    %964 = vmatpush1.msra.mxu0 0.0
    %965 = vmatprep.subr.mxu0 0.0
    %966 = vmatpush1.msra.mxu0 0.0
    %967 = vmatprep.subr.mxu0 0.0
    %968 = vmatpush1.msra.mxu0 0.0
    %969 = vmatprep.subr.mxu0 0.0
    %970 = vmatpush1.msra.mxu0 0.0
    %971 = vmatprep.subr.mxu0 0.0
    %972 = vmatpush1.msra.mxu0 0.0
    %973 = vmatprep.subr.mxu0 0.0
    %974 = vmatpush1.msra.mxu0 0.0
    %975 = vmatprep.subr.mxu0 0.0
    %976 = vmatpush1.msra.mxu0 0.0
    %977 = vmatprep.subr.mxu0 0.0
    %978 = vmatpush1.msra.mxu0 0.0
    %979 = vmatprep.subr.mxu0 0.0
    %980 = vmatpush1.msra.mxu0 0.0
    %981 = vmatprep.subr.mxu0 0.0
    %982 = vmatpush1.msra.mxu0 0.0
    %983 = vmatprep.subr.mxu0 0.0
    %984 = vmatpush1.msra.mxu0 0.0
    %985 = vmatprep.subr.mxu0 0.0
    %986 = vmatpush1.msra.mxu0 0.0
    %987 = vmatprep.subr.mxu0 0.0
    %988 = vmatpush1.msra.mxu0 0.0
    %989 = vmatprep.subr.mxu0 0.0
    %990 = vmatpush1.msra.mxu0 0.0
    %991 = vmatprep.mubr.f32.mxu0 0.0
    %992 = vmatmul.mubr.f32.gmra.mrb[0].mxu0 %v925
    %v993 = vpop.f32.mrb[0].mxu0
    %v994 = vadd.f32 0.0, %v993
    %v995 = vpop.f32.mrb[0].mxu0
    %996 = vdwg.mxu0
    %v997 = vadd.f32 %v919, %v994
    %s998 = scalar_lea.vmem %s53, 8
    %v999 = vld [vmem:[%s998] sm:$0x3]
    %v1000 = vld [vmem:[%s172] sm:$0xff]
    %v1001 = vld [vmem:[%s172 + $0x8] sm:$0xff]
    %v1002 = vld [vmem:[%s172 + $0x10] sm:$0xff]
    %v1003 = vld [vmem:[%s172 + $0x18] sm:$0xff]
    %v1005 = vsel %vm95, %v915, 0
    %1007 = vmatprep.subr.mxu0 0.0
    %1008 = vmatpush1.msra.mxu0 %v1000
    %1009 = vmatprep.subr.mxu0 0.0
    %1010 = vmatpush1.msra.mxu0 %v1001
    %1011 = vmatprep.subr.mxu0 0.0
    %1012 = vmatpush1.msra.mxu0 %v1002
    %1013 = vmatprep.subr.mxu0 0.0
    %1014 = vmatpush1.msra.mxu0 %v1003
    %1015 = vmatprep.subr.mxu0 0.0
    %1016 = vmatpush1.msra.mxu0 0.0
    %1017 = vmatprep.subr.mxu0 0.0
    %1018 = vmatpush1.msra.mxu0 0.0
    %1019 = vmatprep.subr.mxu0 0.0
    %1020 = vmatpush1.msra.mxu0 0.0
    %1021 = vmatprep.subr.mxu0 0.0
    %1022 = vmatpush1.msra.mxu0 0.0
    %1023 = vmatprep.subr.mxu0 0.0
    %1024 = vmatpush1.msra.mxu0 0.0
    %1025 = vmatprep.subr.mxu0 0.0
    %1026 = vmatpush1.msra.mxu0 0.0
    %1027 = vmatprep.subr.mxu0 0.0
    %1028 = vmatpush1.msra.mxu0 0.0
    %1029 = vmatprep.subr.mxu0 0.0
    %1030 = vmatpush1.msra.mxu0 0.0
    %1031 = vmatprep.subr.mxu0 0.0
    %1032 = vmatpush1.msra.mxu0 0.0
    %1033 = vmatprep.subr.mxu0 0.0
    %1034 = vmatpush1.msra.mxu0 0.0
    %1035 = vmatprep.subr.mxu0 0.0
    %1036 = vmatpush1.msra.mxu0 0.0
    %1037 = vmatprep.subr.mxu0 0.0
    %1038 = vmatpush1.msra.mxu0 0.0
    %1039 = vmatprep.subr.mxu0 0.0
    %1040 = vmatpush1.msra.mxu0 0.0
    %1041 = vmatprep.subr.mxu0 0.0
    %1042 = vmatpush1.msra.mxu0 0.0
    %1043 = vmatprep.subr.mxu0 0.0
    %1044 = vmatpush1.msra.mxu0 0.0
    %1045 = vmatprep.subr.mxu0 0.0
    %1046 = vmatpush1.msra.mxu0 0.0
    %1047 = vmatprep.subr.mxu0 0.0
    %1048 = vmatpush1.msra.mxu0 0.0
    %1049 = vmatprep.subr.mxu0 0.0
    %1050 = vmatpush1.msra.mxu0 0.0
    %1051 = vmatprep.subr.mxu0 0.0
    %1052 = vmatpush1.msra.mxu0 0.0
    %1053 = vmatprep.subr.mxu0 0.0
    %1054 = vmatpush1.msra.mxu0 0.0
    %1055 = vmatprep.subr.mxu0 0.0
    %1056 = vmatpush1.msra.mxu0 0.0
    %1057 = vmatprep.subr.mxu0 0.0
    %1058 = vmatpush1.msra.mxu0 0.0
    %1059 = vmatprep.subr.mxu0 0.0
    %1060 = vmatpush1.msra.mxu0 0.0
    %1061 = vmatprep.subr.mxu0 0.0
    %1062 = vmatpush1.msra.mxu0 0.0
    %1063 = vmatprep.subr.mxu0 0.0
    %1064 = vmatpush1.msra.mxu0 0.0
    %1065 = vmatprep.subr.mxu0 0.0
    %1066 = vmatpush1.msra.mxu0 0.0
    %1067 = vmatprep.subr.mxu0 0.0
    %1068 = vmatpush1.msra.mxu0 0.0
    %1069 = vmatprep.subr.mxu0 0.0
    %1070 = vmatpush1.msra.mxu0 0.0
    %1071 = vmatprep.mubr.f32.mxu0 0.0
    %1072 = vmatmul.mubr.f32.gmra.mrb[0].mxu0 %v1005
    %v1073 = vpop.f32.mrb[0].mxu0
    %v1074 = vadd.f32 0.0, %v1073
    %v1075 = vpop.f32.mrb[0].mxu0
    %1076 = vdwg.mxu0
    %v1077 = vadd.f32 %v999, %v1074
    %v1078 = vmul.f32 %v997, 0.5
    %v1079 = vtanh.pop %v1078
    %v1080 = vmul.f32 %v1079, 0.5
    %v1081 = vadd.f32 %v1080, 0.5
    %v1082 = vtanh.pop %v997
    %1084 = vrot.lane.b32.xlu0 %v916, 32
    %v1085 = vpop.permute.xlu0 %1084
    %v1087 = vmul.f32 %v1081, %v1085
    %1089 = vrot.lane.b32.xlu0 %v1082, 64
    %v1090 = vpop.permute.xlu0 %1089
    %v1092 = vmul.f32 %v1081, %v1090
    %1094 = vrot.lane.b32.xlu0 %v1092, 32
    %v1095 = vpop.permute.xlu0 %1094
    %v1097 = vadd.f32 %v1087, %v1095
    %v1098 = vtanh.pop %v1097
    %1100 = vrot.lane.b32.xlu0 %v1098, 64
    %v1101 = vpop.permute.xlu0 %1100
    %v1103 = vmul.f32 %v1081, %v1101
    %s1104 = sadd.s32 %s75, 3
    %v1105 = vstv %s1104
    %vm1106 = vcmp.lt.s32.totalorder %v1105, %v65
    %v1107 = vsel %vm1106, 1, 0
    %1108 = vset.pattern.permute.xlu0 0
    %1109 = vperm.xlu0 %1108, %v1107
    %v1110 = vpop.permute.xlu0 %1109
    %vm1111 = vcmp.eq.s32.totalorder %v1110, 1
    %1112 = vrot.lane.b32.xlu0 %v914, 96
    %v1113 = vpop.permute.xlu0 %1112
    %v1115 = vsel %vm1111, %v1103, %v1113
    %1117 = vrot.lane.b32.xlu0 %v1115, 32
    %v1118 = vpop.permute.xlu0 %1117
    %1120 = vst.msk [vmem:[%s7] sm:$0x3] %vm292, %v1118
    %v1121 = vsel %vm1111, %v1097, %v1085
    %1123 = vrot.lane.b32.xlu0 %v1121, 96
    %v1124 = vpop.permute.xlu0 %1123
    %1126 = vst.msk [vmem:[%s8] sm:$0x3] %vm292, %v1124
    %v1127 = vsel %vm1111, %v1103, 0.0
    %1129 = vrot.lane.b32.xlu0 %v1127, 32
    %v1130 = vpop.permute.xlu0 %1129
    %s1132 = scalar_lea.vmem %s5, 6
    %1133 = vst.msk [vmem:[%s1132] sm:$0x3] %vm292, %v1130
    %v1134 = vmul.f32 %v1077, 0.5
    %v1135 = vtanh.pop %v1134
    %v1136 = vmul.f32 %v1135, 0.5
    %v1137 = vadd.f32 %v1136, 0.5
    %v1138 = vtanh.pop %v1077
    %1140 = vrot.lane.b32.xlu0 %v917, 32
    %v1141 = vpop.permute.xlu0 %1140
    %v1143 = vmul.f32 %v1137, %v1141
    %1145 = vrot.lane.b32.xlu0 %v1138, 64
    %v1146 = vpop.permute.xlu0 %1145
    %v1148 = vmul.f32 %v1137, %v1146
    %1150 = vrot.lane.b32.xlu0 %v1148, 32
    %v1151 = vpop.permute.xlu0 %1150
    %v1153 = vadd.f32 %v1143, %v1151
    %v1154 = vtanh.pop %v1153
    %1156 = vrot.lane.b32.xlu0 %v1154, 64
    %v1157 = vpop.permute.xlu0 %1156
    %v1159 = vmul.f32 %v1137, %v1157
    %s1160 = sadd.s32 %s77, 4
    %v1161 = vstv %s1160
    %vm1162 = vcmp.lt.s32.totalorder %v1161, %v65
    %v1163 = vsel %vm1162, 1, 0
    %1164 = vset.pattern.permute.xlu0 0
    %1165 = vperm.xlu0 %1164, %v1163
    %v1166 = vpop.permute.xlu0 %1165
    %vm1167 = vcmp.eq.s32.totalorder %v1166, 1
    %1168 = vrot.lane.b32.xlu0 %v915, 96
    %v1169 = vpop.permute.xlu0 %1168
    %v1171 = vsel %vm1167, %v1159, %v1169
    %1173 = vrot.lane.b32.xlu0 %v1171, 32
    %v1174 = vpop.permute.xlu0 %1173
    %1176 = vst.msk [vmem:[%s85] sm:$0x3] %vm292, %v1174
    %v1177 = vsel %vm1167, %v1153, %v1141
    %1179 = vrot.lane.b32.xlu0 %v1177, 96
    %v1180 = vpop.permute.xlu0 %1179
    %1182 = vst.msk [vmem:[%s88] sm:$0x3] %vm292, %v1180
    %v1183 = vsel %vm1167, %v1159, 0.0
    %1185 = vrot.lane.b32.xlu0 %v1183, 32
    %v1186 = vpop.permute.xlu0 %1185
    %s1188 = scalar_lea.vmem %s61, 8
    %1189 = vst.msk [vmem:[%s1188] sm:$0x3] %vm292, %v1186
    %v1190 = vld [vmem:[%s7] sm:$0x3]
    %v1191 = vld [vmem:[%s85] sm:$0x3]
    %v1192 = vld [vmem:[%s8] sm:$0x3]
    %v1193 = vld [vmem:[%s88] sm:$0x3]
    %s1194 = scalar_lea.vmem %s3, 8
    %v1195 = vld [vmem:[%s1194] sm:$0x3]
    %v1196 = vld [vmem:[%s2] sm:$0xff]
    %v1197 = vld [vmem:[%s2 + $0x8] sm:$0xff]
    %v1198 = vld [vmem:[%s2 + $0x10] sm:$0xff]
    %v1199 = vld [vmem:[%s2 + $0x18] sm:$0xff]
    %v1201 = vsel %vm95, %v1190, 0
    %1203 = vmatprep.subr.mxu0 0.0
    %1204 = vmatpush1.msra.mxu0 %v1196
    %1205 = vmatprep.subr.mxu0 0.0
    %1206 = vmatpush1.msra.mxu0 %v1197
    %1207 = vmatprep.subr.mxu0 0.0
    %1208 = vmatpush1.msra.mxu0 %v1198
    %1209 = vmatprep.subr.mxu0 0.0
    %1210 = vmatpush1.msra.mxu0 %v1199
    %1211 = vmatprep.subr.mxu0 0.0
    %1212 = vmatpush1.msra.mxu0 0.0
    %1213 = vmatprep.subr.mxu0 0.0
    %1214 = vmatpush1.msra.mxu0 0.0
    %1215 = vmatprep.subr.mxu0 0.0
    %1216 = vmatpush1.msra.mxu0 0.0
    %1217 = vmatprep.subr.mxu0 0.0
    %1218 = vmatpush1.msra.mxu0 0.0
    %1219 = vmatprep.subr.mxu0 0.0
    %1220 = vmatpush1.msra.mxu0 0.0
    %1221 = vmatprep.subr.mxu0 0.0
    %1222 = vmatpush1.msra.mxu0 0.0
    %1223 = vmatprep.subr.mxu0 0.0
    %1224 = vmatpush1.msra.mxu0 0.0
    %1225 = vmatprep.subr.mxu0 0.0
    %1226 = vmatpush1.msra.mxu0 0.0
    %1227 = vmatprep.subr.mxu0 0.0
    %1228 = vmatpush1.msra.mxu0 0.0
    %1229 = vmatprep.subr.mxu0 0.0
    %1230 = vmatpush1.msra.mxu0 0.0
    %1231 = vmatprep.subr.mxu0 0.0
    %1232 = vmatpush1.msra.mxu0 0.0
    %1233 = vmatprep.subr.mxu0 0.0
    %1234 = vmatpush1.msra.mxu0 0.0
    %1235 = vmatprep.subr.mxu0 0.0
    %1236 = vmatpush1.msra.mxu0 0.0
    %1237 = vmatprep.subr.mxu0 0.0
    %1238 = vmatpush1.msra.mxu0 0.0
    %1239 = vmatprep.subr.mxu0 0.0
    %1240 = vmatpush1.msra.mxu0 0.0
    %1241 = vmatprep.subr.mxu0 0.0
    %1242 = vmatpush1.msra.mxu0 0.0
    %1243 = vmatprep.subr.mxu0 0.0
    %1244 = vmatpush1.msra.mxu0 0.0
    %1245 = vmatprep.subr.mxu0 0.0
    %1246 = vmatpush1.msra.mxu0 0.0
    %1247 = vmatprep.subr.mxu0 0.0
    %1248 = vmatpush1.msra.mxu0 0.0
    %1249 = vmatprep.subr.mxu0 0.0
    %1250 = vmatpush1.msra.mxu0 0.0
    %1251 = vmatprep.subr.mxu0 0.0
    %1252 = vmatpush1.msra.mxu0 0.0
    %1253 = vmatprep.subr.mxu0 0.0
    %1254 = vmatpush1.msra.mxu0 0.0
    %1255 = vmatprep.subr.mxu0 0.0
    %1256 = vmatpush1.msra.mxu0 0.0
    %1257 = vmatprep.subr.mxu0 0.0
    %1258 = vmatpush1.msra.mxu0 0.0
    %1259 = vmatprep.subr.mxu0 0.0
    %1260 = vmatpush1.msra.mxu0 0.0
    %1261 = vmatprep.subr.mxu0 0.0
    %1262 = vmatpush1.msra.mxu0 0.0
    %1263 = vmatprep.subr.mxu0 0.0
    %1264 = vmatpush1.msra.mxu0 0.0
    %1265 = vmatprep.subr.mxu0 0.0
    %1266 = vmatpush1.msra.mxu0 0.0
    %1267 = vmatprep.mubr.f32.mxu0 0.0
    %1268 = vmatmul.mubr.f32.gmra.mrb[0].mxu0 %v1201
    %v1269 = vpop.f32.mrb[0].mxu0
    %v1270 = vadd.f32 0.0, %v1269
    %v1271 = vpop.f32.mrb[0].mxu0
    %1272 = vdwg.mxu0
    %v1273 = vadd.f32 %v1195, %v1270
    %s1274 = scalar_lea.vmem %s53, 6
    %v1275 = vld [vmem:[%s1274] sm:$0x3]
    %v1276 = vld [vmem:[%s172] sm:$0xff]
    %v1277 = vld [vmem:[%s172 + $0x8] sm:$0xff]
    %v1278 = vld [vmem:[%s172 + $0x10] sm:$0xff]
    %v1279 = vld [vmem:[%s172 + $0x18] sm:$0xff]
    %v1281 = vsel %vm95, %v1191, 0
    %1283 = vmatprep.subr.mxu0 0.0
    %1284 = vmatpush1.msra.mxu0 %v1276
    %1285 = vmatprep.subr.mxu0 0.0
    %1286 = vmatpush1.msra.mxu0 %v1277
    %1287 = vmatprep.subr.mxu0 0.0
    %1288 = vmatpush1.msra.mxu0 %v1278
    %1289 = vmatprep.subr.mxu0 0.0
    %1290 = vmatpush1.msra.mxu0 %v1279
    %1291 = vmatprep.subr.mxu0 0.0
    %1292 = vmatpush1.msra.mxu0 0.0
    %1293 = vmatprep.subr.mxu0 0.0
    %1294 = vmatpush1.msra.mxu0 0.0
    %1295 = vmatprep.subr.mxu0 0.0
    %1296 = vmatpush1.msra.mxu0 0.0
    %1297 = vmatprep.subr.mxu0 0.0
    %1298 = vmatpush1.msra.mxu0 0.0
    %1299 = vmatprep.subr.mxu0 0.0
    %1300 = vmatpush1.msra.mxu0 0.0
    %1301 = vmatprep.subr.mxu0 0.0
    %1302 = vmatpush1.msra.mxu0 0.0
    %1303 = vmatprep.subr.mxu0 0.0
    %1304 = vmatpush1.msra.mxu0 0.0
    %1305 = vmatprep.subr.mxu0 0.0
    %1306 = vmatpush1.msra.mxu0 0.0
    %1307 = vmatprep.subr.mxu0 0.0
    %1308 = vmatpush1.msra.mxu0 0.0
    %1309 = vmatprep.subr.mxu0 0.0
    %1310 = vmatpush1.msra.mxu0 0.0
    %1311 = vmatprep.subr.mxu0 0.0
    %1312 = vmatpush1.msra.mxu0 0.0
    %1313 = vmatprep.subr.mxu0 0.0
    %1314 = vmatpush1.msra.mxu0 0.0
    %1315 = vmatprep.subr.mxu0 0.0
    %1316 = vmatpush1.msra.mxu0 0.0
    %1317 = vmatprep.subr.mxu0 0.0
    %1318 = vmatpush1.msra.mxu0 0.0
    %1319 = vmatprep.subr.mxu0 0.0
    %1320 = vmatpush1.msra.mxu0 0.0
    %1321 = vmatprep.subr.mxu0 0.0
    %1322 = vmatpush1.msra.mxu0 0.0
    %1323 = vmatprep.subr.mxu0 0.0
    %1324 = vmatpush1.msra.mxu0 0.0
    %1325 = vmatprep.subr.mxu0 0.0
    %1326 = vmatpush1.msra.mxu0 0.0
    %1327 = vmatprep.subr.mxu0 0.0
    %1328 = vmatpush1.msra.mxu0 0.0
    %1329 = vmatprep.subr.mxu0 0.0
    %1330 = vmatpush1.msra.mxu0 0.0
    %1331 = vmatprep.subr.mxu0 0.0
    %1332 = vmatpush1.msra.mxu0 0.0
    %1333 = vmatprep.subr.mxu0 0.0
    %1334 = vmatpush1.msra.mxu0 0.0
    %1335 = vmatprep.subr.mxu0 0.0
    %1336 = vmatpush1.msra.mxu0 0.0
    %1337 = vmatprep.subr.mxu0 0.0
    %1338 = vmatpush1.msra.mxu0 0.0
    %1339 = vmatprep.subr.mxu0 0.0
    %1340 = vmatpush1.msra.mxu0 0.0
    %1341 = vmatprep.subr.mxu0 0.0
    %1342 = vmatpush1.msra.mxu0 0.0
    %1343 = vmatprep.subr.mxu0 0.0
    %1344 = vmatpush1.msra.mxu0 0.0
    %1345 = vmatprep.subr.mxu0 0.0
    %1346 = vmatpush1.msra.mxu0 0.0
    %1347 = vmatprep.mubr.f32.mxu0 0.0
    %1348 = vmatmul.mubr.f32.gmra.mrb[0].mxu0 %v1281
    %v1349 = vpop.f32.mrb[0].mxu0
    %v1350 = vadd.f32 0.0, %v1349
    %v1351 = vpop.f32.mrb[0].mxu0
    %1352 = vdwg.mxu0
    %v1353 = vadd.f32 %v1275, %v1350
    %v1354 = vmul.f32 %v1273, 0.5
    %v1355 = vtanh.pop %v1354
    %v1356 = vmul.f32 %v1355, 0.5
    %v1357 = vadd.f32 %v1356, 0.5
    %v1358 = vtanh.pop %v1273
    %1360 = vrot.lane.b32.xlu0 %v1192, 32
    %v1361 = vpop.permute.xlu0 %1360
    %v1363 = vmul.f32 %v1357, %v1361
    %1365 = vrot.lane.b32.xlu0 %v1358, 64
    %v1366 = vpop.permute.xlu0 %1365
    %v1368 = vmul.f32 %v1357, %v1366
    %1370 = vrot.lane.b32.xlu0 %v1368, 32
    %v1371 = vpop.permute.xlu0 %1370
    %v1373 = vadd.f32 %v1363, %v1371
    %v1374 = vtanh.pop %v1373
    %1376 = vrot.lane.b32.xlu0 %v1374, 64
    %v1377 = vpop.permute.xlu0 %1376
    %v1379 = vmul.f32 %v1357, %v1377
    %s1380 = sadd.s32 %s75, 4
    %v1381 = vstv %s1380
    %vm1382 = vcmp.lt.s32.totalorder %v1381, %v65
    %v1383 = vsel %vm1382, 1, 0
    %1384 = vset.pattern.permute.xlu0 0
    %1385 = vperm.xlu0 %1384, %v1383
    %v1386 = vpop.permute.xlu0 %1385
    %vm1387 = vcmp.eq.s32.totalorder %v1386, 1
    %1388 = vrot.lane.b32.xlu0 %v1190, 96
    %v1389 = vpop.permute.xlu0 %1388
    %v1391 = vsel %vm1387, %v1379, %v1389
    %1393 = vrot.lane.b32.xlu0 %v1391, 32
    %v1394 = vpop.permute.xlu0 %1393
    %1396 = vst.msk [vmem:[%s7] sm:$0x3] %vm292, %v1394
    %v1397 = vsel %vm1387, %v1373, %v1361
    %1399 = vrot.lane.b32.xlu0 %v1397, 96
    %v1400 = vpop.permute.xlu0 %1399
    %1402 = vst.msk [vmem:[%s8] sm:$0x3] %vm292, %v1400
    %v1403 = vsel %vm1387, %v1379, 0.0
    %1405 = vrot.lane.b32.xlu0 %v1403, 32
    %v1406 = vpop.permute.xlu0 %1405
    %s1408 = scalar_lea.vmem %s5, 8
    %1409 = vst.msk [vmem:[%s1408] sm:$0x3] %vm292, %v1406
    %v1410 = vmul.f32 %v1353, 0.5
    %v1411 = vtanh.pop %v1410
    %v1412 = vmul.f32 %v1411, 0.5
    %v1413 = vadd.f32 %v1412, 0.5
    %v1414 = vtanh.pop %v1353
    %1416 = vrot.lane.b32.xlu0 %v1193, 32
    %v1417 = vpop.permute.xlu0 %1416
    %v1419 = vmul.f32 %v1413, %v1417
    %1421 = vrot.lane.b32.xlu0 %v1414, 64
    %v1422 = vpop.permute.xlu0 %1421
    %v1424 = vmul.f32 %v1413, %v1422
    %1426 = vrot.lane.b32.xlu0 %v1424, 32
    %v1427 = vpop.permute.xlu0 %1426
    %v1429 = vadd.f32 %v1419, %v1427
    %v1430 = vtanh.pop %v1429
    %1432 = vrot.lane.b32.xlu0 %v1430, 64
    %v1433 = vpop.permute.xlu0 %1432
    %v1435 = vmul.f32 %v1413, %v1433
    %s1436 = sadd.s32 %s77, 3
    %v1437 = vstv %s1436
    %vm1438 = vcmp.lt.s32.totalorder %v1437, %v65
    %v1439 = vsel %vm1438, 1, 0
    %1440 = vset.pattern.permute.xlu0 0
    %1441 = vperm.xlu0 %1440, %v1439
    %v1442 = vpop.permute.xlu0 %1441
    %vm1443 = vcmp.eq.s32.totalorder %v1442, 1
    %1444 = vrot.lane.b32.xlu0 %v1191, 96
    %v1445 = vpop.permute.xlu0 %1444
    %v1447 = vsel %vm1443, %v1435, %v1445
    %1449 = vrot.lane.b32.xlu0 %v1447, 32
    %v1450 = vpop.permute.xlu0 %1449
    %1452 = vst.msk [vmem:[%s85] sm:$0x3] %vm292, %v1450
    %v1453 = vsel %vm1443, %v1429, %v1417
    %1455 = vrot.lane.b32.xlu0 %v1453, 96
    %v1456 = vpop.permute.xlu0 %1455
    %1458 = vst.msk [vmem:[%s88] sm:$0x3] %vm292, %v1456
    %v1459 = vsel %vm1443, %v1435, 0.0
    %1461 = vrot.lane.b32.xlu0 %v1459, 32
    %v1462 = vpop.permute.xlu0 %1461
    %s1464 = scalar_lea.vmem %s61, 6
    %1465 = vst.msk [vmem:[%s1464] sm:$0x3] %vm292, %v1462
    %v1466 = vld [vmem:[%s7] sm:$0x3]
    %v1467 = vld [vmem:[%s85] sm:$0x3]
    %v1468 = vld [vmem:[%s8] sm:$0x3]
    %v1469 = vld [vmem:[%s88] sm:$0x3]
    %s1470 = scalar_lea.vmem %s3, 10
    %v1471 = vld [vmem:[%s1470] sm:$0x3]
    %v1472 = vld [vmem:[%s2] sm:$0xff]
    %v1473 = vld [vmem:[%s2 + $0x8] sm:$0xff]
    %v1474 = vld [vmem:[%s2 + $0x10] sm:$0xff]
    %v1475 = vld [vmem:[%s2 + $0x18] sm:$0xff]
    %v1477 = vsel %vm95, %v1466, 0
    %1479 = vmatprep.subr.mxu0 0.0
    %1480 = vmatpush1.msra.mxu0 %v1472
    %1481 = vmatprep.subr.mxu0 0.0
    %1482 = vmatpush1.msra.mxu0 %v1473
    %1483 = vmatprep.subr.mxu0 0.0
    %1484 = vmatpush1.msra.mxu0 %v1474
    %1485 = vmatprep.subr.mxu0 0.0
    %1486 = vmatpush1.msra.mxu0 %v1475
    %1487 = vmatprep.subr.mxu0 0.0
    %1488 = vmatpush1.msra.mxu0 0.0
    %1489 = vmatprep.subr.mxu0 0.0
    %1490 = vmatpush1.msra.mxu0 0.0
    %1491 = vmatprep.subr.mxu0 0.0
    %1492 = vmatpush1.msra.mxu0 0.0
    %1493 = vmatprep.subr.mxu0 0.0
    %1494 = vmatpush1.msra.mxu0 0.0
    %1495 = vmatprep.subr.mxu0 0.0
    %1496 = vmatpush1.msra.mxu0 0.0
    %1497 = vmatprep.subr.mxu0 0.0
    %1498 = vmatpush1.msra.mxu0 0.0
    %1499 = vmatprep.subr.mxu0 0.0
    %1500 = vmatpush1.msra.mxu0 0.0
    %1501 = vmatprep.subr.mxu0 0.0
    %1502 = vmatpush1.msra.mxu0 0.0
    %1503 = vmatprep.subr.mxu0 0.0
    %1504 = vmatpush1.msra.mxu0 0.0
    %1505 = vmatprep.subr.mxu0 0.0
    %1506 = vmatpush1.msra.mxu0 0.0
    %1507 = vmatprep.subr.mxu0 0.0
    %1508 = vmatpush1.msra.mxu0 0.0
    %1509 = vmatprep.subr.mxu0 0.0
    %1510 = vmatpush1.msra.mxu0 0.0
    %1511 = vmatprep.subr.mxu0 0.0
    %1512 = vmatpush1.msra.mxu0 0.0
    %1513 = vmatprep.subr.mxu0 0.0
    %1514 = vmatpush1.msra.mxu0 0.0
    %1515 = vmatprep.subr.mxu0 0.0
    %1516 = vmatpush1.msra.mxu0 0.0
    %1517 = vmatprep.subr.mxu0 0.0
    %1518 = vmatpush1.msra.mxu0 0.0
    %1519 = vmatprep.subr.mxu0 0.0
    %1520 = vmatpush1.msra.mxu0 0.0
    %1521 = vmatprep.subr.mxu0 0.0
    %1522 = vmatpush1.msra.mxu0 0.0
    %1523 = vmatprep.subr.mxu0 0.0
    %1524 = vmatpush1.msra.mxu0 0.0
    %1525 = vmatprep.subr.mxu0 0.0
    %1526 = vmatpush1.msra.mxu0 0.0
    %1527 = vmatprep.subr.mxu0 0.0
    %1528 = vmatpush1.msra.mxu0 0.0
    %1529 = vmatprep.subr.mxu0 0.0
    %1530 = vmatpush1.msra.mxu0 0.0
    %1531 = vmatprep.subr.mxu0 0.0
    %1532 = vmatpush1.msra.mxu0 0.0
    %1533 = vmatprep.subr.mxu0 0.0
    %1534 = vmatpush1.msra.mxu0 0.0
    %1535 = vmatprep.subr.mxu0 0.0
    %1536 = vmatpush1.msra.mxu0 0.0
    %1537 = vmatprep.subr.mxu0 0.0
    %1538 = vmatpush1.msra.mxu0 0.0
    %1539 = vmatprep.subr.mxu0 0.0
    %1540 = vmatpush1.msra.mxu0 0.0
    %1541 = vmatprep.subr.mxu0 0.0
    %1542 = vmatpush1.msra.mxu0 0.0
    %1543 = vmatprep.mubr.f32.mxu0 0.0
    %1544 = vmatmul.mubr.f32.gmra.mrb[0].mxu0 %v1477
    %v1545 = vpop.f32.mrb[0].mxu0
    %v1546 = vadd.f32 0.0, %v1545
    %v1547 = vpop.f32.mrb[0].mxu0
    %1548 = vdwg.mxu0
    %v1549 = vadd.f32 %v1471, %v1546
    %s1550 = scalar_lea.vmem %s53, 4
    %v1551 = vld [vmem:[%s1550] sm:$0x3]
    %v1552 = vld [vmem:[%s172] sm:$0xff]
    %v1553 = vld [vmem:[%s172 + $0x8] sm:$0xff]
    %v1554 = vld [vmem:[%s172 + $0x10] sm:$0xff]
    %v1555 = vld [vmem:[%s172 + $0x18] sm:$0xff]
    %v1557 = vsel %vm95, %v1467, 0
    %1559 = vmatprep.subr.mxu0 0.0
    %1560 = vmatpush1.msra.mxu0 %v1552
    %1561 = vmatprep.subr.mxu0 0.0
    %1562 = vmatpush1.msra.mxu0 %v1553
    %1563 = vmatprep.subr.mxu0 0.0
    %1564 = vmatpush1.msra.mxu0 %v1554
    %1565 = vmatprep.subr.mxu0 0.0
    %1566 = vmatpush1.msra.mxu0 %v1555
    %1567 = vmatprep.subr.mxu0 0.0
    %1568 = vmatpush1.msra.mxu0 0.0
    %1569 = vmatprep.subr.mxu0 0.0
    %1570 = vmatpush1.msra.mxu0 0.0
    %1571 = vmatprep.subr.mxu0 0.0
    %1572 = vmatpush1.msra.mxu0 0.0
    %1573 = vmatprep.subr.mxu0 0.0
    %1574 = vmatpush1.msra.mxu0 0.0
    %1575 = vmatprep.subr.mxu0 0.0
    %1576 = vmatpush1.msra.mxu0 0.0
    %1577 = vmatprep.subr.mxu0 0.0
    %1578 = vmatpush1.msra.mxu0 0.0
    %1579 = vmatprep.subr.mxu0 0.0
    %1580 = vmatpush1.msra.mxu0 0.0
    %1581 = vmatprep.subr.mxu0 0.0
    %1582 = vmatpush1.msra.mxu0 0.0
    %1583 = vmatprep.subr.mxu0 0.0
    %1584 = vmatpush1.msra.mxu0 0.0
    %1585 = vmatprep.subr.mxu0 0.0
    %1586 = vmatpush1.msra.mxu0 0.0
    %1587 = vmatprep.subr.mxu0 0.0
    %1588 = vmatpush1.msra.mxu0 0.0
    %1589 = vmatprep.subr.mxu0 0.0
    %1590 = vmatpush1.msra.mxu0 0.0
    %1591 = vmatprep.subr.mxu0 0.0
    %1592 = vmatpush1.msra.mxu0 0.0
    %1593 = vmatprep.subr.mxu0 0.0
    %1594 = vmatpush1.msra.mxu0 0.0
    %1595 = vmatprep.subr.mxu0 0.0
    %1596 = vmatpush1.msra.mxu0 0.0
    %1597 = vmatprep.subr.mxu0 0.0
    %1598 = vmatpush1.msra.mxu0 0.0
    %1599 = vmatprep.subr.mxu0 0.0
    %1600 = vmatpush1.msra.mxu0 0.0
    %1601 = vmatprep.subr.mxu0 0.0
    %1602 = vmatpush1.msra.mxu0 0.0
    %1603 = vmatprep.subr.mxu0 0.0
    %1604 = vmatpush1.msra.mxu0 0.0
    %1605 = vmatprep.subr.mxu0 0.0
    %1606 = vmatpush1.msra.mxu0 0.0
    %1607 = vmatprep.subr.mxu0 0.0
    %1608 = vmatpush1.msra.mxu0 0.0
    %1609 = vmatprep.subr.mxu0 0.0
    %1610 = vmatpush1.msra.mxu0 0.0
    %1611 = vmatprep.subr.mxu0 0.0
    %1612 = vmatpush1.msra.mxu0 0.0
    %1613 = vmatprep.subr.mxu0 0.0
    %1614 = vmatpush1.msra.mxu0 0.0
    %1615 = vmatprep.subr.mxu0 0.0
    %1616 = vmatpush1.msra.mxu0 0.0
    %1617 = vmatprep.subr.mxu0 0.0
    %1618 = vmatpush1.msra.mxu0 0.0
    %1619 = vmatprep.subr.mxu0 0.0
    %1620 = vmatpush1.msra.mxu0 0.0
    %1621 = vmatprep.subr.mxu0 0.0
    %1622 = vmatpush1.msra.mxu0 0.0
    %1623 = vmatprep.mubr.f32.mxu0 0.0
    %1624 = vmatmul.mubr.f32.gmra.mrb[0].mxu0 %v1557
    %v1625 = vpop.f32.mrb[0].mxu0
    %v1626 = vadd.f32 0.0, %v1625
    %v1627 = vpop.f32.mrb[0].mxu0
    %1628 = vdwg.mxu0
    %v1629 = vadd.f32 %v1551, %v1626
    %v1630 = vmul.f32 %v1549, 0.5
    %v1631 = vtanh.pop %v1630
    %v1632 = vmul.f32 %v1631, 0.5
    %v1633 = vadd.f32 %v1632, 0.5
    %v1634 = vtanh.pop %v1549
    %1636 = vrot.lane.b32.xlu0 %v1468, 32
    %v1637 = vpop.permute.xlu0 %1636
    %v1639 = vmul.f32 %v1633, %v1637
    %1641 = vrot.lane.b32.xlu0 %v1634, 64
    %v1642 = vpop.permute.xlu0 %1641
    %v1644 = vmul.f32 %v1633, %v1642
    %1646 = vrot.lane.b32.xlu0 %v1644, 32
    %v1647 = vpop.permute.xlu0 %1646
    %v1649 = vadd.f32 %v1639, %v1647
    %v1650 = vtanh.pop %v1649
    %1652 = vrot.lane.b32.xlu0 %v1650, 64
    %v1653 = vpop.permute.xlu0 %1652
    %v1655 = vmul.f32 %v1633, %v1653
    %s1656 = sadd.s32 %s75, 5
    %v1657 = vstv %s1656
    %vm1658 = vcmp.lt.s32.totalorder %v1657, %v65
    %v1659 = vsel %vm1658, 1, 0
    %1660 = vset.pattern.permute.xlu0 0
    %1661 = vperm.xlu0 %1660, %v1659
    %v1662 = vpop.permute.xlu0 %1661
    %vm1663 = vcmp.eq.s32.totalorder %v1662, 1
    %1664 = vrot.lane.b32.xlu0 %v1466, 96
    %v1665 = vpop.permute.xlu0 %1664
    %v1667 = vsel %vm1663, %v1655, %v1665
    %1669 = vrot.lane.b32.xlu0 %v1667, 32
    %v1670 = vpop.permute.xlu0 %1669
    %1672 = vst.msk [vmem:[%s7] sm:$0x3] %vm292, %v1670
    %v1673 = vsel %vm1663, %v1649, %v1637
    %1675 = vrot.lane.b32.xlu0 %v1673, 96
    %v1676 = vpop.permute.xlu0 %1675
    %1678 = vst.msk [vmem:[%s8] sm:$0x3] %vm292, %v1676
    %v1679 = vsel %vm1663, %v1655, 0.0
    %1681 = vrot.lane.b32.xlu0 %v1679, 32
    %v1682 = vpop.permute.xlu0 %1681
    %s1684 = scalar_lea.vmem %s5, 10
    %1685 = vst.msk [vmem:[%s1684] sm:$0x3] %vm292, %v1682
    %v1686 = vmul.f32 %v1629, 0.5
    %v1687 = vtanh.pop %v1686
    %v1688 = vmul.f32 %v1687, 0.5
    %v1689 = vadd.f32 %v1688, 0.5
    %v1690 = vtanh.pop %v1629
    %1692 = vrot.lane.b32.xlu0 %v1469, 32
    %v1693 = vpop.permute.xlu0 %1692
    %v1695 = vmul.f32 %v1689, %v1693
    %1697 = vrot.lane.b32.xlu0 %v1690, 64
    %v1698 = vpop.permute.xlu0 %1697
    %v1700 = vmul.f32 %v1689, %v1698
    %1702 = vrot.lane.b32.xlu0 %v1700, 32
    %v1703 = vpop.permute.xlu0 %1702
    %v1705 = vadd.f32 %v1695, %v1703
    %v1706 = vtanh.pop %v1705
    %1708 = vrot.lane.b32.xlu0 %v1706, 64
    %v1709 = vpop.permute.xlu0 %1708
    %v1711 = vmul.f32 %v1689, %v1709
    %s1712 = sadd.s32 %s77, 2
    %v1713 = vstv %s1712
    %vm1714 = vcmp.lt.s32.totalorder %v1713, %v65
    %v1715 = vsel %vm1714, 1, 0
    %1716 = vset.pattern.permute.xlu0 0
    %1717 = vperm.xlu0 %1716, %v1715
    %v1718 = vpop.permute.xlu0 %1717
    %vm1719 = vcmp.eq.s32.totalorder %v1718, 1
    %1720 = vrot.lane.b32.xlu0 %v1467, 96
    %v1721 = vpop.permute.xlu0 %1720
    %v1723 = vsel %vm1719, %v1711, %v1721
    %1725 = vrot.lane.b32.xlu0 %v1723, 32
    %v1726 = vpop.permute.xlu0 %1725
    %1728 = vst.msk [vmem:[%s85] sm:$0x3] %vm292, %v1726
    %v1729 = vsel %vm1719, %v1705, %v1693
    %1731 = vrot.lane.b32.xlu0 %v1729, 96
    %v1732 = vpop.permute.xlu0 %1731
    %1734 = vst.msk [vmem:[%s88] sm:$0x3] %vm292, %v1732
    %v1735 = vsel %vm1719, %v1711, 0.0
    %1737 = vrot.lane.b32.xlu0 %v1735, 32
    %v1738 = vpop.permute.xlu0 %1737
    %s1740 = scalar_lea.vmem %s61, 4
    %1741 = vst.msk [vmem:[%s1740] sm:$0x3] %vm292, %v1738
    %v1742 = vld [vmem:[%s7] sm:$0x3]
    %v1743 = vld [vmem:[%s85] sm:$0x3]
    %v1744 = vld [vmem:[%s8] sm:$0x3]
    %v1745 = vld [vmem:[%s88] sm:$0x3]
    %s1746 = scalar_lea.vmem %s3, 12
    %v1747 = vld [vmem:[%s1746] sm:$0x3]
    %v1748 = vld [vmem:[%s2] sm:$0xff]
    %v1749 = vld [vmem:[%s2 + $0x8] sm:$0xff]
    %v1750 = vld [vmem:[%s2 + $0x10] sm:$0xff]
    %v1751 = vld [vmem:[%s2 + $0x18] sm:$0xff]
    %v1753 = vsel %vm95, %v1742, 0
    %1755 = vmatprep.subr.mxu0 0.0
    %1756 = vmatpush1.msra.mxu0 %v1748
    %1757 = vmatprep.subr.mxu0 0.0
    %1758 = vmatpush1.msra.mxu0 %v1749
    %1759 = vmatprep.subr.mxu0 0.0
    %1760 = vmatpush1.msra.mxu0 %v1750
    %1761 = vmatprep.subr.mxu0 0.0
    %1762 = vmatpush1.msra.mxu0 %v1751
    %1763 = vmatprep.subr.mxu0 0.0
    %1764 = vmatpush1.msra.mxu0 0.0
    %1765 = vmatprep.subr.mxu0 0.0
    %1766 = vmatpush1.msra.mxu0 0.0
    %1767 = vmatprep.subr.mxu0 0.0
    %1768 = vmatpush1.msra.mxu0 0.0
    %1769 = vmatprep.subr.mxu0 0.0
    %1770 = vmatpush1.msra.mxu0 0.0
    %1771 = vmatprep.subr.mxu0 0.0
    %1772 = vmatpush1.msra.mxu0 0.0
    %1773 = vmatprep.subr.mxu0 0.0
    %1774 = vmatpush1.msra.mxu0 0.0
    %1775 = vmatprep.subr.mxu0 0.0
    %1776 = vmatpush1.msra.mxu0 0.0
    %1777 = vmatprep.subr.mxu0 0.0
    %1778 = vmatpush1.msra.mxu0 0.0
    %1779 = vmatprep.subr.mxu0 0.0
    %1780 = vmatpush1.msra.mxu0 0.0
    %1781 = vmatprep.subr.mxu0 0.0
    %1782 = vmatpush1.msra.mxu0 0.0
    %1783 = vmatprep.subr.mxu0 0.0
    %1784 = vmatpush1.msra.mxu0 0.0
    %1785 = vmatprep.subr.mxu0 0.0
    %1786 = vmatpush1.msra.mxu0 0.0
    %1787 = vmatprep.subr.mxu0 0.0
    %1788 = vmatpush1.msra.mxu0 0.0
    %1789 = vmatprep.subr.mxu0 0.0
    %1790 = vmatpush1.msra.mxu0 0.0
    %1791 = vmatprep.subr.mxu0 0.0
    %1792 = vmatpush1.msra.mxu0 0.0
    %1793 = vmatprep.subr.mxu0 0.0
    %1794 = vmatpush1.msra.mxu0 0.0
    %1795 = vmatprep.subr.mxu0 0.0
    %1796 = vmatpush1.msra.mxu0 0.0
    %1797 = vmatprep.subr.mxu0 0.0
    %1798 = vmatpush1.msra.mxu0 0.0
    %1799 = vmatprep.subr.mxu0 0.0
    %1800 = vmatpush1.msra.mxu0 0.0
    %1801 = vmatprep.subr.mxu0 0.0
    %1802 = vmatpush1.msra.mxu0 0.0
    %1803 = vmatprep.subr.mxu0 0.0
    %1804 = vmatpush1.msra.mxu0 0.0
    %1805 = vmatprep.subr.mxu0 0.0
    %1806 = vmatpush1.msra.mxu0 0.0
    %1807 = vmatprep.subr.mxu0 0.0
    %1808 = vmatpush1.msra.mxu0 0.0
    %1809 = vmatprep.subr.mxu0 0.0
    %1810 = vmatpush1.msra.mxu0 0.0
    %1811 = vmatprep.subr.mxu0 0.0
    %1812 = vmatpush1.msra.mxu0 0.0
    %1813 = vmatprep.subr.mxu0 0.0
    %1814 = vmatpush1.msra.mxu0 0.0
    %1815 = vmatprep.subr.mxu0 0.0
    %1816 = vmatpush1.msra.mxu0 0.0
    %1817 = vmatprep.subr.mxu0 0.0
    %1818 = vmatpush1.msra.mxu0 0.0
    %1819 = vmatprep.mubr.f32.mxu0 0.0
    %1820 = vmatmul.mubr.f32.gmra.mrb[0].mxu0 %v1753
    %v1821 = vpop.f32.mrb[0].mxu0
    %v1822 = vadd.f32 0.0, %v1821
    %v1823 = vpop.f32.mrb[0].mxu0
    %1824 = vdwg.mxu0
    %v1825 = vadd.f32 %v1747, %v1822
    %s1826 = scalar_lea.vmem %s53, 2
    %v1827 = vld [vmem:[%s1826] sm:$0x3]
    %v1828 = vld [vmem:[%s172] sm:$0xff]
    %v1829 = vld [vmem:[%s172 + $0x8] sm:$0xff]
    %v1830 = vld [vmem:[%s172 + $0x10] sm:$0xff]
    %v1831 = vld [vmem:[%s172 + $0x18] sm:$0xff]
    %v1833 = vsel %vm95, %v1743, 0
    %1835 = vmatprep.subr.mxu0 0.0
    %1836 = vmatpush1.msra.mxu0 %v1828
    %1837 = vmatprep.subr.mxu0 0.0
    %1838 = vmatpush1.msra.mxu0 %v1829
    %1839 = vmatprep.subr.mxu0 0.0
    %1840 = vmatpush1.msra.mxu0 %v1830
    %1841 = vmatprep.subr.mxu0 0.0
    %1842 = vmatpush1.msra.mxu0 %v1831
    %1843 = vmatprep.subr.mxu0 0.0
    %1844 = vmatpush1.msra.mxu0 0.0
    %1845 = vmatprep.subr.mxu0 0.0
    %1846 = vmatpush1.msra.mxu0 0.0
    %1847 = vmatprep.subr.mxu0 0.0
    %1848 = vmatpush1.msra.mxu0 0.0
    %1849 = vmatprep.subr.mxu0 0.0
    %1850 = vmatpush1.msra.mxu0 0.0
    %1851 = vmatprep.subr.mxu0 0.0
    %1852 = vmatpush1.msra.mxu0 0.0
    %1853 = vmatprep.subr.mxu0 0.0
    %1854 = vmatpush1.msra.mxu0 0.0
    %1855 = vmatprep.subr.mxu0 0.0
    %1856 = vmatpush1.msra.mxu0 0.0
    %1857 = vmatprep.subr.mxu0 0.0
    %1858 = vmatpush1.msra.mxu0 0.0
    %1859 = vmatprep.subr.mxu0 0.0
    %1860 = vmatpush1.msra.mxu0 0.0
    %1861 = vmatprep.subr.mxu0 0.0
    %1862 = vmatpush1.msra.mxu0 0.0
    %1863 = vmatprep.subr.mxu0 0.0
    %1864 = vmatpush1.msra.mxu0 0.0
    %1865 = vmatprep.subr.mxu0 0.0
    %1866 = vmatpush1.msra.mxu0 0.0
    %1867 = vmatprep.subr.mxu0 0.0
    %1868 = vmatpush1.msra.mxu0 0.0
    %1869 = vmatprep.subr.mxu0 0.0
    %1870 = vmatpush1.msra.mxu0 0.0
    %1871 = vmatprep.subr.mxu0 0.0
    %1872 = vmatpush1.msra.mxu0 0.0
    %1873 = vmatprep.subr.mxu0 0.0
    %1874 = vmatpush1.msra.mxu0 0.0
    %1875 = vmatprep.subr.mxu0 0.0
    %1876 = vmatpush1.msra.mxu0 0.0
    %1877 = vmatprep.subr.mxu0 0.0
    %1878 = vmatpush1.msra.mxu0 0.0
    %1879 = vmatprep.subr.mxu0 0.0
    %1880 = vmatpush1.msra.mxu0 0.0
    %1881 = vmatprep.subr.mxu0 0.0
    %1882 = vmatpush1.msra.mxu0 0.0
    %1883 = vmatprep.subr.mxu0 0.0
    %1884 = vmatpush1.msra.mxu0 0.0
    %1885 = vmatprep.subr.mxu0 0.0
    %1886 = vmatpush1.msra.mxu0 0.0
    %1887 = vmatprep.subr.mxu0 0.0
    %1888 = vmatpush1.msra.mxu0 0.0
    %1889 = vmatprep.subr.mxu0 0.0
    %1890 = vmatpush1.msra.mxu0 0.0
    %1891 = vmatprep.subr.mxu0 0.0
    %1892 = vmatpush1.msra.mxu0 0.0
    %1893 = vmatprep.subr.mxu0 0.0
    %1894 = vmatpush1.msra.mxu0 0.0
    %1895 = vmatprep.subr.mxu0 0.0
    %1896 = vmatpush1.msra.mxu0 0.0
    %1897 = vmatprep.subr.mxu0 0.0
    %1898 = vmatpush1.msra.mxu0 0.0
    %1899 = vmatprep.mubr.f32.mxu0 0.0
    %1900 = vmatmul.mubr.f32.gmra.mrb[0].mxu0 %v1833
    %v1901 = vpop.f32.mrb[0].mxu0
    %v1902 = vadd.f32 0.0, %v1901
    %v1903 = vpop.f32.mrb[0].mxu0
    %1904 = vdwg.mxu0
    %v1905 = vadd.f32 %v1827, %v1902
    %v1906 = vmul.f32 %v1825, 0.5
    %v1907 = vtanh.pop %v1906
    %v1908 = vmul.f32 %v1907, 0.5
    %v1909 = vadd.f32 %v1908, 0.5
    %v1910 = vtanh.pop %v1825
    %1912 = vrot.lane.b32.xlu0 %v1744, 32
    %v1913 = vpop.permute.xlu0 %1912
    %v1915 = vmul.f32 %v1909, %v1913
    %1917 = vrot.lane.b32.xlu0 %v1910, 64
    %v1918 = vpop.permute.xlu0 %1917
    %v1920 = vmul.f32 %v1909, %v1918
    %1922 = vrot.lane.b32.xlu0 %v1920, 32
    %v1923 = vpop.permute.xlu0 %1922
    %v1925 = vadd.f32 %v1915, %v1923
    %v1926 = vtanh.pop %v1925
    %1928 = vrot.lane.b32.xlu0 %v1926, 64
    %v1929 = vpop.permute.xlu0 %1928
    %v1931 = vmul.f32 %v1909, %v1929
    %s1932 = sadd.s32 %s75, 6
    %v1933 = vstv %s1932
    %vm1934 = vcmp.lt.s32.totalorder %v1933, %v65
    %v1935 = vsel %vm1934, 1, 0
    %1936 = vset.pattern.permute.xlu0 0
    %1937 = vperm.xlu0 %1936, %v1935
    %v1938 = vpop.permute.xlu0 %1937
    %vm1939 = vcmp.eq.s32.totalorder %v1938, 1
    %1940 = vrot.lane.b32.xlu0 %v1742, 96
    %v1941 = vpop.permute.xlu0 %1940
    %v1943 = vsel %vm1939, %v1931, %v1941
    %1945 = vrot.lane.b32.xlu0 %v1943, 32
    %v1946 = vpop.permute.xlu0 %1945
    %1948 = vst.msk [vmem:[%s7] sm:$0x3] %vm292, %v1946
    %v1949 = vsel %vm1939, %v1925, %v1913
    %1951 = vrot.lane.b32.xlu0 %v1949, 96
    %v1952 = vpop.permute.xlu0 %1951
    %1954 = vst.msk [vmem:[%s8] sm:$0x3] %vm292, %v1952
    %v1955 = vsel %vm1939, %v1931, 0.0
    %1957 = vrot.lane.b32.xlu0 %v1955, 32
    %v1958 = vpop.permute.xlu0 %1957
    %s1960 = scalar_lea.vmem %s5, 12
    %1961 = vst.msk [vmem:[%s1960] sm:$0x3] %vm292, %v1958
    %v1962 = vmul.f32 %v1905, 0.5
    %v1963 = vtanh.pop %v1962
    %v1964 = vmul.f32 %v1963, 0.5
    %v1965 = vadd.f32 %v1964, 0.5
    %v1966 = vtanh.pop %v1905
    %1968 = vrot.lane.b32.xlu0 %v1745, 32
    %v1969 = vpop.permute.xlu0 %1968
    %v1971 = vmul.f32 %v1965, %v1969
    %1973 = vrot.lane.b32.xlu0 %v1966, 64
    %v1974 = vpop.permute.xlu0 %1973
    %v1976 = vmul.f32 %v1965, %v1974
    %1978 = vrot.lane.b32.xlu0 %v1976, 32
    %v1979 = vpop.permute.xlu0 %1978
    %v1981 = vadd.f32 %v1971, %v1979
    %v1982 = vtanh.pop %v1981
    %1984 = vrot.lane.b32.xlu0 %v1982, 64
    %v1985 = vpop.permute.xlu0 %1984
    %v1987 = vmul.f32 %v1965, %v1985
    %s1988 = sadd.s32 %s77, 1
    %v1989 = vstv %s1988
    %vm1990 = vcmp.lt.s32.totalorder %v1989, %v65
    %v1991 = vsel %vm1990, 1, 0
    %1992 = vset.pattern.permute.xlu0 0
    %1993 = vperm.xlu0 %1992, %v1991
    %v1994 = vpop.permute.xlu0 %1993
    %vm1995 = vcmp.eq.s32.totalorder %v1994, 1
    %1996 = vrot.lane.b32.xlu0 %v1743, 96
    %v1997 = vpop.permute.xlu0 %1996
    %v1999 = vsel %vm1995, %v1987, %v1997
    %2001 = vrot.lane.b32.xlu0 %v1999, 32
    %v2002 = vpop.permute.xlu0 %2001
    %2004 = vst.msk [vmem:[%s85] sm:$0x3] %vm292, %v2002
    %v2005 = vsel %vm1995, %v1981, %v1969
    %2007 = vrot.lane.b32.xlu0 %v2005, 96
    %v2008 = vpop.permute.xlu0 %2007
    %2010 = vst.msk [vmem:[%s88] sm:$0x3] %vm292, %v2008
    %v2011 = vsel %vm1995, %v1987, 0.0
    %2013 = vrot.lane.b32.xlu0 %v2011, 32
    %v2014 = vpop.permute.xlu0 %2013
    %s2016 = scalar_lea.vmem %s61, 2
    %2017 = vst.msk [vmem:[%s2016] sm:$0x3] %vm292, %v2014
    %v2018 = vld [vmem:[%s7] sm:$0x3]
    %v2019 = vld [vmem:[%s85] sm:$0x3]
    %v2020 = vld [vmem:[%s8] sm:$0x3]
    %v2021 = vld [vmem:[%s88] sm:$0x3]
    %s2022 = scalar_lea.vmem %s3, 14
    %v2023 = vld [vmem:[%s2022] sm:$0x3]
    %v2024 = vld [vmem:[%s2] sm:$0xff]
    %v2025 = vld [vmem:[%s2 + $0x8] sm:$0xff]
    %v2026 = vld [vmem:[%s2 + $0x10] sm:$0xff]
    %v2027 = vld [vmem:[%s2 + $0x18] sm:$0xff]
    %v2029 = vsel %vm95, %v2018, 0
    %2031 = vmatprep.subr.mxu0 0.0
    %2032 = vmatpush1.msra.mxu0 %v2024
    %2033 = vmatprep.subr.mxu0 0.0
    %2034 = vmatpush1.msra.mxu0 %v2025
    %2035 = vmatprep.subr.mxu0 0.0
    %2036 = vmatpush1.msra.mxu0 %v2026
    %2037 = vmatprep.subr.mxu0 0.0
    %2038 = vmatpush1.msra.mxu0 %v2027
    %2039 = vmatprep.subr.mxu0 0.0
    %2040 = vmatpush1.msra.mxu0 0.0
    %2041 = vmatprep.subr.mxu0 0.0
    %2042 = vmatpush1.msra.mxu0 0.0
    %2043 = vmatprep.subr.mxu0 0.0
    %2044 = vmatpush1.msra.mxu0 0.0
    %2045 = vmatprep.subr.mxu0 0.0
    %2046 = vmatpush1.msra.mxu0 0.0
    %2047 = vmatprep.subr.mxu0 0.0
    %2048 = vmatpush1.msra.mxu0 0.0
    %2049 = vmatprep.subr.mxu0 0.0
    %2050 = vmatpush1.msra.mxu0 0.0
    %2051 = vmatprep.subr.mxu0 0.0
    %2052 = vmatpush1.msra.mxu0 0.0
    %2053 = vmatprep.subr.mxu0 0.0
    %2054 = vmatpush1.msra.mxu0 0.0
    %2055 = vmatprep.subr.mxu0 0.0
    %2056 = vmatpush1.msra.mxu0 0.0
    %2057 = vmatprep.subr.mxu0 0.0
    %2058 = vmatpush1.msra.mxu0 0.0
    %2059 = vmatprep.subr.mxu0 0.0
    %2060 = vmatpush1.msra.mxu0 0.0
    %2061 = vmatprep.subr.mxu0 0.0
    %2062 = vmatpush1.msra.mxu0 0.0
    %2063 = vmatprep.subr.mxu0 0.0
    %2064 = vmatpush1.msra.mxu0 0.0
    %2065 = vmatprep.subr.mxu0 0.0
    %2066 = vmatpush1.msra.mxu0 0.0
    %2067 = vmatprep.subr.mxu0 0.0
    %2068 = vmatpush1.msra.mxu0 0.0
    %2069 = vmatprep.subr.mxu0 0.0
    %2070 = vmatpush1.msra.mxu0 0.0
    %2071 = vmatprep.subr.mxu0 0.0
    %2072 = vmatpush1.msra.mxu0 0.0
    %2073 = vmatprep.subr.mxu0 0.0
    %2074 = vmatpush1.msra.mxu0 0.0
    %2075 = vmatprep.subr.mxu0 0.0
    %2076 = vmatpush1.msra.mxu0 0.0
    %2077 = vmatprep.subr.mxu0 0.0
    %2078 = vmatpush1.msra.mxu0 0.0
    %2079 = vmatprep.subr.mxu0 0.0
    %2080 = vmatpush1.msra.mxu0 0.0
    %2081 = vmatprep.subr.mxu0 0.0
    %2082 = vmatpush1.msra.mxu0 0.0
    %2083 = vmatprep.subr.mxu0 0.0
    %2084 = vmatpush1.msra.mxu0 0.0
    %2085 = vmatprep.subr.mxu0 0.0
    %2086 = vmatpush1.msra.mxu0 0.0
    %2087 = vmatprep.subr.mxu0 0.0
    %2088 = vmatpush1.msra.mxu0 0.0
    %2089 = vmatprep.subr.mxu0 0.0
    %2090 = vmatpush1.msra.mxu0 0.0
    %2091 = vmatprep.subr.mxu0 0.0
    %2092 = vmatpush1.msra.mxu0 0.0
    %2093 = vmatprep.subr.mxu0 0.0
    %2094 = vmatpush1.msra.mxu0 0.0
    %2095 = vmatprep.mubr.f32.mxu0 0.0
    %2096 = vmatmul.mubr.f32.gmra.mrb[0].mxu0 %v2029
    %v2097 = vpop.f32.mrb[0].mxu0
    %v2098 = vadd.f32 0.0, %v2097
    %v2099 = vpop.f32.mrb[0].mxu0
    %2100 = vdwg.mxu0
    %v2101 = vadd.f32 %v2023, %v2098
    %v2102 = vld [vmem:[%s53] sm:$0x3]
    %v2103 = vld [vmem:[%s172] sm:$0xff]
    %v2104 = vld [vmem:[%s172 + $0x8] sm:$0xff]
    %v2105 = vld [vmem:[%s172 + $0x10] sm:$0xff]
    %v2106 = vld [vmem:[%s172 + $0x18] sm:$0xff]
    %v2108 = vsel %vm95, %v2019, 0
    %2110 = vmatprep.subr.mxu0 0.0
    %2111 = vmatpush1.msra.mxu0 %v2103
    %2112 = vmatprep.subr.mxu0 0.0
    %2113 = vmatpush1.msra.mxu0 %v2104
    %2114 = vmatprep.subr.mxu0 0.0
    %2115 = vmatpush1.msra.mxu0 %v2105
    %2116 = vmatprep.subr.mxu0 0.0
    %2117 = vmatpush1.msra.mxu0 %v2106
    %2118 = vmatprep.subr.mxu0 0.0
    %2119 = vmatpush1.msra.mxu0 0.0
    %2120 = vmatprep.subr.mxu0 0.0
    %2121 = vmatpush1.msra.mxu0 0.0
    %2122 = vmatprep.subr.mxu0 0.0
    %2123 = vmatpush1.msra.mxu0 0.0
    %2124 = vmatprep.subr.mxu0 0.0
    %2125 = vmatpush1.msra.mxu0 0.0
    %2126 = vmatprep.subr.mxu0 0.0
    %2127 = vmatpush1.msra.mxu0 0.0
    %2128 = vmatprep.subr.mxu0 0.0
    %2129 = vmatpush1.msra.mxu0 0.0
    %2130 = vmatprep.subr.mxu0 0.0
    %2131 = vmatpush1.msra.mxu0 0.0
    %2132 = vmatprep.subr.mxu0 0.0
    %2133 = vmatpush1.msra.mxu0 0.0
    %2134 = vmatprep.subr.mxu0 0.0
    %2135 = vmatpush1.msra.mxu0 0.0
    %2136 = vmatprep.subr.mxu0 0.0
    %2137 = vmatpush1.msra.mxu0 0.0
    %2138 = vmatprep.subr.mxu0 0.0
    %2139 = vmatpush1.msra.mxu0 0.0
    %2140 = vmatprep.subr.mxu0 0.0
    %2141 = vmatpush1.msra.mxu0 0.0
    %2142 = vmatprep.subr.mxu0 0.0
    %2143 = vmatpush1.msra.mxu0 0.0
    %2144 = vmatprep.subr.mxu0 0.0
    %2145 = vmatpush1.msra.mxu0 0.0
    %2146 = vmatprep.subr.mxu0 0.0
    %2147 = vmatpush1.msra.mxu0 0.0
    %2148 = vmatprep.subr.mxu0 0.0
    %2149 = vmatpush1.msra.mxu0 0.0
    %2150 = vmatprep.subr.mxu0 0.0
    %2151 = vmatpush1.msra.mxu0 0.0
    %2152 = vmatprep.subr.mxu0 0.0
    %2153 = vmatpush1.msra.mxu0 0.0
    %2154 = vmatprep.subr.mxu0 0.0
    %2155 = vmatpush1.msra.mxu0 0.0
    %2156 = vmatprep.subr.mxu0 0.0
    %2157 = vmatpush1.msra.mxu0 0.0
    %2158 = vmatprep.subr.mxu0 0.0
    %2159 = vmatpush1.msra.mxu0 0.0
    %2160 = vmatprep.subr.mxu0 0.0
    %2161 = vmatpush1.msra.mxu0 0.0
    %2162 = vmatprep.subr.mxu0 0.0
    %2163 = vmatpush1.msra.mxu0 0.0
    %2164 = vmatprep.subr.mxu0 0.0
    %2165 = vmatpush1.msra.mxu0 0.0
    %2166 = vmatprep.subr.mxu0 0.0
    %2167 = vmatpush1.msra.mxu0 0.0
    %2168 = vmatprep.subr.mxu0 0.0
    %2169 = vmatpush1.msra.mxu0 0.0
    %2170 = vmatprep.subr.mxu0 0.0
    %2171 = vmatpush1.msra.mxu0 0.0
    %2172 = vmatprep.subr.mxu0 0.0
    %2173 = vmatpush1.msra.mxu0 0.0
    %2174 = vmatprep.mubr.f32.mxu0 0.0
    %2175 = vmatmul.mubr.f32.gmra.mrb[0].mxu0 %v2108
    %v2176 = vpop.f32.mrb[0].mxu0
    %v2177 = vadd.f32 0.0, %v2176
    %v2178 = vpop.f32.mrb[0].mxu0
    %2179 = vdwg.mxu0
    %v2180 = vadd.f32 %v2102, %v2177
    %v2181 = vmul.f32 %v2101, 0.5
    %v2182 = vtanh.pop %v2181
    %v2183 = vmul.f32 %v2182, 0.5
    %v2184 = vadd.f32 %v2183, 0.5
    %v2185 = vtanh.pop %v2101
    %2187 = vrot.lane.b32.xlu0 %v2020, 32
    %v2188 = vpop.permute.xlu0 %2187
    %v2190 = vmul.f32 %v2184, %v2188
    %2192 = vrot.lane.b32.xlu0 %v2185, 64
    %v2193 = vpop.permute.xlu0 %2192
    %v2195 = vmul.f32 %v2184, %v2193
    %2197 = vrot.lane.b32.xlu0 %v2195, 32
    %v2198 = vpop.permute.xlu0 %2197
    %v2200 = vadd.f32 %v2190, %v2198
    %v2201 = vtanh.pop %v2200
    %2203 = vrot.lane.b32.xlu0 %v2201, 64
    %v2204 = vpop.permute.xlu0 %2203
    %v2206 = vmul.f32 %v2184, %v2204
    %s2207 = sadd.s32 %s75, 7
    %v2208 = vstv %s2207
    %vm2209 = vcmp.lt.s32.totalorder %v2208, %v65
    %v2210 = vsel %vm2209, 1, 0
    %2211 = vset.pattern.permute.xlu0 0
    %2212 = vperm.xlu0 %2211, %v2210
    %v2213 = vpop.permute.xlu0 %2212
    %vm2214 = vcmp.eq.s32.totalorder %v2213, 1
    %2215 = vrot.lane.b32.xlu0 %v2018, 96
    %v2216 = vpop.permute.xlu0 %2215
    %v2218 = vsel %vm2214, %v2206, %v2216
    %2220 = vrot.lane.b32.xlu0 %v2218, 32
    %v2221 = vpop.permute.xlu0 %2220
    %2223 = vst.msk [vmem:[%s7] sm:$0x3] %vm292, %v2221
    %v2224 = vsel %vm2214, %v2200, %v2188
    %2226 = vrot.lane.b32.xlu0 %v2224, 96
    %v2227 = vpop.permute.xlu0 %2226
    %2229 = vst.msk [vmem:[%s8] sm:$0x3] %vm292, %v2227
    %v2230 = vsel %vm2214, %v2206, 0.0
    %2232 = vrot.lane.b32.xlu0 %v2230, 32
    %v2233 = vpop.permute.xlu0 %2232
    %s2235 = scalar_lea.vmem %s5, 14
    %2236 = vst.msk [vmem:[%s2235] sm:$0x3] %vm292, %v2233
    %v2237 = vmul.f32 %v2180, 0.5
    %v2238 = vtanh.pop %v2237
    %v2239 = vmul.f32 %v2238, 0.5
    %v2240 = vadd.f32 %v2239, 0.5
    %v2241 = vtanh.pop %v2180
    %2243 = vrot.lane.b32.xlu0 %v2021, 32
    %v2244 = vpop.permute.xlu0 %2243
    %v2246 = vmul.f32 %v2240, %v2244
    %2248 = vrot.lane.b32.xlu0 %v2241, 64
    %v2249 = vpop.permute.xlu0 %2248
    %v2251 = vmul.f32 %v2240, %v2249
    %2253 = vrot.lane.b32.xlu0 %v2251, 32
    %v2254 = vpop.permute.xlu0 %2253
    %v2256 = vadd.f32 %v2246, %v2254
    %v2257 = vtanh.pop %v2256
    %2259 = vrot.lane.b32.xlu0 %v2257, 64
    %v2260 = vpop.permute.xlu0 %2259
    %v2262 = vmul.f32 %v2240, %v2260
    %v2263 = vstv %s77
    %vm2264 = vcmp.lt.s32.totalorder %v2263, %v65
    %v2265 = vsel %vm2264, 1, 0
    %2266 = vset.pattern.permute.xlu0 0
    %2267 = vperm.xlu0 %2266, %v2265
    %v2268 = vpop.permute.xlu0 %2267
    %vm2269 = vcmp.eq.s32.totalorder %v2268, 1
    %2270 = vrot.lane.b32.xlu0 %v2019, 96
    %v2271 = vpop.permute.xlu0 %2270
    %v2273 = vsel %vm2269, %v2262, %v2271
    %2275 = vrot.lane.b32.xlu0 %v2273, 32
    %v2276 = vpop.permute.xlu0 %2275
    %2278 = vst.msk [vmem:[%s85] sm:$0x3] %vm292, %v2276
    %v2279 = vsel %vm2269, %v2256, %v2244
    %2281 = vrot.lane.b32.xlu0 %v2279, 96
    %v2282 = vpop.permute.xlu0 %2281
    %2284 = vst.msk [vmem:[%s88] sm:$0x3] %vm292, %v2282
    %v2285 = vsel %vm2269, %v2262, 0.0
    %2287 = vrot.lane.b32.xlu0 %v2285, 32
    %v2288 = vpop.permute.xlu0 %2287
    %2290 = vst.msk [vmem:[%s61] sm:$0x3] %vm292, %v2288
  $region25: #{encoder_forward.2} parent=0 // pred_fallthru
    _
  %p2291 = pneg %p80
  // Predicated region
  $region26: #{encoder_forward.2} parent=0 // pred_check
    _
  $region27: #{encoder_forward.2} parent=0 // pred_check_branch
    %2293 = sbr.rel (%p80) target = $region29
  $region28: #{encoder_forward.2} parent=0 // pred_region
    %vm2294 = vcmask 254976
    %2295 = vst.msk [vmem:[%s5] sm:$0x3] %vm2294, 0.0
    %2296 = vst.msk [vmem:[%s5 + $0x2] sm:$0x3] %vm2294, 0.0
    %2297 = vst.msk [vmem:[%s5 + $0x4] sm:$0x3] %vm2294, 0.0
    %2298 = vst.msk [vmem:[%s5 + $0x6] sm:$0x3] %vm2294, 0.0
    %2299 = vst.msk [vmem:[%s5 + $0x8] sm:$0x3] %vm2294, 0.0
    %2300 = vst.msk [vmem:[%s5 + $0xa] sm:$0x3] %vm2294, 0.0
    %2301 = vst.msk [vmem:[%s5 + $0xc] sm:$0x3] %vm2294, 0.0
    %2302 = vst.msk [vmem:[%s5 + $0xe] sm:$0x3] %vm2294, 0.0
    %2303 = vst.msk [vmem:[%s61] sm:$0x3] %vm2294, 0.0
    %2304 = vst.msk [vmem:[%s61 + $0x2] sm:$0x3] %vm2294, 0.0
    %2305 = vst.msk [vmem:[%s61 + $0x4] sm:$0x3] %vm2294, 0.0
    %2306 = vst.msk [vmem:[%s61 + $0x6] sm:$0x3] %vm2294, 0.0
    %2307 = vst.msk [vmem:[%s61 + $0x8] sm:$0x3] %vm2294, 0.0
    %2308 = vst.msk [vmem:[%s61 + $0xa] sm:$0x3] %vm2294, 0.0
    %2309 = vst.msk [vmem:[%s61 + $0xc] sm:$0x3] %vm2294, 0.0
    %2310 = vst.msk [vmem:[%s61 + $0xe] sm:$0x3] %vm2294, 0.0
  $region29: #{encoder_forward.2} parent=0 // pred_fallthru
    _
  %s2311 = ssub.s32 0, 0
  %s2312 = smul.u32 8, %s2311
  %p2313 = scmp.lt.s32.totalorder %s2312, 7
  %s2314 = scalar_select %p2313, %s2312, 7
  %s2315 = smul.addr %s2314, 2
  %s2316 = scalar_lea.vmem %s6, %s2315
  // Predicated region
  $region30: #{encoder_forward.2} parent=0 // pred_check
    _
  $region31: #{encoder_forward.2} parent=0 // pred_check_branch
    %2318 = sbr.rel (0) target = $region33
  $region32: #{encoder_forward.2} parent=0 // pred_region
    _
  $region33: #{encoder_forward.2} parent=0 // pred_fallthru
    _
  // Predicated region
  $region34: #{encoder_forward.2} parent=0 // pred_check
    _
  $region35: #{encoder_forward.2} parent=0 // pred_check_branch
    %2320 = sbr.rel (0) target = $region37
  $region36: #{encoder_forward.2} parent=0 // pred_region
    %s2321 = ssub.s32 0, 0
    %s2322 = smul.u32 8, %s2321
  $region37: #{encoder_forward.2} parent=0 // pred_fallthru
    _
  // Predicated region
  $region38: #{encoder_forward.2} parent=0 // pred_check
    _
  $region39: #{encoder_forward.2} parent=0 // pred_check_branch
    %2324 = sbr.rel (0) target = $region41
  $region40: #{encoder_forward.2} parent=0 // pred_region
    _
  $region41: #{encoder_forward.2} parent=0 // pred_fallthru
    _
  // Predicated region
  $region42: #{encoder_forward.2} parent=0 // pred_check
    _
  $region43: #{encoder_forward.2} parent=0 // pred_check_branch
    %2326 = sbr.rel (0) target = $region45
  $region44: #{encoder_forward.2} parent=0 // pred_region
    _
  $region45: #{encoder_forward.2} parent=0 // pred_fallthru
    _
  // Predicated region
  $region46: #{encoder_forward.2} parent=0 // pred_check
    _
  $region47: #{encoder_forward.2} parent=0 // pred_check_branch
    %2328 = sbr.rel (0) target = $region49
  $region48: #{encoder_forward.2} parent=0 // pred_region
    _
  $region49: #{encoder_forward.2} parent=0 // pred_fallthru
    _
  // Predicated region
  $region50: #{encoder_forward.2} parent=0 // pred_check
    _
  $region51: #{encoder_forward.2} parent=0 // pred_check_branch
    %2330 = sbr.rel (0) target = $region53
  $region52: #{encoder_forward.2} parent=0 // pred_region
    %s2331 = ssub.s32 0, 0
    %s2332 = smul.u32 8, %s2331
    %p2333 = scmp.lt.s32.totalorder %s2332, 7
    %s2334 = scalar_select %p2333, %s2332, 7
    %s2335 = smul.addr %s2334, 2
    %s2336 = scalar_lea.vmem %s6, %s2335
  $region53: #{encoder_forward.2} parent=0 // pred_fallthru
    _
  // Predicated region
  $region54: #{encoder_forward.2} parent=0 // pred_check
    _
  $region55: #{encoder_forward.2} parent=0 // pred_check_branch
    %2338 = sbr.rel (0) target = $region57
  $region56: #{encoder_forward.2} parent=0 // pred_region
    _
  $region57: #{encoder_forward.2} parent=0 // pred_fallthru
    _
  // Predicated region
  $region58: #{encoder_forward.2} parent=0 // pred_check
    _
  $region59: #{encoder_forward.2} parent=0 // pred_check_branch
    %2340 = sbr.rel (0) target = $region61
  $region60: #{encoder_forward.2} parent=0 // pred_region
    _
  $region61: #{encoder_forward.2} parent=0 // pred_fallthru
    _

</llo_original>
